<compile_context>
chip_gen: v5e
topology: v5e:2x2
jax: 0.10.0
libtpu: 0.0.40
codegen_flags: <defaults>
</compile_context>

<pallas_src>
import functools

import jax
import jax.numpy as jnp
from jax.experimental import pallas as pl
from jax.experimental.pallas import tpu as pltpu

EPS = 1e-5


def _fused_bn_conv_bn_kernel(x_ref, g1_ref, b1_ref, w_ref, g2_ref, b2_ref, o_ref):
    # x: (C1, P)   g1/b1: (C1, 1)   w: (C2b, C1)   g2/b2: (C2b, 1)   o: (C2b, P)
    x = x_ref[...].astype(jnp.float32)
    _, p = x.shape
    inv_p = 1.0 / p

    # ---- BatchNorm2d #1 (training mode): single-pass stats on the XLU ----
    sum1 = jnp.sum(x, axis=-1, keepdims=True)                     # (C1, 1)
    sumsq1 = jnp.sum(x * x, axis=-1, keepdims=True)               # (C1, 1)
    mean1 = sum1 * inv_p
    var1 = jnp.maximum(sumsq1 * inv_p - mean1 * mean1, 0.0)
    s1 = g1_ref[...] * jax.lax.rsqrt(var1 + EPS)                  # (C1, 1)  (EUP rsqrt)
    t1 = b1_ref[...] - mean1 * s1                                 # (C1, 1)
    y = x * s1 + t1                                               # (C1, P)  (VPU)

    # ---- Conv2d 1x1, stride 1, no bias: the single MXU matmul z = W @ y ----
    w = w_ref[...].astype(jnp.float32)                            # (C2b, C1)
    z = jnp.dot(w, y, preferred_element_type=jnp.float32)         # (C2b, P)

    # ---- BatchNorm2d #2 (training mode): stats on the XLU (overlaps MXU drain) ----
    mean2 = jnp.sum(z, axis=-1, keepdims=True) * inv_p            # (C2b, 1)
    sumsq2 = jnp.sum(z * z, axis=-1, keepdims=True)               # (C2b, 1)
    var2 = jnp.maximum(sumsq2 * inv_p - mean2 * mean2, 0.0)
    s2 = g2_ref[...] * jax.lax.rsqrt(var2 + EPS)                  # (C2b, 1)
    t2 = b2_ref[...] - mean2 * s2                                 # (C2b, 1)
    o_ref[...] = (z * s2 + t2).astype(o_ref.dtype)


def _num_output_blocks(c2):
    """2-way C2 split only on v7x (2 TensorCores / chip); single block elsewhere."""
    try:
        kind = jax.devices()[0].device_kind.lower()
    except Exception:
        return 1
    if ("v7" in kind or "7x" in kind) and c2 % 16 == 0:
        return 2
    return 1


@functools.partial(jax.jit, static_argnames=())
def fused_bn_conv_bn(x_nchw, gamma1, beta1, w_oi, gamma2, beta2):
    """x_nchw: (N, C1, H, W); w_oi: (C2, C1) (PyTorch Conv2d 1x1 weight, squeezed)."""
    N, C1, H, W = x_nchw.shape
    C2 = w_oi.shape[0]
    P = N * H * W

    # NCHW -> (C1, P): a pure reshape for N == 1 (no transpose kernels around the call).
    if N == 1:
        x2d = x_nchw.reshape(C1, P)
    else:
        # TODO(synk): batched N>1 path still pays a wrapper transpose (extra HBM pass);
        # the module's input is N=1 so this path is not exercised here.
        x2d = jnp.transpose(x_nchw, (1, 0, 2, 3)).reshape(C1, P)

    g1 = gamma1.reshape(C1, 1)
    b1 = beta1.reshape(C1, 1)
    g2 = gamma2.reshape(C2, 1)
    b2 = beta2.reshape(C2, 1)

    # Advisory cost: ~2*C2*C1*P matmul FLOPs + elementwise/reduction work, ~1 MB traffic.
    cost = pl.CostEstimate(
        flops=2 * C2 * C1 * P + 8 * C1 * P + 8 * C2 * P,
        transcendentals=C1 + C2,
        bytes_accessed=4 * (C1 * P + C2 * C1 + C2 * P + 2 * C1 + 2 * C2),
    )

    nblk = _num_output_blocks(C2)
    if nblk > 1:
        # v7x: shard the 720-row weight / BN2 params / output over both TensorCores.
        # BN2 stats are per-output-channel, so the row split is exact; BN1 stats are
        # recomputed per block (x is tiny, 94 KB).
        c2_blk = C2 // nblk
        out2d = pl.pallas_call(
            _fused_bn_conv_bn_kernel,
            out_shape=jax.ShapeDtypeStruct((C2, P), x_nchw.dtype),
            grid=(nblk,),
            in_specs=[
                pl.BlockSpec((C1, P), lambda i: (0, 0)),      # x (replicated)
                pl.BlockSpec((C1, 1), lambda i: (0, 0)),      # gamma1
                pl.BlockSpec((C1, 1), lambda i: (0, 0)),      # beta1
                pl.BlockSpec((c2_blk, C1), lambda i: (i, 0)),  # W rows
                pl.BlockSpec((c2_blk, 1), lambda i: (i, 0)),   # gamma2
                pl.BlockSpec((c2_blk, 1), lambda i: (i, 0)),   # beta2
            ],
            out_specs=pl.BlockSpec((c2_blk, P), lambda i: (i, 0)),
            compiler_params=pltpu.CompilerParams(
                dimension_semantics=("parallel",)),
            cost_estimate=cost,
        )(x2d, g1, b1, w_oi, g2, b2)
    else:
        # v5e / v6e: single TC, everything (~1.3 MB padded) is VMEM-resident;
        # no grid keeps per-step pipeline overhead at zero.
        vspec = pl.BlockSpec(memory_space=pltpu.MemorySpace.VMEM)
        out2d = pl.pallas_call(
            _fused_bn_conv_bn_kernel,
            out_shape=jax.ShapeDtypeStruct((C2, P), x_nchw.dtype),
            in_specs=[vspec] * 6,
            out_specs=vspec,
            cost_estimate=cost,
        )(x2d, g1, b1, w_oi, g2, b2)

    # (C2, P) -> NCHW: pure reshape for N == 1.
    if N == 1:
        return out2d.reshape(1, C2, H, W)
    return jnp.transpose(out2d.reshape(C2, N, H, W), (1, 0, 2, 3))


def _reference(x_nchw, gamma1, beta1, w_oi, gamma2, beta2):
    """Pure-JAX reference matching PyTorch training-mode forward."""
    def bn(x, g, b):
        m = jnp.mean(x, axis=(0, 2, 3), keepdims=True)
        v = jnp.mean((x - m) ** 2, axis=(0, 2, 3), keepdims=True)
        return (x - m) / jnp.sqrt(v + EPS) * g.reshape(1, -1, 1, 1) + b.reshape(1, -1, 1, 1)

    y = bn(x_nchw, gamma1, beta1)
    z = jnp.einsum("nchw,oc->nohw", y, w_oi, precision=jax.lax.Precision.HIGHEST)
    return bn(z, gamma2, beta2)


if __name__ == "__main__":
    key = jax.random.PRNGKey(0)
    k_x, k_w, k_g1, k_b1, k_g2, k_b2 = jax.random.split(key, 6)

    # Shapes from the PyTorch module: x (1, 120, 14, 14), Conv2d(120 -> 720, 1x1).
    N, C1, H, W, C2 = 1, 120, 14, 14, 720
    x = jax.random.normal(k_x, (N, C1, H, W), dtype=jnp.float32)

    # Deterministic parameter init (synthetic; not a checkpoint load).
    w_oi = jax.random.normal(k_w, (C2, C1), dtype=jnp.float32) * 0.05
    gamma1 = 1.0 + 0.1 * jax.random.normal(k_g1, (C1,), dtype=jnp.float32)
    beta1 = 0.1 * jax.random.normal(k_b1, (C1,), dtype=jnp.float32)
    gamma2 = 1.0 + 0.1 * jax.random.normal(k_g2, (C2,), dtype=jnp.float32)
    beta2 = 0.1 * jax.random.normal(k_b2, (C2,), dtype=jnp.float32)

    out = fused_bn_conv_bn(x, gamma1, beta1, w_oi, gamma2, beta2)
    out = jax.block_until_ready(out)

    ref = _reference(x, gamma1, beta1, w_oi, gamma2, beta2)
    assert out.shape == (N, C2, H, W), out.shape
    assert jnp.allclose(out, ref, atol=1e-3, rtol=1e-3), "mismatch vs reference"

    print("KERNEL_OK")
</pallas_src>

<mosaic_0001>
module attributes {stable_mosaic.version = 11 : i64} {
  func.func @_fused_bn_conv_bn_kernel(%arg0: memref<120x196xf32, #tpu.memory_space<vmem>>, %arg1: memref<120x1xf32, #tpu.memory_space<vmem>>, %arg2: memref<120x1xf32, #tpu.memory_space<vmem>>, %arg3: memref<720x120xf32, #tpu.memory_space<vmem>>, %arg4: memref<720x1xf32, #tpu.memory_space<vmem>>, %arg5: memref<720x1xf32, #tpu.memory_space<vmem>>, %arg6: memref<720x196xf32, #tpu.memory_space<vmem>>) attributes {dimension_semantics = [], scalar_prefetch = 0 : i64, scratch_operands = 0 : i64, tpu.core_type = #tpu.core_type<tc>} {
    %c0 = arith.constant 0 : index
    %c0_0 = arith.constant 0 : index
    %0 = vector.load %arg0[%c0, %c0_0] : memref<120x196xf32, #tpu.memory_space<vmem>>, vector<120x196xf32>
    %cst = arith.constant dense<0.000000e+00> : vector<120xf32>
    %1 = vector.multi_reduction <add>, %0, %cst [1] : vector<120x196xf32> to vector<120xf32>
    %2 = vector.shape_cast %1 : vector<120xf32> to vector<120x1xf32>
    %3 = arith.mulf %0, %0 : vector<120x196xf32>
    %cst_1 = arith.constant dense<0.000000e+00> : vector<120xf32>
    %4 = vector.multi_reduction <add>, %3, %cst_1 [1] : vector<120x196xf32> to vector<120xf32>
    %5 = vector.shape_cast %4 : vector<120xf32> to vector<120x1xf32>
    %cst_2 = arith.constant 0.00510204071 : f32
    %6 = vector.broadcast %cst_2 : f32 to vector<120x1xf32>
    %7 = arith.mulf %2, %6 : vector<120x1xf32>
    %cst_3 = arith.constant 0.00510204071 : f32
    %8 = vector.broadcast %cst_3 : f32 to vector<120x1xf32>
    %9 = arith.mulf %5, %8 : vector<120x1xf32>
    %10 = arith.mulf %7, %7 : vector<120x1xf32>
    %11 = arith.subf %9, %10 : vector<120x1xf32>
    %cst_4 = arith.constant 0.000000e+00 : f32
    %12 = vector.broadcast %cst_4 : f32 to vector<120x1xf32>
    %13 = arith.maximumf %11, %12 : vector<120x1xf32>
    %c0_5 = arith.constant 0 : index
    %c0_6 = arith.constant 0 : index
    %14 = vector.load %arg1[%c0_5, %c0_6] : memref<120x1xf32, #tpu.memory_space<vmem>>, vector<120x1xf32>
    %cst_7 = arith.constant 9.99999974E-6 : f32
    %15 = vector.broadcast %cst_7 : f32 to vector<120x1xf32>
    %16 = arith.addf %13, %15 : vector<120x1xf32>
    %17 = math.rsqrt %16 : vector<120x1xf32>
    %18 = arith.mulf %14, %17 : vector<120x1xf32>
    %c0_8 = arith.constant 0 : index
    %c0_9 = arith.constant 0 : index
    %19 = vector.load %arg2[%c0_8, %c0_9] : memref<120x1xf32, #tpu.memory_space<vmem>>, vector<120x1xf32>
    %20 = arith.mulf %7, %18 : vector<120x1xf32>
    %21 = arith.subf %19, %20 : vector<120x1xf32>
    %22 = vector.broadcast %18 : vector<120x1xf32> to vector<120x196xf32>
    %23 = arith.mulf %0, %22 : vector<120x196xf32>
    %24 = vector.broadcast %21 : vector<120x1xf32> to vector<120x196xf32>
    %25 = arith.addf %23, %24 : vector<120x196xf32>
    %c0_10 = arith.constant 0 : index
    %c0_11 = arith.constant 0 : index
    %26 = vector.load %arg3[%c0_10, %c0_11] : memref<720x120xf32, #tpu.memory_space<vmem>>, vector<720x120xf32>
    %cst_12 = arith.constant dense<0.000000e+00> : vector<720x196xf32>
    %27 = tpu.matmul %26, %25, %cst_12 {dimension_numbers = #tpu.dot_dimension_numbers<[1], [0], [0], [1], [0, 0, 1, 1], [], []>} : vector<720x120xf32>, vector<120x196xf32>, vector<720x196xf32> -> vector<720x196xf32>
    %cst_13 = arith.constant dense<0.000000e+00> : vector<720xf32>
    %28 = vector.multi_reduction <add>, %27, %cst_13 [1] : vector<720x196xf32> to vector<720xf32>
    %29 = vector.shape_cast %28 : vector<720xf32> to vector<720x1xf32>
    %cst_14 = arith.constant 0.00510204071 : f32
    %30 = vector.broadcast %cst_14 : f32 to vector<720x1xf32>
    %31 = arith.mulf %29, %30 : vector<720x1xf32>
    %32 = arith.mulf %27, %27 : vector<720x196xf32>
    %cst_15 = arith.constant dense<0.000000e+00> : vector<720xf32>
    %33 = vector.multi_reduction <add>, %32, %cst_15 [1] : vector<720x196xf32> to vector<720xf32>
    %34 = vector.shape_cast %33 : vector<720xf32> to vector<720x1xf32>
    %cst_16 = arith.constant 0.00510204071 : f32
    %35 = vector.broadcast %cst_16 : f32 to vector<720x1xf32>
    %36 = arith.mulf %34, %35 : vector<720x1xf32>
    %37 = arith.mulf %31, %31 : vector<720x1xf32>
    %38 = arith.subf %36, %37 : vector<720x1xf32>
    %cst_17 = arith.constant 0.000000e+00 : f32
    %39 = vector.broadcast %cst_17 : f32 to vector<720x1xf32>
    %40 = arith.maximumf %38, %39 : vector<720x1xf32>
    %c0_18 = arith.constant 0 : index
    %c0_19 = arith.constant 0 : index
    %41 = vector.load %arg4[%c0_18, %c0_19] : memref<720x1xf32, #tpu.memory_space<vmem>>, vector<720x1xf32>
    %cst_20 = arith.constant 9.99999974E-6 : f32
    %42 = vector.broadcast %cst_20 : f32 to vector<720x1xf32>
    %43 = arith.addf %40, %42 : vector<720x1xf32>
    %44 = math.rsqrt %43 : vector<720x1xf32>
    %45 = arith.mulf %41, %44 : vector<720x1xf32>
    %c0_21 = arith.constant 0 : index
    %c0_22 = arith.constant 0 : index
    %46 = vector.load %arg5[%c0_21, %c0_22] : memref<720x1xf32, #tpu.memory_space<vmem>>, vector<720x1xf32>
    %47 = arith.mulf %31, %45 : vector<720x1xf32>
    %48 = arith.subf %46, %47 : vector<720x1xf32>
    %49 = vector.broadcast %45 : vector<720x1xf32> to vector<720x196xf32>
    %50 = arith.mulf %27, %49 : vector<720x196xf32>
    %51 = vector.broadcast %48 : vector<720x1xf32> to vector<720x196xf32>
    %52 = arith.addf %50, %51 : vector<720x196xf32>
    %c0_23 = arith.constant 0 : index
    %c0_24 = arith.constant 0 : index
    %53 = vector.load %arg6[%c0_23, %c0_24] : memref<720x196xf32, #tpu.memory_space<vmem>>, vector<720x196xf32>
    tpu.vector_store %arg6[%c0_23, %c0_24], %52 {strides = array<i32>} : memref<720x196xf32, #tpu.memory_space<vmem>>, vector<720x196xf32>,
    return
  }
}

</mosaic_0001>

<llo_original>
// kernel: fused_bn_conv_bn.1
$region0: #{fused_bn_conv_bn.1}
  #allocation0 [shape = 'u32[]', space=smem, size = 0x4, offset = 0x4, fixed_abs, tag = 'smem constant byte address 0x4 - core index']
  #allocation1 [shape = 'u32[72,128]{1,0:T(1,128)}', space=vmem, size = 0x9000, scoped, tag = 'internal scratch']
  %s0 = inlined_call_operand.vmem [shape: f32[120,196], index: 0, kind: input, shape index: {}]
  %s1 = inlined_call_operand.vmem [shape: f32[120,1], index: 1, kind: input, shape index: {}]
  %s2 = inlined_call_operand.vmem [shape: f32[120,1], index: 2, kind: input, shape index: {}]
  %s3 = inlined_call_operand.vmem [shape: f32[720,120], index: 3, kind: input, shape index: {}]
  %s4 = inlined_call_operand.vmem [shape: f32[720,1], index: 4, kind: input, shape index: {}]
  %s5 = inlined_call_operand.vmem [shape: f32[720,1], index: 5, kind: input, shape index: {}]
  %s6 = inlined_call_operand.vmem [shape: f32[720,196], index: 6, kind: output, shape index: {}]
  %s7 = sld [smem:[#allocation0]]
  $region34: #{fused_bn_conv_bn.1} parent=0
    _
  %s9 = ssub.s32 1, %s7
  %s10 = scalar_select 0, %s9, %s7
  // Predicated region
  $region2: #{fused_bn_conv_bn.1} parent=0 // pred_check
    _
  $region3: #{fused_bn_conv_bn.1} parent=0 // pred_check_branch
    %12 = sbr.rel (0) target = $region5
  $region4: #{fused_bn_conv_bn.1} parent=0 // pred_region
    _
  $region5: #{fused_bn_conv_bn.1} parent=0 // pred_fallthru
    _
  // Predicated region
  $region6: #{fused_bn_conv_bn.1} parent=0 // pred_check
    _
  $region7: #{fused_bn_conv_bn.1} parent=0 // pred_check_branch
    %14 = sbr.rel (0) target = $region9
  $region8: #{fused_bn_conv_bn.1} parent=0 // pred_region
    _
  $region9: #{fused_bn_conv_bn.1} parent=0 // pred_fallthru
    _
  // Predicated region
  $region10: #{fused_bn_conv_bn.1} parent=0 // pred_check
    _
  $region11: #{fused_bn_conv_bn.1} parent=0 // pred_check_branch
    %16 = sbr.rel (0) target = $region13
  $region12: #{fused_bn_conv_bn.1} parent=0 // pred_region
    _
  $region13: #{fused_bn_conv_bn.1} parent=0 // pred_fallthru
    _
  // Predicated region
  $region14: #{fused_bn_conv_bn.1} parent=0 // pred_check
    _
  $region15: #{fused_bn_conv_bn.1} parent=0 // pred_check_branch
    %18 = sbr.rel (0) target = $region17
  $region16: #{fused_bn_conv_bn.1} parent=0 // pred_region
    _
  $region17: #{fused_bn_conv_bn.1} parent=0 // pred_fallthru
    _
  // Predicated region
  $region18: #{fused_bn_conv_bn.1} parent=0 // pred_check
    _
  $region19: #{fused_bn_conv_bn.1} parent=0 // pred_check_branch
    %20 = sbr.rel (0) target = $region21
  $region20: #{fused_bn_conv_bn.1} parent=0 // pred_region
    _
  $region21: #{fused_bn_conv_bn.1} parent=0 // pred_fallthru
    _
  // Predicated region
  $region22: #{fused_bn_conv_bn.1} parent=0 // pred_check
    _
  $region23: #{fused_bn_conv_bn.1} parent=0 // pred_check_branch
    %22 = sbr.rel (0) target = $region25
  $region24: #{fused_bn_conv_bn.1} parent=0 // pred_region
    _
  $region25: #{fused_bn_conv_bn.1} parent=0 // pred_fallthru
    _
  %v23 = vld [vmem:[%s0] sm:$0xff]
  %v24 = vld [vmem:[%s0 + $0x8] sm:$0xff]
  %v25 = vld [vmem:[%s0 + $0x10] sm:$0xff]
  %v26 = vld [vmem:[%s0 + $0x18] sm:$0xff]
  %v27 = vld [vmem:[%s0 + $0x20] sm:$0xff]
  %v28 = vld [vmem:[%s0 + $0x28] sm:$0xff]
  %v29 = vld [vmem:[%s0 + $0x30] sm:$0xff]
  %v30 = vld [vmem:[%s0 + $0x38] sm:$0xff]
  %v31 = vld [vmem:[%s0 + $0x40] sm:$0xff]
  %v32 = vld [vmem:[%s0 + $0x48] sm:$0xff]
  %v33 = vld [vmem:[%s0 + $0x50] sm:$0xff]
  %v34 = vld [vmem:[%s0 + $0x58] sm:$0xff]
  %v35 = vld [vmem:[%s0 + $0x60] sm:$0xff]
  %v36 = vld [vmem:[%s0 + $0x68] sm:$0xff]
  %v37 = vld [vmem:[%s0 + $0x70] sm:$0xff]
  %v38 = vld [vmem:[%s0 + $0x78] sm:$0xff]
  %v39 = vld [vmem:[%s0 + $0x80] sm:$0xff]
  %v40 = vld [vmem:[%s0 + $0x88] sm:$0xff]
  %v41 = vld [vmem:[%s0 + $0x90] sm:$0xff]
  %v42 = vld [vmem:[%s0 + $0x98] sm:$0xff]
  %v43 = vld [vmem:[%s0 + $0xa0] sm:$0xff]
  %v44 = vld [vmem:[%s0 + $0xa8] sm:$0xff]
  %v45 = vld [vmem:[%s0 + $0xb0] sm:$0xff]
  %v46 = vld [vmem:[%s0 + $0xb8] sm:$0xff]
  %v47 = vld [vmem:[%s0 + $0xc0] sm:$0xff]
  %v48 = vld [vmem:[%s0 + $0xc8] sm:$0xff]
  %v49 = vld [vmem:[%s0 + $0xd0] sm:$0xff]
  %v50 = vld [vmem:[%s0 + $0xd8] sm:$0xff]
  %v51 = vld [vmem:[%s0 + $0xe0] sm:$0xff]
  %v52 = vld [vmem:[%s0 + $0xe8] sm:$0xff]
  %vm53 = vcmask 556032
  %v54 = vsel %vm53, %v24, 0.0
  %v55 = vadd.f32 %v23, %v54
  %56 = vadd.xlane.f32.xlu0 %v55
  %v57 = vpop.xlane.xlu0 %56
  %v58 = vsel %vm53, %v26, 0.0
  %v59 = vadd.f32 %v25, %v58
  %60 = vadd.xlane.f32.xlu0 %v59
  %v61 = vpop.xlane.xlu0 %60
  %v62 = vsel %vm53, %v28, 0.0
  %v63 = vadd.f32 %v27, %v62
  %64 = vadd.xlane.f32.xlu0 %v63
  %v65 = vpop.xlane.xlu0 %64
  %v66 = vsel %vm53, %v30, 0.0
  %v67 = vadd.f32 %v29, %v66
  %68 = vadd.xlane.f32.xlu0 %v67
  %v69 = vpop.xlane.xlu0 %68
  %v70 = vsel %vm53, %v32, 0.0
  %v71 = vadd.f32 %v31, %v70
  %72 = vadd.xlane.f32.xlu0 %v71
  %v73 = vpop.xlane.xlu0 %72
  %v74 = vsel %vm53, %v34, 0.0
  %v75 = vadd.f32 %v33, %v74
  %76 = vadd.xlane.f32.xlu0 %v75
  %v77 = vpop.xlane.xlu0 %76
  %v78 = vsel %vm53, %v36, 0.0
  %v79 = vadd.f32 %v35, %v78
  %80 = vadd.xlane.f32.xlu0 %v79
  %v81 = vpop.xlane.xlu0 %80
  %v82 = vsel %vm53, %v38, 0.0
  %v83 = vadd.f32 %v37, %v82
  %84 = vadd.xlane.f32.xlu0 %v83
  %v85 = vpop.xlane.xlu0 %84
  %v86 = vsel %vm53, %v40, 0.0
  %v87 = vadd.f32 %v39, %v86
  %88 = vadd.xlane.f32.xlu0 %v87
  %v89 = vpop.xlane.xlu0 %88
  %v90 = vsel %vm53, %v42, 0.0
  %v91 = vadd.f32 %v41, %v90
  %92 = vadd.xlane.f32.xlu0 %v91
  %v93 = vpop.xlane.xlu0 %92
  %v94 = vsel %vm53, %v44, 0.0
  %v95 = vadd.f32 %v43, %v94
  %96 = vadd.xlane.f32.xlu0 %v95
  %v97 = vpop.xlane.xlu0 %96
  %v98 = vsel %vm53, %v46, 0.0
  %v99 = vadd.f32 %v45, %v98
  %100 = vadd.xlane.f32.xlu0 %v99
  %v101 = vpop.xlane.xlu0 %100
  %v102 = vsel %vm53, %v48, 0.0
  %v103 = vadd.f32 %v47, %v102
  %104 = vadd.xlane.f32.xlu0 %v103
  %v105 = vpop.xlane.xlu0 %104
  %v106 = vsel %vm53, %v50, 0.0
  %v107 = vadd.f32 %v49, %v106
  %108 = vadd.xlane.f32.xlu0 %v107
  %v109 = vpop.xlane.xlu0 %108
  %v110 = vsel %vm53, %v52, 0.0
  %v111 = vadd.f32 %v51, %v110
  %112 = vadd.xlane.f32.xlu0 %v111
  %v113 = vpop.xlane.xlu0 %112
  %v114 = vmul.f32 %v23, %v23
  %v115 = vmul.f32 %v24, %v24
  %v116 = vmul.f32 %v25, %v25
  %v117 = vmul.f32 %v26, %v26
  %v118 = vmul.f32 %v27, %v27
  %v119 = vmul.f32 %v28, %v28
  %v120 = vmul.f32 %v29, %v29
  %v121 = vmul.f32 %v30, %v30
  %v122 = vmul.f32 %v31, %v31
  %v123 = vmul.f32 %v32, %v32
  %v124 = vmul.f32 %v33, %v33
  %v125 = vmul.f32 %v34, %v34
  %v126 = vmul.f32 %v35, %v35
  %v127 = vmul.f32 %v36, %v36
  %v128 = vmul.f32 %v37, %v37
  %v129 = vmul.f32 %v38, %v38
  %v130 = vmul.f32 %v39, %v39
  %v131 = vmul.f32 %v40, %v40
  %v132 = vmul.f32 %v41, %v41
  %v133 = vmul.f32 %v42, %v42
  %v134 = vmul.f32 %v43, %v43
  %v135 = vmul.f32 %v44, %v44
  %v136 = vmul.f32 %v45, %v45
  %v137 = vmul.f32 %v46, %v46
  %v138 = vmul.f32 %v47, %v47
  %v139 = vmul.f32 %v48, %v48
  %v140 = vmul.f32 %v49, %v49
  %v141 = vmul.f32 %v50, %v50
  %v142 = vmul.f32 %v51, %v51
  %v143 = vmul.f32 %v52, %v52
  %v144 = vsel %vm53, %v115, 0.0
  %v145 = vadd.f32 %v114, %v144
  %146 = vadd.xlane.f32.xlu0 %v145
  %v147 = vpop.xlane.xlu0 %146
  %v148 = vsel %vm53, %v117, 0.0
  %v149 = vadd.f32 %v116, %v148
  %150 = vadd.xlane.f32.xlu0 %v149
  %v151 = vpop.xlane.xlu0 %150
  %v152 = vsel %vm53, %v119, 0.0
  %v153 = vadd.f32 %v118, %v152
  %154 = vadd.xlane.f32.xlu0 %v153
  %v155 = vpop.xlane.xlu0 %154
  %v156 = vsel %vm53, %v121, 0.0
  %v157 = vadd.f32 %v120, %v156
  %158 = vadd.xlane.f32.xlu0 %v157
  %v159 = vpop.xlane.xlu0 %158
  %v160 = vsel %vm53, %v123, 0.0
  %v161 = vadd.f32 %v122, %v160
  %162 = vadd.xlane.f32.xlu0 %v161
  %v163 = vpop.xlane.xlu0 %162
  %v164 = vsel %vm53, %v125, 0.0
  %v165 = vadd.f32 %v124, %v164
  %166 = vadd.xlane.f32.xlu0 %v165
  %v167 = vpop.xlane.xlu0 %166
  %v168 = vsel %vm53, %v127, 0.0
  %v169 = vadd.f32 %v126, %v168
  %170 = vadd.xlane.f32.xlu0 %v169
  %v171 = vpop.xlane.xlu0 %170
  %v172 = vsel %vm53, %v129, 0.0
  %v173 = vadd.f32 %v128, %v172
  %174 = vadd.xlane.f32.xlu0 %v173
  %v175 = vpop.xlane.xlu0 %174
  %v176 = vsel %vm53, %v131, 0.0
  %v177 = vadd.f32 %v130, %v176
  %178 = vadd.xlane.f32.xlu0 %v177
  %v179 = vpop.xlane.xlu0 %178
  %v180 = vsel %vm53, %v133, 0.0
  %v181 = vadd.f32 %v132, %v180
  %182 = vadd.xlane.f32.xlu0 %v181
  %v183 = vpop.xlane.xlu0 %182
  %v184 = vsel %vm53, %v135, 0.0
  %v185 = vadd.f32 %v134, %v184
  %186 = vadd.xlane.f32.xlu0 %v185
  %v187 = vpop.xlane.xlu0 %186
  %v188 = vsel %vm53, %v137, 0.0
  %v189 = vadd.f32 %v136, %v188
  %190 = vadd.xlane.f32.xlu0 %v189
  %v191 = vpop.xlane.xlu0 %190
  %v192 = vsel %vm53, %v139, 0.0
  %v193 = vadd.f32 %v138, %v192
  %194 = vadd.xlane.f32.xlu0 %v193
  %v195 = vpop.xlane.xlu0 %194
  %v196 = vsel %vm53, %v141, 0.0
  %v197 = vadd.f32 %v140, %v196
  %198 = vadd.xlane.f32.xlu0 %v197
  %v199 = vpop.xlane.xlu0 %198
  %v200 = vsel %vm53, %v143, 0.0
  %v201 = vadd.f32 %v142, %v200
  %202 = vadd.xlane.f32.xlu0 %v201
  %v203 = vpop.xlane.xlu0 %202
  %v204 = vmul.f32 %v57, 0.0051020407
  %v205 = vmul.f32 %v61, 0.0051020407
  %v206 = vmul.f32 %v65, 0.0051020407
  %v207 = vmul.f32 %v69, 0.0051020407
  %v208 = vmul.f32 %v73, 0.0051020407
  %v209 = vmul.f32 %v77, 0.0051020407
  %v210 = vmul.f32 %v81, 0.0051020407
  %v211 = vmul.f32 %v85, 0.0051020407
  %v212 = vmul.f32 %v89, 0.0051020407
  %v213 = vmul.f32 %v93, 0.0051020407
  %v214 = vmul.f32 %v97, 0.0051020407
  %v215 = vmul.f32 %v101, 0.0051020407
  %v216 = vmul.f32 %v105, 0.0051020407
  %v217 = vmul.f32 %v109, 0.0051020407
  %v218 = vmul.f32 %v113, 0.0051020407
  %v219 = vmul.f32 %v147, 0.0051020407
  %v220 = vmul.f32 %v151, 0.0051020407
  %v221 = vmul.f32 %v155, 0.0051020407
  %v222 = vmul.f32 %v159, 0.0051020407
  %v223 = vmul.f32 %v163, 0.0051020407
  %v224 = vmul.f32 %v167, 0.0051020407
  %v225 = vmul.f32 %v171, 0.0051020407
  %v226 = vmul.f32 %v175, 0.0051020407
  %v227 = vmul.f32 %v179, 0.0051020407
  %v228 = vmul.f32 %v183, 0.0051020407
  %v229 = vmul.f32 %v187, 0.0051020407
  %v230 = vmul.f32 %v191, 0.0051020407
  %v231 = vmul.f32 %v195, 0.0051020407
  %v232 = vmul.f32 %v199, 0.0051020407
  %v233 = vmul.f32 %v203, 0.0051020407
  %v234 = vmul.f32 %v204, %v204
  %v235 = vmul.f32 %v205, %v205
  %v236 = vmul.f32 %v206, %v206
  %v237 = vmul.f32 %v207, %v207
  %v238 = vmul.f32 %v208, %v208
  %v239 = vmul.f32 %v209, %v209
  %v240 = vmul.f32 %v210, %v210
  %v241 = vmul.f32 %v211, %v211
  %v242 = vmul.f32 %v212, %v212
  %v243 = vmul.f32 %v213, %v213
  %v244 = vmul.f32 %v214, %v214
  %v245 = vmul.f32 %v215, %v215
  %v246 = vmul.f32 %v216, %v216
  %v247 = vmul.f32 %v217, %v217
  %v248 = vmul.f32 %v218, %v218
  %v249 = vsub.f32 %v219, %v234
  %v250 = vsub.f32 %v220, %v235
  %v251 = vsub.f32 %v221, %v236
  %v252 = vsub.f32 %v222, %v237
  %v253 = vsub.f32 %v223, %v238
  %v254 = vsub.f32 %v224, %v239
  %v255 = vsub.f32 %v225, %v240
  %v256 = vsub.f32 %v226, %v241
  %v257 = vsub.f32 %v227, %v242
  %v258 = vsub.f32 %v228, %v243
  %v259 = vsub.f32 %v229, %v244
  %v260 = vsub.f32 %v230, %v245
  %v261 = vsub.f32 %v231, %v246
  %v262 = vsub.f32 %v232, %v247
  %v263 = vsub.f32 %v233, %v248
  %v264 = vmax.f32 %v249, 0.0
  %v265 = vmax.f32 %v250, 0.0
  %v266 = vmax.f32 %v251, 0.0
  %v267 = vmax.f32 %v252, 0.0
  %v268 = vmax.f32 %v253, 0.0
  %v269 = vmax.f32 %v254, 0.0
  %v270 = vmax.f32 %v255, 0.0
  %v271 = vmax.f32 %v256, 0.0
  %v272 = vmax.f32 %v257, 0.0
  %v273 = vmax.f32 %v258, 0.0
  %v274 = vmax.f32 %v259, 0.0
  %v275 = vmax.f32 %v260, 0.0
  %v276 = vmax.f32 %v261, 0.0
  %v277 = vmax.f32 %v262, 0.0
  %v278 = vmax.f32 %v263, 0.0
  %v279 = vld [vmem:[%s1] sm:$0xff]
  %v280 = vld [vmem:[%s1 + $0x8] sm:$0xff]
  %v281 = vld [vmem:[%s1 + $0x10] sm:$0xff]
  %v282 = vld [vmem:[%s1 + $0x18] sm:$0xff]
  %v283 = vld [vmem:[%s1 + $0x20] sm:$0xff]
  %v284 = vld [vmem:[%s1 + $0x28] sm:$0xff]
  %v285 = vld [vmem:[%s1 + $0x30] sm:$0xff]
  %v286 = vld [vmem:[%s1 + $0x38] sm:$0xff]
  %v287 = vld [vmem:[%s1 + $0x40] sm:$0xff]
  %v288 = vld [vmem:[%s1 + $0x48] sm:$0xff]
  %v289 = vld [vmem:[%s1 + $0x50] sm:$0xff]
  %v290 = vld [vmem:[%s1 + $0x58] sm:$0xff]
  %v291 = vld [vmem:[%s1 + $0x60] sm:$0xff]
  %v292 = vld [vmem:[%s1 + $0x68] sm:$0xff]
  %v293 = vld [vmem:[%s1 + $0x70] sm:$0xff]
  %v294 = vadd.f32 %v264, 1e-05
  %v295 = vadd.f32 %v265, 1e-05
  %v296 = vadd.f32 %v266, 1e-05
  %v297 = vadd.f32 %v267, 1e-05
  %v298 = vadd.f32 %v268, 1e-05
  %v299 = vadd.f32 %v269, 1e-05
  %v300 = vadd.f32 %v270, 1e-05
  %v301 = vadd.f32 %v271, 1e-05
  %v302 = vadd.f32 %v272, 1e-05
  %v303 = vadd.f32 %v273, 1e-05
  %v304 = vadd.f32 %v274, 1e-05
  %v305 = vadd.f32 %v275, 1e-05
  %v306 = vadd.f32 %v276, 1e-05
  %v307 = vadd.f32 %v277, 1e-05
  %v308 = vadd.f32 %v278, 1e-05
  %v309 = vrsqrt.pop %v294
  %v310 = vmul.f32 %v309, %v294
  %v311 = vmul.f32 %v310, %v309
  %v312 = vmul.f32 0.5, %v311
  %v313 = vsub.f32 1.5, %v312
  %v314 = vmul.f32 %v309, %v313
  %vm315 = vweird.f32 %v294
  %vm316 = vweird.f32 %v309
  %vm317 = vmor %vm315, %vm316
  %v318 = vsel %vm317, %v309, %v314
  %v319 = vrsqrt.pop %v295
  %v320 = vmul.f32 %v319, %v295
  %v321 = vmul.f32 %v320, %v319
  %v322 = vmul.f32 0.5, %v321
  %v323 = vsub.f32 1.5, %v322
  %v324 = vmul.f32 %v319, %v323
  %vm325 = vweird.f32 %v295
  %vm326 = vweird.f32 %v319
  %vm327 = vmor %vm325, %vm326
  %v328 = vsel %vm327, %v319, %v324
  %v329 = vrsqrt.pop %v296
  %v330 = vmul.f32 %v329, %v296
  %v331 = vmul.f32 %v330, %v329
  %v332 = vmul.f32 0.5, %v331
  %v333 = vsub.f32 1.5, %v332
  %v334 = vmul.f32 %v329, %v333
  %vm335 = vweird.f32 %v296
  %vm336 = vweird.f32 %v329
  %vm337 = vmor %vm335, %vm336
  %v338 = vsel %vm337, %v329, %v334
  %v339 = vrsqrt.pop %v297
  %v340 = vmul.f32 %v339, %v297
  %v341 = vmul.f32 %v340, %v339
  %v342 = vmul.f32 0.5, %v341
  %v343 = vsub.f32 1.5, %v342
  %v344 = vmul.f32 %v339, %v343
  %vm345 = vweird.f32 %v297
  %vm346 = vweird.f32 %v339
  %vm347 = vmor %vm345, %vm346
  %v348 = vsel %vm347, %v339, %v344
  %v349 = vrsqrt.pop %v298
  %v350 = vmul.f32 %v349, %v298
  %v351 = vmul.f32 %v350, %v349
  %v352 = vmul.f32 0.5, %v351
  %v353 = vsub.f32 1.5, %v352
  %v354 = vmul.f32 %v349, %v353
  %vm355 = vweird.f32 %v298
  %vm356 = vweird.f32 %v349
  %vm357 = vmor %vm355, %vm356
  %v358 = vsel %vm357, %v349, %v354
  %v359 = vrsqrt.pop %v299
  %v360 = vmul.f32 %v359, %v299
  %v361 = vmul.f32 %v360, %v359
  %v362 = vmul.f32 0.5, %v361
  %v363 = vsub.f32 1.5, %v362
  %v364 = vmul.f32 %v359, %v363
  %vm365 = vweird.f32 %v299
  %vm366 = vweird.f32 %v359
  %vm367 = vmor %vm365, %vm366
  %v368 = vsel %vm367, %v359, %v364
  %v369 = vrsqrt.pop %v300
  %v370 = vmul.f32 %v369, %v300
  %v371 = vmul.f32 %v370, %v369
  %v372 = vmul.f32 0.5, %v371
  %v373 = vsub.f32 1.5, %v372
  %v374 = vmul.f32 %v369, %v373
  %vm375 = vweird.f32 %v300
  %vm376 = vweird.f32 %v369
  %vm377 = vmor %vm375, %vm376
  %v378 = vsel %vm377, %v369, %v374
  %v379 = vrsqrt.pop %v301
  %v380 = vmul.f32 %v379, %v301
  %v381 = vmul.f32 %v380, %v379
  %v382 = vmul.f32 0.5, %v381
  %v383 = vsub.f32 1.5, %v382
  %v384 = vmul.f32 %v379, %v383
  %vm385 = vweird.f32 %v301
  %vm386 = vweird.f32 %v379
  %vm387 = vmor %vm385, %vm386
  %v388 = vsel %vm387, %v379, %v384
  %v389 = vrsqrt.pop %v302
  %v390 = vmul.f32 %v389, %v302
  %v391 = vmul.f32 %v390, %v389
  %v392 = vmul.f32 0.5, %v391
  %v393 = vsub.f32 1.5, %v392
  %v394 = vmul.f32 %v389, %v393
  %vm395 = vweird.f32 %v302
  %vm396 = vweird.f32 %v389
  %vm397 = vmor %vm395, %vm396
  %v398 = vsel %vm397, %v389, %v394
  %v399 = vrsqrt.pop %v303
  %v400 = vmul.f32 %v399, %v303
  %v401 = vmul.f32 %v400, %v399
  %v402 = vmul.f32 0.5, %v401
  %v403 = vsub.f32 1.5, %v402
  %v404 = vmul.f32 %v399, %v403
  %vm405 = vweird.f32 %v303
  %vm406 = vweird.f32 %v399
  %vm407 = vmor %vm405, %vm406
  %v408 = vsel %vm407, %v399, %v404
  %v409 = vrsqrt.pop %v304
  %v410 = vmul.f32 %v409, %v304
  %v411 = vmul.f32 %v410, %v409
  %v412 = vmul.f32 0.5, %v411
  %v413 = vsub.f32 1.5, %v412
  %v414 = vmul.f32 %v409, %v413
  %vm415 = vweird.f32 %v304
  %vm416 = vweird.f32 %v409
  %vm417 = vmor %vm415, %vm416
  %v418 = vsel %vm417, %v409, %v414
  %v419 = vrsqrt.pop %v305
  %v420 = vmul.f32 %v419, %v305
  %v421 = vmul.f32 %v420, %v419
  %v422 = vmul.f32 0.5, %v421
  %v423 = vsub.f32 1.5, %v422
  %v424 = vmul.f32 %v419, %v423
  %vm425 = vweird.f32 %v305
  %vm426 = vweird.f32 %v419
  %vm427 = vmor %vm425, %vm426
  %v428 = vsel %vm427, %v419, %v424
  %v429 = vrsqrt.pop %v306
  %v430 = vmul.f32 %v429, %v306
  %v431 = vmul.f32 %v430, %v429
  %v432 = vmul.f32 0.5, %v431
  %v433 = vsub.f32 1.5, %v432
  %v434 = vmul.f32 %v429, %v433
  %vm435 = vweird.f32 %v306
  %vm436 = vweird.f32 %v429
  %vm437 = vmor %vm435, %vm436
  %v438 = vsel %vm437, %v429, %v434
  %v439 = vrsqrt.pop %v307
  %v440 = vmul.f32 %v439, %v307
  %v441 = vmul.f32 %v440, %v439
  %v442 = vmul.f32 0.5, %v441
  %v443 = vsub.f32 1.5, %v442
  %v444 = vmul.f32 %v439, %v443
  %vm445 = vweird.f32 %v307
  %vm446 = vweird.f32 %v439
  %vm447 = vmor %vm445, %vm446
  %v448 = vsel %vm447, %v439, %v444
  %v449 = vrsqrt.pop %v308
  %v450 = vmul.f32 %v449, %v308
  %v451 = vmul.f32 %v450, %v449
  %v452 = vmul.f32 0.5, %v451
  %v453 = vsub.f32 1.5, %v452
  %v454 = vmul.f32 %v449, %v453
  %vm455 = vweird.f32 %v308
  %vm456 = vweird.f32 %v449
  %vm457 = vmor %vm455, %vm456
  %v458 = vsel %vm457, %v449, %v454
  %v459 = vmul.f32 %v279, %v318
  %v460 = vmul.f32 %v280, %v328
  %v461 = vmul.f32 %v281, %v338
  %v462 = vmul.f32 %v282, %v348
  %v463 = vmul.f32 %v283, %v358
  %v464 = vmul.f32 %v284, %v368
  %v465 = vmul.f32 %v285, %v378
  %v466 = vmul.f32 %v286, %v388
  %v467 = vmul.f32 %v287, %v398
  %v468 = vmul.f32 %v288, %v408
  %v469 = vmul.f32 %v289, %v418
  %v470 = vmul.f32 %v290, %v428
  %v471 = vmul.f32 %v291, %v438
  %v472 = vmul.f32 %v292, %v448
  %v473 = vmul.f32 %v293, %v458
  %v474 = vld [vmem:[%s2] sm:$0xff]
  %v475 = vld [vmem:[%s2 + $0x8] sm:$0xff]
  %v476 = vld [vmem:[%s2 + $0x10] sm:$0xff]
  %v477 = vld [vmem:[%s2 + $0x18] sm:$0xff]
  %v478 = vld [vmem:[%s2 + $0x20] sm:$0xff]
  %v479 = vld [vmem:[%s2 + $0x28] sm:$0xff]
  %v480 = vld [vmem:[%s2 + $0x30] sm:$0xff]
  %v481 = vld [vmem:[%s2 + $0x38] sm:$0xff]
  %v482 = vld [vmem:[%s2 + $0x40] sm:$0xff]
  %v483 = vld [vmem:[%s2 + $0x48] sm:$0xff]
  %v484 = vld [vmem:[%s2 + $0x50] sm:$0xff]
  %v485 = vld [vmem:[%s2 + $0x58] sm:$0xff]
  %v486 = vld [vmem:[%s2 + $0x60] sm:$0xff]
  %v487 = vld [vmem:[%s2 + $0x68] sm:$0xff]
  %v488 = vld [vmem:[%s2 + $0x70] sm:$0xff]
  %v489 = vmul.f32 %v204, %v459
  %v490 = vmul.f32 %v205, %v460
  %v491 = vmul.f32 %v206, %v461
  %v492 = vmul.f32 %v207, %v462
  %v493 = vmul.f32 %v208, %v463
  %v494 = vmul.f32 %v209, %v464
  %v495 = vmul.f32 %v210, %v465
  %v496 = vmul.f32 %v211, %v466
  %v497 = vmul.f32 %v212, %v467
  %v498 = vmul.f32 %v213, %v468
  %v499 = vmul.f32 %v214, %v469
  %v500 = vmul.f32 %v215, %v470
  %v501 = vmul.f32 %v216, %v471
  %v502 = vmul.f32 %v217, %v472
  %v503 = vmul.f32 %v218, %v473
  %v504 = vsub.f32 %v474, %v489
  %v505 = vsub.f32 %v475, %v490
  %v506 = vsub.f32 %v476, %v491
  %v507 = vsub.f32 %v477, %v492
  %v508 = vsub.f32 %v478, %v493
  %v509 = vsub.f32 %v479, %v494
  %v510 = vsub.f32 %v480, %v495
  %v511 = vsub.f32 %v481, %v496
  %v512 = vsub.f32 %v482, %v497
  %v513 = vsub.f32 %v483, %v498
  %v514 = vsub.f32 %v484, %v499
  %v515 = vsub.f32 %v485, %v500
  %v516 = vsub.f32 %v486, %v501
  %v517 = vsub.f32 %v487, %v502
  %v518 = vsub.f32 %v488, %v503
  %520 = vset.pattern.permute.xlu0 0
  %521 = vperm.xlu0 %520, %v459
  %v522 = vpop.permute.xlu0 %521
  %525 = vset.pattern.permute.xlu0 0
  %526 = vperm.xlu0 %525, %v460
  %v527 = vpop.permute.xlu0 %526
  %530 = vset.pattern.permute.xlu0 0
  %531 = vperm.xlu0 %530, %v461
  %v532 = vpop.permute.xlu0 %531
  %535 = vset.pattern.permute.xlu0 0
  %536 = vperm.xlu0 %535, %v462
  %v537 = vpop.permute.xlu0 %536
  %540 = vset.pattern.permute.xlu0 0
  %541 = vperm.xlu0 %540, %v463
  %v542 = vpop.permute.xlu0 %541
  %545 = vset.pattern.permute.xlu0 0
  %546 = vperm.xlu0 %545, %v464
  %v547 = vpop.permute.xlu0 %546
  %550 = vset.pattern.permute.xlu0 0
  %551 = vperm.xlu0 %550, %v465
  %v552 = vpop.permute.xlu0 %551
  %555 = vset.pattern.permute.xlu0 0
  %556 = vperm.xlu0 %555, %v466
  %v557 = vpop.permute.xlu0 %556
  %560 = vset.pattern.permute.xlu0 0
  %561 = vperm.xlu0 %560, %v467
  %v562 = vpop.permute.xlu0 %561
  %565 = vset.pattern.permute.xlu0 0
  %566 = vperm.xlu0 %565, %v468
  %v567 = vpop.permute.xlu0 %566
  %570 = vset.pattern.permute.xlu0 0
  %571 = vperm.xlu0 %570, %v469
  %v572 = vpop.permute.xlu0 %571
  %575 = vset.pattern.permute.xlu0 0
  %576 = vperm.xlu0 %575, %v470
  %v577 = vpop.permute.xlu0 %576
  %580 = vset.pattern.permute.xlu0 0
  %581 = vperm.xlu0 %580, %v471
  %v582 = vpop.permute.xlu0 %581
  %585 = vset.pattern.permute.xlu0 0
  %586 = vperm.xlu0 %585, %v472
  %v587 = vpop.permute.xlu0 %586
  %590 = vset.pattern.permute.xlu0 0
  %591 = vperm.xlu0 %590, %v473
  %v592 = vpop.permute.xlu0 %591
  %v594 = vmul.f32 %v23, %v522
  %v595 = vmul.f32 %v24, %v522
  %v596 = vmul.f32 %v25, %v527
  %v597 = vmul.f32 %v26, %v527
  %v598 = vmul.f32 %v27, %v532
  %v599 = vmul.f32 %v28, %v532
  %v600 = vmul.f32 %v29, %v537
  %v601 = vmul.f32 %v30, %v537
  %v602 = vmul.f32 %v31, %v542
  %v603 = vmul.f32 %v32, %v542
  %v604 = vmul.f32 %v33, %v547
  %v605 = vmul.f32 %v34, %v547
  %v606 = vmul.f32 %v35, %v552
  %v607 = vmul.f32 %v36, %v552
  %v608 = vmul.f32 %v37, %v557
  %v609 = vmul.f32 %v38, %v557
  %v610 = vmul.f32 %v39, %v562
  %v611 = vmul.f32 %v40, %v562
  %v612 = vmul.f32 %v41, %v567
  %v613 = vmul.f32 %v42, %v567
  %v614 = vmul.f32 %v43, %v572
  %v615 = vmul.f32 %v44, %v572
  %v616 = vmul.f32 %v45, %v577
  %v617 = vmul.f32 %v46, %v577
  %v618 = vmul.f32 %v47, %v582
  %v619 = vmul.f32 %v48, %v582
  %v620 = vmul.f32 %v49, %v587
  %v621 = vmul.f32 %v50, %v587
  %v622 = vmul.f32 %v51, %v592
  %v623 = vmul.f32 %v52, %v592
  %625 = vset.pattern.permute.xlu0 0
  %626 = vperm.xlu0 %625, %v504
  %v627 = vpop.permute.xlu0 %626
  %630 = vset.pattern.permute.xlu0 0
  %631 = vperm.xlu0 %630, %v505
  %v632 = vpop.permute.xlu0 %631
  %635 = vset.pattern.permute.xlu0 0
  %636 = vperm.xlu0 %635, %v506
  %v637 = vpop.permute.xlu0 %636
  %640 = vset.pattern.permute.xlu0 0
  %641 = vperm.xlu0 %640, %v507
  %v642 = vpop.permute.xlu0 %641
  %645 = vset.pattern.permute.xlu0 0
  %646 = vperm.xlu0 %645, %v508
  %v647 = vpop.permute.xlu0 %646
  %650 = vset.pattern.permute.xlu0 0
  %651 = vperm.xlu0 %650, %v509
  %v652 = vpop.permute.xlu0 %651
  %655 = vset.pattern.permute.xlu0 0
  %656 = vperm.xlu0 %655, %v510
  %v657 = vpop.permute.xlu0 %656
  %660 = vset.pattern.permute.xlu0 0
  %661 = vperm.xlu0 %660, %v511
  %v662 = vpop.permute.xlu0 %661
  %665 = vset.pattern.permute.xlu0 0
  %666 = vperm.xlu0 %665, %v512
  %v667 = vpop.permute.xlu0 %666
  %670 = vset.pattern.permute.xlu0 0
  %671 = vperm.xlu0 %670, %v513
  %v672 = vpop.permute.xlu0 %671
  %675 = vset.pattern.permute.xlu0 0
  %676 = vperm.xlu0 %675, %v514
  %v677 = vpop.permute.xlu0 %676
  %680 = vset.pattern.permute.xlu0 0
  %681 = vperm.xlu0 %680, %v515
  %v682 = vpop.permute.xlu0 %681
  %685 = vset.pattern.permute.xlu0 0
  %686 = vperm.xlu0 %685, %v516
  %v687 = vpop.permute.xlu0 %686
  %690 = vset.pattern.permute.xlu0 0
  %691 = vperm.xlu0 %690, %v517
  %v692 = vpop.permute.xlu0 %691
  %695 = vset.pattern.permute.xlu0 0
  %696 = vperm.xlu0 %695, %v518
  %v697 = vpop.permute.xlu0 %696
  %v699 = vadd.f32 %v594, %v627
  %v700 = vadd.f32 %v595, %v627
  %v701 = vadd.f32 %v596, %v632
  %v702 = vadd.f32 %v597, %v632
  %v703 = vadd.f32 %v598, %v637
  %v704 = vadd.f32 %v599, %v637
  %v705 = vadd.f32 %v600, %v642
  %v706 = vadd.f32 %v601, %v642
  %v707 = vadd.f32 %v602, %v647
  %v708 = vadd.f32 %v603, %v647
  %v709 = vadd.f32 %v604, %v652
  %v710 = vadd.f32 %v605, %v652
  %v711 = vadd.f32 %v606, %v657
  %v712 = vadd.f32 %v607, %v657
  %v713 = vadd.f32 %v608, %v662
  %v714 = vadd.f32 %v609, %v662
  %v715 = vadd.f32 %v610, %v667
  %v716 = vadd.f32 %v611, %v667
  %v717 = vadd.f32 %v612, %v672
  %v718 = vadd.f32 %v613, %v672
  %v719 = vadd.f32 %v614, %v677
  %v720 = vadd.f32 %v615, %v677
  %v721 = vadd.f32 %v616, %v682
  %v722 = vadd.f32 %v617, %v682
  %v723 = vadd.f32 %v618, %v687
  %v724 = vadd.f32 %v619, %v687
  %v725 = vadd.f32 %v620, %v692
  %v726 = vadd.f32 %v621, %v692
  %v727 = vadd.f32 %v622, %v697
  %v728 = vadd.f32 %v623, %v697
  %v729 = vld [vmem:[%s3] sm:$0xff]
  %v730 = vld [vmem:[%s3 + $0x8] sm:$0xff]
  %v731 = vld [vmem:[%s3 + $0x10] sm:$0xff]
  %v732 = vld [vmem:[%s3 + $0x18] sm:$0xff]
  %v733 = vld [vmem:[%s3 + $0x20] sm:$0xff]
  %v734 = vld [vmem:[%s3 + $0x28] sm:$0xff]
  %v735 = vld [vmem:[%s3 + $0x30] sm:$0xff]
  %v736 = vld [vmem:[%s3 + $0x38] sm:$0xff]
  %v737 = vld [vmem:[%s3 + $0x40] sm:$0xff]
  %v738 = vld [vmem:[%s3 + $0x48] sm:$0xff]
  %v739 = vld [vmem:[%s3 + $0x50] sm:$0xff]
  %v740 = vld [vmem:[%s3 + $0x58] sm:$0xff]
  %v741 = vld [vmem:[%s3 + $0x60] sm:$0xff]
  %v742 = vld [vmem:[%s3 + $0x68] sm:$0xff]
  %v743 = vld [vmem:[%s3 + $0x70] sm:$0xff]
  %v744 = vld [vmem:[%s3 + $0x78] sm:$0xff]
  %v745 = vld [vmem:[%s3 + $0x80] sm:$0xff]
  %v746 = vld [vmem:[%s3 + $0x88] sm:$0xff]
  %v747 = vld [vmem:[%s3 + $0x90] sm:$0xff]
  %v748 = vld [vmem:[%s3 + $0x98] sm:$0xff]
  %v749 = vld [vmem:[%s3 + $0xa0] sm:$0xff]
  %v750 = vld [vmem:[%s3 + $0xa8] sm:$0xff]
  %v751 = vld [vmem:[%s3 + $0xb0] sm:$0xff]
  %v752 = vld [vmem:[%s3 + $0xb8] sm:$0xff]
  %v753 = vld [vmem:[%s3 + $0xc0] sm:$0xff]
  %v754 = vld [vmem:[%s3 + $0xc8] sm:$0xff]
  %v755 = vld [vmem:[%s3 + $0xd0] sm:$0xff]
  %v756 = vld [vmem:[%s3 + $0xd8] sm:$0xff]
  %v757 = vld [vmem:[%s3 + $0xe0] sm:$0xff]
  %v758 = vld [vmem:[%s3 + $0xe8] sm:$0xff]
  %v759 = vld [vmem:[%s3 + $0xf0] sm:$0xff]
  %v760 = vld [vmem:[%s3 + $0xf8] sm:$0xff]
  %v761 = vld [vmem:[%s3 + $0x100] sm:$0xff]
  %v762 = vld [vmem:[%s3 + $0x108] sm:$0xff]
  %v763 = vld [vmem:[%s3 + $0x110] sm:$0xff]
  %v764 = vld [vmem:[%s3 + $0x118] sm:$0xff]
  %v765 = vld [vmem:[%s3 + $0x120] sm:$0xff]
  %v766 = vld [vmem:[%s3 + $0x128] sm:$0xff]
  %v767 = vld [vmem:[%s3 + $0x130] sm:$0xff]
  %v768 = vld [vmem:[%s3 + $0x138] sm:$0xff]
  %v769 = vld [vmem:[%s3 + $0x140] sm:$0xff]
  %v770 = vld [vmem:[%s3 + $0x148] sm:$0xff]
  %v771 = vld [vmem:[%s3 + $0x150] sm:$0xff]
  %v772 = vld [vmem:[%s3 + $0x158] sm:$0xff]
  %v773 = vld [vmem:[%s3 + $0x160] sm:$0xff]
  %v774 = vld [vmem:[%s3 + $0x168] sm:$0xff]
  %v775 = vld [vmem:[%s3 + $0x170] sm:$0xff]
  %v776 = vld [vmem:[%s3 + $0x178] sm:$0xff]
  %v777 = vld [vmem:[%s3 + $0x180] sm:$0xff]
  %v778 = vld [vmem:[%s3 + $0x188] sm:$0xff]
  %v779 = vld [vmem:[%s3 + $0x190] sm:$0xff]
  %v780 = vld [vmem:[%s3 + $0x198] sm:$0xff]
  %v781 = vld [vmem:[%s3 + $0x1a0] sm:$0xff]
  %v782 = vld [vmem:[%s3 + $0x1a8] sm:$0xff]
  %v783 = vld [vmem:[%s3 + $0x1b0] sm:$0xff]
  %v784 = vld [vmem:[%s3 + $0x1b8] sm:$0xff]
  %v785 = vld [vmem:[%s3 + $0x1c0] sm:$0xff]
  %v786 = vld [vmem:[%s3 + $0x1c8] sm:$0xff]
  %v787 = vld [vmem:[%s3 + $0x1d0] sm:$0xff]
  %v788 = vld [vmem:[%s3 + $0x1d8] sm:$0xff]
  %v789 = vld [vmem:[%s3 + $0x1e0] sm:$0xff]
  %v790 = vld [vmem:[%s3 + $0x1e8] sm:$0xff]
  %v791 = vld [vmem:[%s3 + $0x1f0] sm:$0xff]
  %v792 = vld [vmem:[%s3 + $0x1f8] sm:$0xff]
  %v793 = vld [vmem:[%s3 + $0x200] sm:$0xff]
  %v794 = vld [vmem:[%s3 + $0x208] sm:$0xff]
  %v795 = vld [vmem:[%s3 + $0x210] sm:$0xff]
  %v796 = vld [vmem:[%s3 + $0x218] sm:$0xff]
  %v797 = vld [vmem:[%s3 + $0x220] sm:$0xff]
  %v798 = vld [vmem:[%s3 + $0x228] sm:$0xff]
  %v799 = vld [vmem:[%s3 + $0x230] sm:$0xff]
  %v800 = vld [vmem:[%s3 + $0x238] sm:$0xff]
  %v801 = vld [vmem:[%s3 + $0x240] sm:$0xff]
  %v802 = vld [vmem:[%s3 + $0x248] sm:$0xff]
  %v803 = vld [vmem:[%s3 + $0x250] sm:$0xff]
  %v804 = vld [vmem:[%s3 + $0x258] sm:$0xff]
  %v805 = vld [vmem:[%s3 + $0x260] sm:$0xff]
  %v806 = vld [vmem:[%s3 + $0x268] sm:$0xff]
  %v807 = vld [vmem:[%s3 + $0x270] sm:$0xff]
  %v808 = vld [vmem:[%s3 + $0x278] sm:$0xff]
  %v809 = vld [vmem:[%s3 + $0x280] sm:$0xff]
  %v810 = vld [vmem:[%s3 + $0x288] sm:$0xff]
  %v811 = vld [vmem:[%s3 + $0x290] sm:$0xff]
  %v812 = vld [vmem:[%s3 + $0x298] sm:$0xff]
  %v813 = vld [vmem:[%s3 + $0x2a0] sm:$0xff]
  %v814 = vld [vmem:[%s3 + $0x2a8] sm:$0xff]
  %v815 = vld [vmem:[%s3 + $0x2b0] sm:$0xff]
  %v816 = vld [vmem:[%s3 + $0x2b8] sm:$0xff]
  %v817 = vld [vmem:[%s3 + $0x2c0] sm:$0xff]
  %v818 = vld [vmem:[%s3 + $0x2c8] sm:$0xff]
  %vm819 = vcmask 982016
  %v821 = vsel %vm819, %v729, 0
  %v824 = vsel %vm819, %v730, 0
  %v827 = vsel %vm819, %v731, 0
  %v830 = vsel %vm819, %v732, 0
  %v833 = vsel %vm819, %v733, 0
  %v836 = vsel %vm819, %v734, 0
  %v839 = vsel %vm819, %v735, 0
  %v842 = vsel %vm819, %v736, 0
  %v845 = vsel %vm819, %v737, 0
  %v848 = vsel %vm819, %v738, 0
  %v851 = vsel %vm819, %v739, 0
  %v854 = vsel %vm819, %v740, 0
  %v857 = vsel %vm819, %v741, 0
  %v860 = vsel %vm819, %v742, 0
  %v863 = vsel %vm819, %v743, 0
  %v866 = vsel %vm819, %v744, 0
  %v869 = vsel %vm819, %v745, 0
  %v872 = vsel %vm819, %v746, 0
  %v875 = vsel %vm819, %v747, 0
  %v878 = vsel %vm819, %v748, 0
  %v881 = vsel %vm819, %v749, 0
  %v884 = vsel %vm819, %v750, 0
  %v887 = vsel %vm819, %v751, 0
  %v890 = vsel %vm819, %v752, 0
  %v893 = vsel %vm819, %v753, 0
  %v896 = vsel %vm819, %v754, 0
  %v899 = vsel %vm819, %v755, 0
  %v902 = vsel %vm819, %v756, 0
  %v905 = vsel %vm819, %v757, 0
  %v908 = vsel %vm819, %v758, 0
  %v911 = vsel %vm819, %v759, 0
  %v914 = vsel %vm819, %v760, 0
  %v917 = vsel %vm819, %v761, 0
  %v920 = vsel %vm819, %v762, 0
  %v923 = vsel %vm819, %v763, 0
  %v926 = vsel %vm819, %v764, 0
  %v929 = vsel %vm819, %v765, 0
  %v932 = vsel %vm819, %v766, 0
  %v935 = vsel %vm819, %v767, 0
  %v938 = vsel %vm819, %v768, 0
  %v941 = vsel %vm819, %v769, 0
  %v944 = vsel %vm819, %v770, 0
  %v947 = vsel %vm819, %v771, 0
  %v950 = vsel %vm819, %v772, 0
  %v953 = vsel %vm819, %v773, 0
  %v956 = vsel %vm819, %v774, 0
  %v959 = vsel %vm819, %v775, 0
  %v962 = vsel %vm819, %v776, 0
  %v965 = vsel %vm819, %v777, 0
  %v968 = vsel %vm819, %v778, 0
  %v971 = vsel %vm819, %v779, 0
  %v974 = vsel %vm819, %v780, 0
  %v977 = vsel %vm819, %v781, 0
  %v980 = vsel %vm819, %v782, 0
  %v983 = vsel %vm819, %v783, 0
  %v986 = vsel %vm819, %v784, 0
  %v989 = vsel %vm819, %v785, 0
  %v992 = vsel %vm819, %v786, 0
  %v995 = vsel %vm819, %v787, 0
  %v998 = vsel %vm819, %v788, 0
  %v1001 = vsel %vm819, %v789, 0
  %v1004 = vsel %vm819, %v790, 0
  %v1007 = vsel %vm819, %v791, 0
  %v1010 = vsel %vm819, %v792, 0
  %v1013 = vsel %vm819, %v793, 0
  %v1016 = vsel %vm819, %v794, 0
  %v1019 = vsel %vm819, %v795, 0
  %v1022 = vsel %vm819, %v796, 0
  %v1025 = vsel %vm819, %v797, 0
  %v1028 = vsel %vm819, %v798, 0
  %v1031 = vsel %vm819, %v799, 0
  %v1034 = vsel %vm819, %v800, 0
  %v1037 = vsel %vm819, %v801, 0
  %v1040 = vsel %vm819, %v802, 0
  %v1043 = vsel %vm819, %v803, 0
  %v1046 = vsel %vm819, %v804, 0
  %v1049 = vsel %vm819, %v805, 0
  %v1052 = vsel %vm819, %v806, 0
  %v1055 = vsel %vm819, %v807, 0
  %v1058 = vsel %vm819, %v808, 0
  %v1061 = vsel %vm819, %v809, 0
  %v1064 = vsel %vm819, %v810, 0
  %v1067 = vsel %vm819, %v811, 0
  %v1070 = vsel %vm819, %v812, 0
  %v1073 = vsel %vm819, %v813, 0
  %v1076 = vsel %vm819, %v814, 0
  %v1079 = vsel %vm819, %v815, 0
  %v1082 = vsel %vm819, %v816, 0
  %v1085 = vsel %vm819, %v817, 0
  %v1088 = vsel %vm819, %v818, 0
  %1090 = vmatpush.msra.mxu0 0.0
  %1091 = vmatpush.msra.mxu0 %v727
  %1092 = vmatpush.msra.mxu0 %v725
  %1093 = vmatpush.msra.mxu0 %v723
  %1094 = vmatpush.msra.mxu0 %v721
  %1095 = vmatpush.msra.mxu0 %v719
  %1096 = vmatpush.msra.mxu0 %v717
  %1097 = vmatpush.msra.mxu0 %v715
  %1098 = vmatpush.msra.mxu0 %v713
  %1099 = vmatpush.msra.mxu0 %v711
  %1100 = vmatpush.msra.mxu0 %v709
  %1101 = vmatpush.msra.mxu0 %v707
  %1102 = vmatpush.msra.mxu0 %v705
  %1103 = vmatpush.msra.mxu0 %v703
  %1104 = vmatpush.msra.mxu0 %v701
  %1105 = vmatpush.msra.mxu0 %v699
  %1106 = vmatmul.f32.gmra.mxu0 %v821
  %v1107 = vpop.f32.mrf.mxu0
  %v1108 = vadd.f32 0.0, %v1107
  %1109 = vmatmul.f32.gmra.mxu0 %v824
  %v1110 = vpop.f32.mrf.mxu0
  %v1111 = vadd.f32 0.0, %v1110
  %1112 = vmatmul.f32.gmra.mxu0 %v827
  %v1113 = vpop.f32.mrf.mxu0
  %v1114 = vadd.f32 0.0, %v1113
  %1115 = vmatmul.f32.gmra.mxu0 %v830
  %v1116 = vpop.f32.mrf.mxu0
  %v1117 = vadd.f32 0.0, %v1116
  %1118 = vmatmul.f32.gmra.mxu0 %v833
  %v1119 = vpop.f32.mrf.mxu0
  %v1120 = vadd.f32 0.0, %v1119
  %1121 = vmatmul.f32.gmra.mxu0 %v836
  %v1122 = vpop.f32.mrf.mxu0
  %v1123 = vadd.f32 0.0, %v1122
  %1124 = vmatmul.f32.gmra.mxu0 %v839
  %v1125 = vpop.f32.mrf.mxu0
  %v1126 = vadd.f32 0.0, %v1125
  %1127 = vmatmul.f32.gmra.mxu0 %v842
  %v1128 = vpop.f32.mrf.mxu0
  %v1129 = vadd.f32 0.0, %v1128
  %1130 = vmatmul.f32.gmra.mxu0 %v845
  %v1131 = vpop.f32.mrf.mxu0
  %v1132 = vadd.f32 0.0, %v1131
  %1133 = vmatmul.f32.gmra.mxu0 %v848
  %v1134 = vpop.f32.mrf.mxu0
  %v1135 = vadd.f32 0.0, %v1134
  %1136 = vmatmul.f32.gmra.mxu0 %v851
  %v1137 = vpop.f32.mrf.mxu0
  %v1138 = vadd.f32 0.0, %v1137
  %1139 = vmatmul.f32.gmra.mxu0 %v854
  %v1140 = vpop.f32.mrf.mxu0
  %v1141 = vadd.f32 0.0, %v1140
  %1142 = vmatmul.f32.gmra.mxu0 %v857
  %v1143 = vpop.f32.mrf.mxu0
  %v1144 = vadd.f32 0.0, %v1143
  %1145 = vmatmul.f32.gmra.mxu0 %v860
  %v1146 = vpop.f32.mrf.mxu0
  %v1147 = vadd.f32 0.0, %v1146
  %1148 = vmatmul.f32.gmra.mxu0 %v863
  %v1149 = vpop.f32.mrf.mxu0
  %v1150 = vadd.f32 0.0, %v1149
  %1151 = vmatmul.f32.gmra.mxu0 %v866
  %v1152 = vpop.f32.mrf.mxu0
  %v1153 = vadd.f32 0.0, %v1152
  %1154 = vmatmul.f32.gmra.mxu0 %v869
  %v1155 = vpop.f32.mrf.mxu0
  %v1156 = vadd.f32 0.0, %v1155
  %1157 = vmatmul.f32.gmra.mxu0 %v872
  %v1158 = vpop.f32.mrf.mxu0
  %v1159 = vadd.f32 0.0, %v1158
  %1160 = vmatmul.f32.gmra.mxu0 %v875
  %v1161 = vpop.f32.mrf.mxu0
  %v1162 = vadd.f32 0.0, %v1161
  %1163 = vmatmul.f32.gmra.mxu0 %v878
  %v1164 = vpop.f32.mrf.mxu0
  %v1165 = vadd.f32 0.0, %v1164
  %1166 = vmatmul.f32.gmra.mxu0 %v881
  %v1167 = vpop.f32.mrf.mxu0
  %v1168 = vadd.f32 0.0, %v1167
  %1169 = vmatmul.f32.gmra.mxu0 %v884
  %v1170 = vpop.f32.mrf.mxu0
  %v1171 = vadd.f32 0.0, %v1170
  %1172 = vmatmul.f32.gmra.mxu0 %v887
  %v1173 = vpop.f32.mrf.mxu0
  %v1174 = vadd.f32 0.0, %v1173
  %1175 = vmatmul.f32.gmra.mxu0 %v890
  %v1176 = vpop.f32.mrf.mxu0
  %v1177 = vadd.f32 0.0, %v1176
  %1178 = vmatmul.f32.gmra.mxu0 %v893
  %v1179 = vpop.f32.mrf.mxu0
  %v1180 = vadd.f32 0.0, %v1179
  %1181 = vmatmul.f32.gmra.mxu0 %v896
  %v1182 = vpop.f32.mrf.mxu0
  %v1183 = vadd.f32 0.0, %v1182
  %1184 = vmatmul.f32.gmra.mxu0 %v899
  %v1185 = vpop.f32.mrf.mxu0
  %v1186 = vadd.f32 0.0, %v1185
  %1187 = vmatmul.f32.gmra.mxu0 %v902
  %v1188 = vpop.f32.mrf.mxu0
  %v1189 = vadd.f32 0.0, %v1188
  %1190 = vmatmul.f32.gmra.mxu0 %v905
  %v1191 = vpop.f32.mrf.mxu0
  %v1192 = vadd.f32 0.0, %v1191
  %1193 = vmatmul.f32.gmra.mxu0 %v908
  %v1194 = vpop.f32.mrf.mxu0
  %v1195 = vadd.f32 0.0, %v1194
  %1196 = vmatmul.f32.gmra.mxu0 %v911
  %v1197 = vpop.f32.mrf.mxu0
  %v1198 = vadd.f32 0.0, %v1197
  %1199 = vmatmul.f32.gmra.mxu0 %v914
  %v1200 = vpop.f32.mrf.mxu0
  %v1201 = vadd.f32 0.0, %v1200
  %1202 = vmatmul.f32.gmra.mxu0 %v917
  %v1203 = vpop.f32.mrf.mxu0
  %v1204 = vadd.f32 0.0, %v1203
  %1205 = vmatmul.f32.gmra.mxu0 %v920
  %v1206 = vpop.f32.mrf.mxu0
  %v1207 = vadd.f32 0.0, %v1206
  %1208 = vmatmul.f32.gmra.mxu0 %v923
  %v1209 = vpop.f32.mrf.mxu0
  %v1210 = vadd.f32 0.0, %v1209
  %1211 = vmatmul.f32.gmra.mxu0 %v926
  %v1212 = vpop.f32.mrf.mxu0
  %v1213 = vadd.f32 0.0, %v1212
  %1214 = vmatmul.f32.gmra.mxu0 %v929
  %v1215 = vpop.f32.mrf.mxu0
  %v1216 = vadd.f32 0.0, %v1215
  %1217 = vmatmul.f32.gmra.mxu0 %v932
  %v1218 = vpop.f32.mrf.mxu0
  %v1219 = vadd.f32 0.0, %v1218
  %1220 = vmatmul.f32.gmra.mxu0 %v935
  %v1221 = vpop.f32.mrf.mxu0
  %v1222 = vadd.f32 0.0, %v1221
  %1223 = vmatmul.f32.gmra.mxu0 %v938
  %v1224 = vpop.f32.mrf.mxu0
  %v1225 = vadd.f32 0.0, %v1224
  %1226 = vmatmul.f32.gmra.mxu0 %v941
  %v1227 = vpop.f32.mrf.mxu0
  %v1228 = vadd.f32 0.0, %v1227
  %1229 = vmatmul.f32.gmra.mxu0 %v944
  %v1230 = vpop.f32.mrf.mxu0
  %v1231 = vadd.f32 0.0, %v1230
  %1232 = vmatmul.f32.gmra.mxu0 %v947
  %v1233 = vpop.f32.mrf.mxu0
  %v1234 = vadd.f32 0.0, %v1233
  %1235 = vmatmul.f32.gmra.mxu0 %v950
  %v1236 = vpop.f32.mrf.mxu0
  %v1237 = vadd.f32 0.0, %v1236
  %1238 = vmatmul.f32.gmra.mxu0 %v953
  %v1239 = vpop.f32.mrf.mxu0
  %v1240 = vadd.f32 0.0, %v1239
  %1241 = vmatmul.f32.gmra.mxu0 %v956
  %v1242 = vpop.f32.mrf.mxu0
  %v1243 = vadd.f32 0.0, %v1242
  %1244 = vmatmul.f32.gmra.mxu0 %v959
  %v1245 = vpop.f32.mrf.mxu0
  %v1246 = vadd.f32 0.0, %v1245
  %1247 = vmatmul.f32.gmra.mxu0 %v962
  %v1248 = vpop.f32.mrf.mxu0
  %v1249 = vadd.f32 0.0, %v1248
  %1250 = vmatmul.f32.gmra.mxu0 %v965
  %v1251 = vpop.f32.mrf.mxu0
  %v1252 = vadd.f32 0.0, %v1251
  %1253 = vmatmul.f32.gmra.mxu0 %v968
  %v1254 = vpop.f32.mrf.mxu0
  %v1255 = vadd.f32 0.0, %v1254
  %1256 = vmatmul.f32.gmra.mxu0 %v971
  %v1257 = vpop.f32.mrf.mxu0
  %v1258 = vadd.f32 0.0, %v1257
  %1259 = vmatmul.f32.gmra.mxu0 %v974
  %v1260 = vpop.f32.mrf.mxu0
  %v1261 = vadd.f32 0.0, %v1260
  %1262 = vmatmul.f32.gmra.mxu0 %v977
  %v1263 = vpop.f32.mrf.mxu0
  %v1264 = vadd.f32 0.0, %v1263
  %1265 = vmatmul.f32.gmra.mxu0 %v980
  %v1266 = vpop.f32.mrf.mxu0
  %v1267 = vadd.f32 0.0, %v1266
  %1268 = vmatmul.f32.gmra.mxu0 %v983
  %v1269 = vpop.f32.mrf.mxu0
  %v1270 = vadd.f32 0.0, %v1269
  %1271 = vmatmul.f32.gmra.mxu0 %v986
  %v1272 = vpop.f32.mrf.mxu0
  %v1273 = vadd.f32 0.0, %v1272
  %1274 = vmatmul.f32.gmra.mxu0 %v989
  %v1275 = vpop.f32.mrf.mxu0
  %v1276 = vadd.f32 0.0, %v1275
  %1277 = vmatmul.f32.gmra.mxu0 %v992
  %v1278 = vpop.f32.mrf.mxu0
  %v1279 = vadd.f32 0.0, %v1278
  %1280 = vmatmul.f32.gmra.mxu0 %v995
  %v1281 = vpop.f32.mrf.mxu0
  %v1282 = vadd.f32 0.0, %v1281
  %1283 = vmatmul.f32.gmra.mxu0 %v998
  %v1284 = vpop.f32.mrf.mxu0
  %v1285 = vadd.f32 0.0, %v1284
  %1286 = vmatmul.f32.gmra.mxu0 %v1001
  %v1287 = vpop.f32.mrf.mxu0
  %v1288 = vadd.f32 0.0, %v1287
  %1289 = vmatmul.f32.gmra.mxu0 %v1004
  %v1290 = vpop.f32.mrf.mxu0
  %v1291 = vadd.f32 0.0, %v1290
  %1292 = vmatmul.f32.gmra.mxu0 %v1007
  %v1293 = vpop.f32.mrf.mxu0
  %v1294 = vadd.f32 0.0, %v1293
  %1295 = vmatmul.f32.gmra.mxu0 %v1010
  %v1296 = vpop.f32.mrf.mxu0
  %v1297 = vadd.f32 0.0, %v1296
  %1298 = vmatmul.f32.gmra.mxu0 %v1013
  %v1299 = vpop.f32.mrf.mxu0
  %v1300 = vadd.f32 0.0, %v1299
  %1301 = vmatmul.f32.gmra.mxu0 %v1016
  %v1302 = vpop.f32.mrf.mxu0
  %v1303 = vadd.f32 0.0, %v1302
  %1304 = vmatmul.f32.gmra.mxu0 %v1019
  %v1305 = vpop.f32.mrf.mxu0
  %v1306 = vadd.f32 0.0, %v1305
  %1307 = vmatmul.f32.gmra.mxu0 %v1022
  %v1308 = vpop.f32.mrf.mxu0
  %v1309 = vadd.f32 0.0, %v1308
  %1310 = vmatmul.f32.gmra.mxu0 %v1025
  %v1311 = vpop.f32.mrf.mxu0
  %v1312 = vadd.f32 0.0, %v1311
  %1313 = vmatmul.f32.gmra.mxu0 %v1028
  %v1314 = vpop.f32.mrf.mxu0
  %v1315 = vadd.f32 0.0, %v1314
  %1316 = vmatmul.f32.gmra.mxu0 %v1031
  %v1317 = vpop.f32.mrf.mxu0
  %v1318 = vadd.f32 0.0, %v1317
  %1319 = vmatmul.f32.gmra.mxu0 %v1034
  %v1320 = vpop.f32.mrf.mxu0
  %v1321 = vadd.f32 0.0, %v1320
  %1322 = vmatmul.f32.gmra.mxu0 %v1037
  %v1323 = vpop.f32.mrf.mxu0
  %v1324 = vadd.f32 0.0, %v1323
  %1325 = vmatmul.f32.gmra.mxu0 %v1040
  %v1326 = vpop.f32.mrf.mxu0
  %v1327 = vadd.f32 0.0, %v1326
  %1328 = vmatmul.f32.gmra.mxu0 %v1043
  %v1329 = vpop.f32.mrf.mxu0
  %v1330 = vadd.f32 0.0, %v1329
  %1331 = vmatmul.f32.gmra.mxu0 %v1046
  %v1332 = vpop.f32.mrf.mxu0
  %v1333 = vadd.f32 0.0, %v1332
  %1334 = vmatmul.f32.gmra.mxu0 %v1049
  %v1335 = vpop.f32.mrf.mxu0
  %v1336 = vadd.f32 0.0, %v1335
  %1337 = vmatmul.f32.gmra.mxu0 %v1052
  %v1338 = vpop.f32.mrf.mxu0
  %v1339 = vadd.f32 0.0, %v1338
  %1340 = vmatmul.f32.gmra.mxu0 %v1055
  %v1341 = vpop.f32.mrf.mxu0
  %v1342 = vadd.f32 0.0, %v1341
  %1343 = vmatmul.f32.gmra.mxu0 %v1058
  %v1344 = vpop.f32.mrf.mxu0
  %v1345 = vadd.f32 0.0, %v1344
  %1346 = vmatmul.f32.gmra.mxu0 %v1061
  %v1347 = vpop.f32.mrf.mxu0
  %v1348 = vadd.f32 0.0, %v1347
  %1349 = vmatmul.f32.gmra.mxu0 %v1064
  %v1350 = vpop.f32.mrf.mxu0
  %v1351 = vadd.f32 0.0, %v1350
  %1352 = vmatmul.f32.gmra.mxu0 %v1067
  %v1353 = vpop.f32.mrf.mxu0
  %v1354 = vadd.f32 0.0, %v1353
  %1355 = vmatmul.f32.gmra.mxu0 %v1070
  %v1356 = vpop.f32.mrf.mxu0
  %v1357 = vadd.f32 0.0, %v1356
  %1358 = vmatmul.f32.gmra.mxu0 %v1073
  %v1359 = vpop.f32.mrf.mxu0
  %v1360 = vadd.f32 0.0, %v1359
  %1361 = vmatmul.f32.gmra.mxu0 %v1076
  %v1362 = vpop.f32.mrf.mxu0
  %v1363 = vadd.f32 0.0, %v1362
  %1364 = vmatmul.f32.gmra.mxu0 %v1079
  %v1365 = vpop.f32.mrf.mxu0
  %v1366 = vadd.f32 0.0, %v1365
  %1367 = vmatmul.f32.gmra.mxu0 %v1082
  %v1368 = vpop.f32.mrf.mxu0
  %v1369 = vadd.f32 0.0, %v1368
  %1370 = vmatmul.f32.gmra.mxu0 %v1085
  %v1371 = vpop.f32.mrf.mxu0
  %v1372 = vadd.f32 0.0, %v1371
  %1373 = vmatmul.f32.gmra.mxu0 %v1088
  %v1374 = vpop.f32.mrf.mxu0
  %v1375 = vadd.f32 0.0, %v1374
  %1376 = vdwg.mxu0
  %1377 = vmatpush.msra.mxu0 0.0
  %1378 = vmatpush.msra.mxu0 %v728
  %1379 = vmatpush.msra.mxu0 %v726
  %1380 = vmatpush.msra.mxu0 %v724
  %1381 = vmatpush.msra.mxu0 %v722
  %1382 = vmatpush.msra.mxu0 %v720
  %1383 = vmatpush.msra.mxu0 %v718
  %1384 = vmatpush.msra.mxu0 %v716
  %1385 = vmatpush.msra.mxu0 %v714
  %1386 = vmatpush.msra.mxu0 %v712
  %1387 = vmatpush.msra.mxu0 %v710
  %1388 = vmatpush.msra.mxu0 %v708
  %1389 = vmatpush.msra.mxu0 %v706
  %1390 = vmatpush.msra.mxu0 %v704
  %1391 = vmatpush.msra.mxu0 %v702
  %1392 = vmatpush.msra.mxu0 %v700
  %1393 = vmatmul.f32.gmra.mxu0 %v821
  %v1394 = vpop.f32.mrf.mxu0
  %v1395 = vadd.f32 0.0, %v1394
  %1396 = vmatmul.f32.gmra.mxu0 %v824
  %v1397 = vpop.f32.mrf.mxu0
  %v1398 = vadd.f32 0.0, %v1397
  %1399 = vmatmul.f32.gmra.mxu0 %v827
  %v1400 = vpop.f32.mrf.mxu0
  %v1401 = vadd.f32 0.0, %v1400
  %1402 = vmatmul.f32.gmra.mxu0 %v830
  %v1403 = vpop.f32.mrf.mxu0
  %v1404 = vadd.f32 0.0, %v1403
  %1405 = vmatmul.f32.gmra.mxu0 %v833
  %v1406 = vpop.f32.mrf.mxu0
  %v1407 = vadd.f32 0.0, %v1406
  %1408 = vmatmul.f32.gmra.mxu0 %v836
  %v1409 = vpop.f32.mrf.mxu0
  %v1410 = vadd.f32 0.0, %v1409
  %1411 = vmatmul.f32.gmra.mxu0 %v839
  %v1412 = vpop.f32.mrf.mxu0
  %v1413 = vadd.f32 0.0, %v1412
  %1414 = vmatmul.f32.gmra.mxu0 %v842
  %v1415 = vpop.f32.mrf.mxu0
  %v1416 = vadd.f32 0.0, %v1415
  %1417 = vmatmul.f32.gmra.mxu0 %v845
  %v1418 = vpop.f32.mrf.mxu0
  %v1419 = vadd.f32 0.0, %v1418
  %1420 = vmatmul.f32.gmra.mxu0 %v848
  %v1421 = vpop.f32.mrf.mxu0
  %v1422 = vadd.f32 0.0, %v1421
  %1423 = vmatmul.f32.gmra.mxu0 %v851
  %v1424 = vpop.f32.mrf.mxu0
  %v1425 = vadd.f32 0.0, %v1424
  %1426 = vmatmul.f32.gmra.mxu0 %v854
  %v1427 = vpop.f32.mrf.mxu0
  %v1428 = vadd.f32 0.0, %v1427
  %1429 = vmatmul.f32.gmra.mxu0 %v857
  %v1430 = vpop.f32.mrf.mxu0
  %v1431 = vadd.f32 0.0, %v1430
  %1432 = vmatmul.f32.gmra.mxu0 %v860
  %v1433 = vpop.f32.mrf.mxu0
  %v1434 = vadd.f32 0.0, %v1433
  %1435 = vmatmul.f32.gmra.mxu0 %v863
  %v1436 = vpop.f32.mrf.mxu0
  %v1437 = vadd.f32 0.0, %v1436
  %1438 = vmatmul.f32.gmra.mxu0 %v866
  %v1439 = vpop.f32.mrf.mxu0
  %v1440 = vadd.f32 0.0, %v1439
  %1441 = vmatmul.f32.gmra.mxu0 %v869
  %v1442 = vpop.f32.mrf.mxu0
  %v1443 = vadd.f32 0.0, %v1442
  %1444 = vmatmul.f32.gmra.mxu0 %v872
  %v1445 = vpop.f32.mrf.mxu0
  %v1446 = vadd.f32 0.0, %v1445
  %1447 = vmatmul.f32.gmra.mxu0 %v875
  %v1448 = vpop.f32.mrf.mxu0
  %v1449 = vadd.f32 0.0, %v1448
  %1450 = vmatmul.f32.gmra.mxu0 %v878
  %v1451 = vpop.f32.mrf.mxu0
  %v1452 = vadd.f32 0.0, %v1451
  %1453 = vmatmul.f32.gmra.mxu0 %v881
  %v1454 = vpop.f32.mrf.mxu0
  %v1455 = vadd.f32 0.0, %v1454
  %1456 = vmatmul.f32.gmra.mxu0 %v884
  %v1457 = vpop.f32.mrf.mxu0
  %v1458 = vadd.f32 0.0, %v1457
  %1459 = vmatmul.f32.gmra.mxu0 %v887
  %v1460 = vpop.f32.mrf.mxu0
  %v1461 = vadd.f32 0.0, %v1460
  %1462 = vmatmul.f32.gmra.mxu0 %v890
  %v1463 = vpop.f32.mrf.mxu0
  %v1464 = vadd.f32 0.0, %v1463
  %1465 = vmatmul.f32.gmra.mxu0 %v893
  %v1466 = vpop.f32.mrf.mxu0
  %v1467 = vadd.f32 0.0, %v1466
  %1468 = vmatmul.f32.gmra.mxu0 %v896
  %v1469 = vpop.f32.mrf.mxu0
  %v1470 = vadd.f32 0.0, %v1469
  %1471 = vmatmul.f32.gmra.mxu0 %v899
  %v1472 = vpop.f32.mrf.mxu0
  %v1473 = vadd.f32 0.0, %v1472
  %1474 = vmatmul.f32.gmra.mxu0 %v902
  %v1475 = vpop.f32.mrf.mxu0
  %v1476 = vadd.f32 0.0, %v1475
  %1477 = vmatmul.f32.gmra.mxu0 %v905
  %v1478 = vpop.f32.mrf.mxu0
  %v1479 = vadd.f32 0.0, %v1478
  %1480 = vmatmul.f32.gmra.mxu0 %v908
  %v1481 = vpop.f32.mrf.mxu0
  %v1482 = vadd.f32 0.0, %v1481
  %1483 = vmatmul.f32.gmra.mxu0 %v911
  %v1484 = vpop.f32.mrf.mxu0
  %v1485 = vadd.f32 0.0, %v1484
  %1486 = vmatmul.f32.gmra.mxu0 %v914
  %v1487 = vpop.f32.mrf.mxu0
  %v1488 = vadd.f32 0.0, %v1487
  %1489 = vmatmul.f32.gmra.mxu0 %v917
  %v1490 = vpop.f32.mrf.mxu0
  %v1491 = vadd.f32 0.0, %v1490
  %1492 = vmatmul.f32.gmra.mxu0 %v920
  %v1493 = vpop.f32.mrf.mxu0
  %v1494 = vadd.f32 0.0, %v1493
  %1495 = vmatmul.f32.gmra.mxu0 %v923
  %v1496 = vpop.f32.mrf.mxu0
  %v1497 = vadd.f32 0.0, %v1496
  %1498 = vmatmul.f32.gmra.mxu0 %v926
  %v1499 = vpop.f32.mrf.mxu0
  %v1500 = vadd.f32 0.0, %v1499
  %1501 = vmatmul.f32.gmra.mxu0 %v929
  %v1502 = vpop.f32.mrf.mxu0
  %v1503 = vadd.f32 0.0, %v1502
  %1504 = vmatmul.f32.gmra.mxu0 %v932
  %v1505 = vpop.f32.mrf.mxu0
  %v1506 = vadd.f32 0.0, %v1505
  %1507 = vmatmul.f32.gmra.mxu0 %v935
  %v1508 = vpop.f32.mrf.mxu0
  %v1509 = vadd.f32 0.0, %v1508
  %1510 = vmatmul.f32.gmra.mxu0 %v938
  %v1511 = vpop.f32.mrf.mxu0
  %v1512 = vadd.f32 0.0, %v1511
  %1513 = vmatmul.f32.gmra.mxu0 %v941
  %v1514 = vpop.f32.mrf.mxu0
  %v1515 = vadd.f32 0.0, %v1514
  %1516 = vmatmul.f32.gmra.mxu0 %v944
  %v1517 = vpop.f32.mrf.mxu0
  %v1518 = vadd.f32 0.0, %v1517
  %1519 = vmatmul.f32.gmra.mxu0 %v947
  %v1520 = vpop.f32.mrf.mxu0
  %v1521 = vadd.f32 0.0, %v1520
  %1522 = vmatmul.f32.gmra.mxu0 %v950
  %v1523 = vpop.f32.mrf.mxu0
  %v1524 = vadd.f32 0.0, %v1523
  %1525 = vmatmul.f32.gmra.mxu0 %v953
  %v1526 = vpop.f32.mrf.mxu0
  %v1527 = vadd.f32 0.0, %v1526
  %1528 = vmatmul.f32.gmra.mxu0 %v956
  %v1529 = vpop.f32.mrf.mxu0
  %v1530 = vadd.f32 0.0, %v1529
  %1531 = vmatmul.f32.gmra.mxu0 %v959
  %v1532 = vpop.f32.mrf.mxu0
  %v1533 = vadd.f32 0.0, %v1532
  %1534 = vmatmul.f32.gmra.mxu0 %v962
  %v1535 = vpop.f32.mrf.mxu0
  %v1536 = vadd.f32 0.0, %v1535
  %1537 = vmatmul.f32.gmra.mxu0 %v965
  %v1538 = vpop.f32.mrf.mxu0
  %v1539 = vadd.f32 0.0, %v1538
  %1540 = vmatmul.f32.gmra.mxu0 %v968
  %v1541 = vpop.f32.mrf.mxu0
  %v1542 = vadd.f32 0.0, %v1541
  %1543 = vmatmul.f32.gmra.mxu0 %v971
  %v1544 = vpop.f32.mrf.mxu0
  %v1545 = vadd.f32 0.0, %v1544
  %1546 = vmatmul.f32.gmra.mxu0 %v974
  %v1547 = vpop.f32.mrf.mxu0
  %v1548 = vadd.f32 0.0, %v1547
  %1549 = vmatmul.f32.gmra.mxu0 %v977
  %v1550 = vpop.f32.mrf.mxu0
  %v1551 = vadd.f32 0.0, %v1550
  %1552 = vmatmul.f32.gmra.mxu0 %v980
  %v1553 = vpop.f32.mrf.mxu0
  %v1554 = vadd.f32 0.0, %v1553
  %1555 = vmatmul.f32.gmra.mxu0 %v983
  %v1556 = vpop.f32.mrf.mxu0
  %v1557 = vadd.f32 0.0, %v1556
  %1558 = vmatmul.f32.gmra.mxu0 %v986
  %v1559 = vpop.f32.mrf.mxu0
  %v1560 = vadd.f32 0.0, %v1559
  %1561 = vmatmul.f32.gmra.mxu0 %v989
  %v1562 = vpop.f32.mrf.mxu0
  %v1563 = vadd.f32 0.0, %v1562
  %1564 = vmatmul.f32.gmra.mxu0 %v992
  %v1565 = vpop.f32.mrf.mxu0
  %v1566 = vadd.f32 0.0, %v1565
  %1567 = vmatmul.f32.gmra.mxu0 %v995
  %v1568 = vpop.f32.mrf.mxu0
  %v1569 = vadd.f32 0.0, %v1568
  %1570 = vmatmul.f32.gmra.mxu0 %v998
  %v1571 = vpop.f32.mrf.mxu0
  %v1572 = vadd.f32 0.0, %v1571
  %1573 = vmatmul.f32.gmra.mxu0 %v1001
  %v1574 = vpop.f32.mrf.mxu0
  %v1575 = vadd.f32 0.0, %v1574
  %1576 = vmatmul.f32.gmra.mxu0 %v1004
  %v1577 = vpop.f32.mrf.mxu0
  %v1578 = vadd.f32 0.0, %v1577
  %1579 = vmatmul.f32.gmra.mxu0 %v1007
  %v1580 = vpop.f32.mrf.mxu0
  %v1581 = vadd.f32 0.0, %v1580
  %1582 = vmatmul.f32.gmra.mxu0 %v1010
  %v1583 = vpop.f32.mrf.mxu0
  %v1584 = vadd.f32 0.0, %v1583
  %1585 = vmatmul.f32.gmra.mxu0 %v1013
  %v1586 = vpop.f32.mrf.mxu0
  %v1587 = vadd.f32 0.0, %v1586
  %1588 = vmatmul.f32.gmra.mxu0 %v1016
  %v1589 = vpop.f32.mrf.mxu0
  %v1590 = vadd.f32 0.0, %v1589
  %1591 = vmatmul.f32.gmra.mxu0 %v1019
  %v1592 = vpop.f32.mrf.mxu0
  %v1593 = vadd.f32 0.0, %v1592
  %1594 = vmatmul.f32.gmra.mxu0 %v1022
  %v1595 = vpop.f32.mrf.mxu0
  %v1596 = vadd.f32 0.0, %v1595
  %1597 = vmatmul.f32.gmra.mxu0 %v1025
  %v1598 = vpop.f32.mrf.mxu0
  %v1599 = vadd.f32 0.0, %v1598
  %1600 = vmatmul.f32.gmra.mxu0 %v1028
  %v1601 = vpop.f32.mrf.mxu0
  %v1602 = vadd.f32 0.0, %v1601
  %1603 = vmatmul.f32.gmra.mxu0 %v1031
  %v1604 = vpop.f32.mrf.mxu0
  %v1605 = vadd.f32 0.0, %v1604
  %1606 = vmatmul.f32.gmra.mxu0 %v1034
  %v1607 = vpop.f32.mrf.mxu0
  %v1608 = vadd.f32 0.0, %v1607
  %1609 = vmatmul.f32.gmra.mxu0 %v1037
  %v1610 = vpop.f32.mrf.mxu0
  %v1611 = vadd.f32 0.0, %v1610
  %1612 = vmatmul.f32.gmra.mxu0 %v1040
  %v1613 = vpop.f32.mrf.mxu0
  %v1614 = vadd.f32 0.0, %v1613
  %1615 = vmatmul.f32.gmra.mxu0 %v1043
  %v1616 = vpop.f32.mrf.mxu0
  %v1617 = vadd.f32 0.0, %v1616
  %1618 = vmatmul.f32.gmra.mxu0 %v1046
  %v1619 = vpop.f32.mrf.mxu0
  %v1620 = vadd.f32 0.0, %v1619
  %1621 = vmatmul.f32.gmra.mxu0 %v1049
  %v1622 = vpop.f32.mrf.mxu0
  %v1623 = vadd.f32 0.0, %v1622
  %1624 = vmatmul.f32.gmra.mxu0 %v1052
  %v1625 = vpop.f32.mrf.mxu0
  %v1626 = vadd.f32 0.0, %v1625
  %1627 = vmatmul.f32.gmra.mxu0 %v1055
  %v1628 = vpop.f32.mrf.mxu0
  %v1629 = vadd.f32 0.0, %v1628
  %1630 = vmatmul.f32.gmra.mxu0 %v1058
  %v1631 = vpop.f32.mrf.mxu0
  %v1632 = vadd.f32 0.0, %v1631
  %1633 = vmatmul.f32.gmra.mxu0 %v1061
  %v1634 = vpop.f32.mrf.mxu0
  %v1635 = vadd.f32 0.0, %v1634
  %1636 = vmatmul.f32.gmra.mxu0 %v1064
  %v1637 = vpop.f32.mrf.mxu0
  %v1638 = vadd.f32 0.0, %v1637
  %1639 = vmatmul.f32.gmra.mxu0 %v1067
  %v1640 = vpop.f32.mrf.mxu0
  %v1641 = vadd.f32 0.0, %v1640
  %1642 = vmatmul.f32.gmra.mxu0 %v1070
  %v1643 = vpop.f32.mrf.mxu0
  %v1644 = vadd.f32 0.0, %v1643
  %1645 = vmatmul.f32.gmra.mxu0 %v1073
  %v1646 = vpop.f32.mrf.mxu0
  %v1647 = vadd.f32 0.0, %v1646
  %1648 = vmatmul.f32.gmra.mxu0 %v1076
  %v1649 = vpop.f32.mrf.mxu0
  %v1650 = vadd.f32 0.0, %v1649
  %1651 = vmatmul.f32.gmra.mxu0 %v1079
  %v1652 = vpop.f32.mrf.mxu0
  %v1653 = vadd.f32 0.0, %v1652
  %1654 = vmatmul.f32.gmra.mxu0 %v1082
  %v1655 = vpop.f32.mrf.mxu0
  %v1656 = vadd.f32 0.0, %v1655
  %1657 = vmatmul.f32.gmra.mxu0 %v1085
  %v1658 = vpop.f32.mrf.mxu0
  %v1659 = vadd.f32 0.0, %v1658
  %1660 = vmatmul.f32.gmra.mxu0 %v1088
  %v1661 = vpop.f32.mrf.mxu0
  %v1662 = vadd.f32 0.0, %v1661
  %1663 = vdwg.mxu0
  %v1664 = vsel %vm53, %v1395, 0.0
  %v1665 = vadd.f32 %v1108, %v1664
  %1666 = vadd.xlane.f32.xlu0 %v1665
  %v1667 = vpop.xlane.xlu0 %1666
  %v1668 = vsel %vm53, %v1398, 0.0
  %v1669 = vadd.f32 %v1111, %v1668
  %1670 = vadd.xlane.f32.xlu0 %v1669
  %v1671 = vpop.xlane.xlu0 %1670
  %v1672 = vsel %vm53, %v1401, 0.0
  %v1673 = vadd.f32 %v1114, %v1672
  %1674 = vadd.xlane.f32.xlu0 %v1673
  %v1675 = vpop.xlane.xlu0 %1674
  %v1676 = vsel %vm53, %v1404, 0.0
  %v1677 = vadd.f32 %v1117, %v1676
  %1678 = vadd.xlane.f32.xlu0 %v1677
  %v1679 = vpop.xlane.xlu0 %1678
  %v1680 = vsel %vm53, %v1407, 0.0
  %v1681 = vadd.f32 %v1120, %v1680
  %1682 = vadd.xlane.f32.xlu0 %v1681
  %v1683 = vpop.xlane.xlu0 %1682
  %v1684 = vsel %vm53, %v1410, 0.0
  %v1685 = vadd.f32 %v1123, %v1684
  %1686 = vadd.xlane.f32.xlu0 %v1685
  %v1687 = vpop.xlane.xlu0 %1686
  %v1688 = vsel %vm53, %v1413, 0.0
  %v1689 = vadd.f32 %v1126, %v1688
  %1690 = vadd.xlane.f32.xlu0 %v1689
  %v1691 = vpop.xlane.xlu0 %1690
  %v1692 = vsel %vm53, %v1416, 0.0
  %v1693 = vadd.f32 %v1129, %v1692
  %1694 = vadd.xlane.f32.xlu0 %v1693
  %v1695 = vpop.xlane.xlu0 %1694
  %v1696 = vsel %vm53, %v1419, 0.0
  %v1697 = vadd.f32 %v1132, %v1696
  %1698 = vadd.xlane.f32.xlu0 %v1697
  %v1699 = vpop.xlane.xlu0 %1698
  %v1700 = vsel %vm53, %v1422, 0.0
  %v1701 = vadd.f32 %v1135, %v1700
  %1702 = vadd.xlane.f32.xlu0 %v1701
  %v1703 = vpop.xlane.xlu0 %1702
  %v1704 = vsel %vm53, %v1425, 0.0
  %v1705 = vadd.f32 %v1138, %v1704
  %1706 = vadd.xlane.f32.xlu0 %v1705
  %v1707 = vpop.xlane.xlu0 %1706
  %v1708 = vsel %vm53, %v1428, 0.0
  %v1709 = vadd.f32 %v1141, %v1708
  %1710 = vadd.xlane.f32.xlu0 %v1709
  %v1711 = vpop.xlane.xlu0 %1710
  %v1712 = vsel %vm53, %v1431, 0.0
  %v1713 = vadd.f32 %v1144, %v1712
  %1714 = vadd.xlane.f32.xlu0 %v1713
  %v1715 = vpop.xlane.xlu0 %1714
  %v1716 = vsel %vm53, %v1434, 0.0
  %v1717 = vadd.f32 %v1147, %v1716
  %1718 = vadd.xlane.f32.xlu0 %v1717
  %v1719 = vpop.xlane.xlu0 %1718
  %v1720 = vsel %vm53, %v1437, 0.0
  %v1721 = vadd.f32 %v1150, %v1720
  %1722 = vadd.xlane.f32.xlu0 %v1721
  %v1723 = vpop.xlane.xlu0 %1722
  %v1724 = vsel %vm53, %v1440, 0.0
  %v1725 = vadd.f32 %v1153, %v1724
  %1726 = vadd.xlane.f32.xlu0 %v1725
  %v1727 = vpop.xlane.xlu0 %1726
  %v1728 = vsel %vm53, %v1443, 0.0
  %v1729 = vadd.f32 %v1156, %v1728
  %1730 = vadd.xlane.f32.xlu0 %v1729
  %v1731 = vpop.xlane.xlu0 %1730
  %v1732 = vsel %vm53, %v1446, 0.0
  %v1733 = vadd.f32 %v1159, %v1732
  %1734 = vadd.xlane.f32.xlu0 %v1733
  %v1735 = vpop.xlane.xlu0 %1734
  %v1736 = vsel %vm53, %v1449, 0.0
  %v1737 = vadd.f32 %v1162, %v1736
  %1738 = vadd.xlane.f32.xlu0 %v1737
  %v1739 = vpop.xlane.xlu0 %1738
  %v1740 = vsel %vm53, %v1452, 0.0
  %v1741 = vadd.f32 %v1165, %v1740
  %1742 = vadd.xlane.f32.xlu0 %v1741
  %v1743 = vpop.xlane.xlu0 %1742
  %v1744 = vsel %vm53, %v1455, 0.0
  %v1745 = vadd.f32 %v1168, %v1744
  %1746 = vadd.xlane.f32.xlu0 %v1745
  %v1747 = vpop.xlane.xlu0 %1746
  %v1748 = vsel %vm53, %v1458, 0.0
  %v1749 = vadd.f32 %v1171, %v1748
  %1750 = vadd.xlane.f32.xlu0 %v1749
  %v1751 = vpop.xlane.xlu0 %1750
  %v1752 = vsel %vm53, %v1461, 0.0
  %v1753 = vadd.f32 %v1174, %v1752
  %1754 = vadd.xlane.f32.xlu0 %v1753
  %v1755 = vpop.xlane.xlu0 %1754
  %v1756 = vsel %vm53, %v1464, 0.0
  %v1757 = vadd.f32 %v1177, %v1756
  %1758 = vadd.xlane.f32.xlu0 %v1757
  %v1759 = vpop.xlane.xlu0 %1758
  %v1760 = vsel %vm53, %v1467, 0.0
  %v1761 = vadd.f32 %v1180, %v1760
  %1762 = vadd.xlane.f32.xlu0 %v1761
  %v1763 = vpop.xlane.xlu0 %1762
  %v1764 = vsel %vm53, %v1470, 0.0
  %v1765 = vadd.f32 %v1183, %v1764
  %1766 = vadd.xlane.f32.xlu0 %v1765
  %v1767 = vpop.xlane.xlu0 %1766
  %v1768 = vsel %vm53, %v1473, 0.0
  %v1769 = vadd.f32 %v1186, %v1768
  %1770 = vadd.xlane.f32.xlu0 %v1769
  %v1771 = vpop.xlane.xlu0 %1770
  %v1772 = vsel %vm53, %v1476, 0.0
  %v1773 = vadd.f32 %v1189, %v1772
  %1774 = vadd.xlane.f32.xlu0 %v1773
  %v1775 = vpop.xlane.xlu0 %1774
  %v1776 = vsel %vm53, %v1479, 0.0
  %v1777 = vadd.f32 %v1192, %v1776
  %1778 = vadd.xlane.f32.xlu0 %v1777
  %v1779 = vpop.xlane.xlu0 %1778
  %v1780 = vsel %vm53, %v1482, 0.0
  %v1781 = vadd.f32 %v1195, %v1780
  %1782 = vadd.xlane.f32.xlu0 %v1781
  %v1783 = vpop.xlane.xlu0 %1782
  %v1784 = vsel %vm53, %v1485, 0.0
  %v1785 = vadd.f32 %v1198, %v1784
  %1786 = vadd.xlane.f32.xlu0 %v1785
  %v1787 = vpop.xlane.xlu0 %1786
  %v1788 = vsel %vm53, %v1488, 0.0
  %v1789 = vadd.f32 %v1201, %v1788
  %1790 = vadd.xlane.f32.xlu0 %v1789
  %v1791 = vpop.xlane.xlu0 %1790
  %v1792 = vsel %vm53, %v1491, 0.0
  %v1793 = vadd.f32 %v1204, %v1792
  %1794 = vadd.xlane.f32.xlu0 %v1793
  %v1795 = vpop.xlane.xlu0 %1794
  %v1796 = vsel %vm53, %v1494, 0.0
  %v1797 = vadd.f32 %v1207, %v1796
  %1798 = vadd.xlane.f32.xlu0 %v1797
  %v1799 = vpop.xlane.xlu0 %1798
  %v1800 = vsel %vm53, %v1497, 0.0
  %v1801 = vadd.f32 %v1210, %v1800
  %1802 = vadd.xlane.f32.xlu0 %v1801
  %v1803 = vpop.xlane.xlu0 %1802
  %v1804 = vsel %vm53, %v1500, 0.0
  %v1805 = vadd.f32 %v1213, %v1804
  %1806 = vadd.xlane.f32.xlu0 %v1805
  %v1807 = vpop.xlane.xlu0 %1806
  %v1808 = vsel %vm53, %v1503, 0.0
  %v1809 = vadd.f32 %v1216, %v1808
  %1810 = vadd.xlane.f32.xlu0 %v1809
  %v1811 = vpop.xlane.xlu0 %1810
  %v1812 = vsel %vm53, %v1506, 0.0
  %v1813 = vadd.f32 %v1219, %v1812
  %1814 = vadd.xlane.f32.xlu0 %v1813
  %v1815 = vpop.xlane.xlu0 %1814
  %v1816 = vsel %vm53, %v1509, 0.0
  %v1817 = vadd.f32 %v1222, %v1816
  %1818 = vadd.xlane.f32.xlu0 %v1817
  %v1819 = vpop.xlane.xlu0 %1818
  %v1820 = vsel %vm53, %v1512, 0.0
  %v1821 = vadd.f32 %v1225, %v1820
  %1822 = vadd.xlane.f32.xlu0 %v1821
  %v1823 = vpop.xlane.xlu0 %1822
  %v1824 = vsel %vm53, %v1515, 0.0
  %v1825 = vadd.f32 %v1228, %v1824
  %1826 = vadd.xlane.f32.xlu0 %v1825
  %v1827 = vpop.xlane.xlu0 %1826
  %v1828 = vsel %vm53, %v1518, 0.0
  %v1829 = vadd.f32 %v1231, %v1828
  %1830 = vadd.xlane.f32.xlu0 %v1829
  %v1831 = vpop.xlane.xlu0 %1830
  %v1832 = vsel %vm53, %v1521, 0.0
  %v1833 = vadd.f32 %v1234, %v1832
  %1834 = vadd.xlane.f32.xlu0 %v1833
  %v1835 = vpop.xlane.xlu0 %1834
  %v1836 = vsel %vm53, %v1524, 0.0
  %v1837 = vadd.f32 %v1237, %v1836
  %1838 = vadd.xlane.f32.xlu0 %v1837
  %v1839 = vpop.xlane.xlu0 %1838
  %v1840 = vsel %vm53, %v1527, 0.0
  %v1841 = vadd.f32 %v1240, %v1840
  %1842 = vadd.xlane.f32.xlu0 %v1841
  %v1843 = vpop.xlane.xlu0 %1842
  %v1844 = vsel %vm53, %v1530, 0.0
  %v1845 = vadd.f32 %v1243, %v1844
  %1846 = vadd.xlane.f32.xlu0 %v1845
  %v1847 = vpop.xlane.xlu0 %1846
  %v1848 = vsel %vm53, %v1533, 0.0
  %v1849 = vadd.f32 %v1246, %v1848
  %1850 = vadd.xlane.f32.xlu0 %v1849
  %v1851 = vpop.xlane.xlu0 %1850
  %v1852 = vsel %vm53, %v1536, 0.0
  %v1853 = vadd.f32 %v1249, %v1852
  %1854 = vadd.xlane.f32.xlu0 %v1853
  %v1855 = vpop.xlane.xlu0 %1854
  %v1856 = vsel %vm53, %v1539, 0.0
  %v1857 = vadd.f32 %v1252, %v1856
  %1858 = vadd.xlane.f32.xlu0 %v1857
  %v1859 = vpop.xlane.xlu0 %1858
  %v1860 = vsel %vm53, %v1542, 0.0
  %v1861 = vadd.f32 %v1255, %v1860
  %1862 = vadd.xlane.f32.xlu0 %v1861
  %v1863 = vpop.xlane.xlu0 %1862
  %v1864 = vsel %vm53, %v1545, 0.0
  %v1865 = vadd.f32 %v1258, %v1864
  %1866 = vadd.xlane.f32.xlu0 %v1865
  %v1867 = vpop.xlane.xlu0 %1866
  %v1868 = vsel %vm53, %v1548, 0.0
  %v1869 = vadd.f32 %v1261, %v1868
  %1870 = vadd.xlane.f32.xlu0 %v1869
  %v1871 = vpop.xlane.xlu0 %1870
  %v1872 = vsel %vm53, %v1551, 0.0
  %v1873 = vadd.f32 %v1264, %v1872
  %1874 = vadd.xlane.f32.xlu0 %v1873
  %v1875 = vpop.xlane.xlu0 %1874
  %v1876 = vsel %vm53, %v1554, 0.0
  %v1877 = vadd.f32 %v1267, %v1876
  %1878 = vadd.xlane.f32.xlu0 %v1877
  %v1879 = vpop.xlane.xlu0 %1878
  %v1880 = vsel %vm53, %v1557, 0.0
  %v1881 = vadd.f32 %v1270, %v1880
  %1882 = vadd.xlane.f32.xlu0 %v1881
  %v1883 = vpop.xlane.xlu0 %1882
  %v1884 = vsel %vm53, %v1560, 0.0
  %v1885 = vadd.f32 %v1273, %v1884
  %1886 = vadd.xlane.f32.xlu0 %v1885
  %v1887 = vpop.xlane.xlu0 %1886
  %v1888 = vsel %vm53, %v1563, 0.0
  %v1889 = vadd.f32 %v1276, %v1888
  %1890 = vadd.xlane.f32.xlu0 %v1889
  %v1891 = vpop.xlane.xlu0 %1890
  %v1892 = vsel %vm53, %v1566, 0.0
  %v1893 = vadd.f32 %v1279, %v1892
  %1894 = vadd.xlane.f32.xlu0 %v1893
  %v1895 = vpop.xlane.xlu0 %1894
  %v1896 = vsel %vm53, %v1569, 0.0
  %v1897 = vadd.f32 %v1282, %v1896
  %1898 = vadd.xlane.f32.xlu0 %v1897
  %v1899 = vpop.xlane.xlu0 %1898
  %v1900 = vsel %vm53, %v1572, 0.0
  %v1901 = vadd.f32 %v1285, %v1900
  %1902 = vadd.xlane.f32.xlu0 %v1901
  %v1903 = vpop.xlane.xlu0 %1902
  %v1904 = vsel %vm53, %v1575, 0.0
  %v1905 = vadd.f32 %v1288, %v1904
  %1906 = vadd.xlane.f32.xlu0 %v1905
  %v1907 = vpop.xlane.xlu0 %1906
  %v1908 = vsel %vm53, %v1578, 0.0
  %v1909 = vadd.f32 %v1291, %v1908
  %1910 = vadd.xlane.f32.xlu0 %v1909
  %v1911 = vpop.xlane.xlu0 %1910
  %v1912 = vsel %vm53, %v1581, 0.0
  %v1913 = vadd.f32 %v1294, %v1912
  %1914 = vadd.xlane.f32.xlu0 %v1913
  %v1915 = vpop.xlane.xlu0 %1914
  %v1916 = vsel %vm53, %v1584, 0.0
  %v1917 = vadd.f32 %v1297, %v1916
  %1918 = vadd.xlane.f32.xlu0 %v1917
  %v1919 = vpop.xlane.xlu0 %1918
  %v1920 = vsel %vm53, %v1587, 0.0
  %v1921 = vadd.f32 %v1300, %v1920
  %1922 = vadd.xlane.f32.xlu0 %v1921
  %v1923 = vpop.xlane.xlu0 %1922
  %v1924 = vsel %vm53, %v1590, 0.0
  %v1925 = vadd.f32 %v1303, %v1924
  %1926 = vadd.xlane.f32.xlu0 %v1925
  %v1927 = vpop.xlane.xlu0 %1926
  %v1928 = vsel %vm53, %v1593, 0.0
  %v1929 = vadd.f32 %v1306, %v1928
  %1930 = vadd.xlane.f32.xlu0 %v1929
  %v1931 = vpop.xlane.xlu0 %1930
  %v1932 = vsel %vm53, %v1596, 0.0
  %v1933 = vadd.f32 %v1309, %v1932
  %1934 = vadd.xlane.f32.xlu0 %v1933
  %v1935 = vpop.xlane.xlu0 %1934
  %v1936 = vsel %vm53, %v1599, 0.0
  %v1937 = vadd.f32 %v1312, %v1936
  %1938 = vadd.xlane.f32.xlu0 %v1937
  %v1939 = vpop.xlane.xlu0 %1938
  %v1940 = vsel %vm53, %v1602, 0.0
  %v1941 = vadd.f32 %v1315, %v1940
  %1942 = vadd.xlane.f32.xlu0 %v1941
  %v1943 = vpop.xlane.xlu0 %1942
  %v1944 = vsel %vm53, %v1605, 0.0
  %v1945 = vadd.f32 %v1318, %v1944
  %1946 = vadd.xlane.f32.xlu0 %v1945
  %v1947 = vpop.xlane.xlu0 %1946
  %v1948 = vsel %vm53, %v1608, 0.0
  %v1949 = vadd.f32 %v1321, %v1948
  %1950 = vadd.xlane.f32.xlu0 %v1949
  %v1951 = vpop.xlane.xlu0 %1950
  %v1952 = vsel %vm53, %v1611, 0.0
  %v1953 = vadd.f32 %v1324, %v1952
  %1954 = vadd.xlane.f32.xlu0 %v1953
  %v1955 = vpop.xlane.xlu0 %1954
  %v1956 = vsel %vm53, %v1614, 0.0
  %v1957 = vadd.f32 %v1327, %v1956
  %1958 = vadd.xlane.f32.xlu0 %v1957
  %v1959 = vpop.xlane.xlu0 %1958
  %v1960 = vsel %vm53, %v1617, 0.0
  %v1961 = vadd.f32 %v1330, %v1960
  %1962 = vadd.xlane.f32.xlu0 %v1961
  %v1963 = vpop.xlane.xlu0 %1962
  %v1964 = vsel %vm53, %v1620, 0.0
  %v1965 = vadd.f32 %v1333, %v1964
  %1966 = vadd.xlane.f32.xlu0 %v1965
  %v1967 = vpop.xlane.xlu0 %1966
  %v1968 = vsel %vm53, %v1623, 0.0
  %v1969 = vadd.f32 %v1336, %v1968
  %1970 = vadd.xlane.f32.xlu0 %v1969
  %v1971 = vpop.xlane.xlu0 %1970
  %v1972 = vsel %vm53, %v1626, 0.0
  %v1973 = vadd.f32 %v1339, %v1972
  %1974 = vadd.xlane.f32.xlu0 %v1973
  %v1975 = vpop.xlane.xlu0 %1974
  %v1976 = vsel %vm53, %v1629, 0.0
  %v1977 = vadd.f32 %v1342, %v1976
  %1978 = vadd.xlane.f32.xlu0 %v1977
  %v1979 = vpop.xlane.xlu0 %1978
  %v1980 = vsel %vm53, %v1632, 0.0
  %v1981 = vadd.f32 %v1345, %v1980
  %1982 = vadd.xlane.f32.xlu0 %v1981
  %v1983 = vpop.xlane.xlu0 %1982
  %v1984 = vsel %vm53, %v1635, 0.0
  %v1985 = vadd.f32 %v1348, %v1984
  %1986 = vadd.xlane.f32.xlu0 %v1985
  %v1987 = vpop.xlane.xlu0 %1986
  %v1988 = vsel %vm53, %v1638, 0.0
  %v1989 = vadd.f32 %v1351, %v1988
  %1990 = vadd.xlane.f32.xlu0 %v1989
  %v1991 = vpop.xlane.xlu0 %1990
  %v1992 = vsel %vm53, %v1641, 0.0
  %v1993 = vadd.f32 %v1354, %v1992
  %1994 = vadd.xlane.f32.xlu0 %v1993
  %v1995 = vpop.xlane.xlu0 %1994
  %v1996 = vsel %vm53, %v1644, 0.0
  %v1997 = vadd.f32 %v1357, %v1996
  %1998 = vadd.xlane.f32.xlu0 %v1997
  %v1999 = vpop.xlane.xlu0 %1998
  %v2000 = vsel %vm53, %v1647, 0.0
  %v2001 = vadd.f32 %v1360, %v2000
  %2002 = vadd.xlane.f32.xlu0 %v2001
  %v2003 = vpop.xlane.xlu0 %2002
  %v2004 = vsel %vm53, %v1650, 0.0
  %v2005 = vadd.f32 %v1363, %v2004
  %2006 = vadd.xlane.f32.xlu0 %v2005
  %v2007 = vpop.xlane.xlu0 %2006
  %v2008 = vsel %vm53, %v1653, 0.0
  %v2009 = vadd.f32 %v1366, %v2008
  %2010 = vadd.xlane.f32.xlu0 %v2009
  %v2011 = vpop.xlane.xlu0 %2010
  %v2012 = vsel %vm53, %v1656, 0.0
  %v2013 = vadd.f32 %v1369, %v2012
  %2014 = vadd.xlane.f32.xlu0 %v2013
  %v2015 = vpop.xlane.xlu0 %2014
  %v2016 = vsel %vm53, %v1659, 0.0
  %v2017 = vadd.f32 %v1372, %v2016
  %2018 = vadd.xlane.f32.xlu0 %v2017
  %v2019 = vpop.xlane.xlu0 %2018
  %v2020 = vsel %vm53, %v1662, 0.0
  %v2021 = vadd.f32 %v1375, %v2020
  %2022 = vadd.xlane.f32.xlu0 %v2021
  %v2023 = vpop.xlane.xlu0 %2022
  %v2024 = vmul.f32 %v1667, 0.0051020407
  %v2025 = vmul.f32 %v1671, 0.0051020407
  %v2026 = vmul.f32 %v1675, 0.0051020407
  %v2027 = vmul.f32 %v1679, 0.0051020407
  %v2028 = vmul.f32 %v1683, 0.0051020407
  %v2029 = vmul.f32 %v1687, 0.0051020407
  %v2030 = vmul.f32 %v1691, 0.0051020407
  %v2031 = vmul.f32 %v1695, 0.0051020407
  %v2032 = vmul.f32 %v1699, 0.0051020407
  %v2033 = vmul.f32 %v1703, 0.0051020407
  %v2034 = vmul.f32 %v1707, 0.0051020407
  %v2035 = vmul.f32 %v1711, 0.0051020407
  %v2036 = vmul.f32 %v1715, 0.0051020407
  %v2037 = vmul.f32 %v1719, 0.0051020407
  %v2038 = vmul.f32 %v1723, 0.0051020407
  %v2039 = vmul.f32 %v1727, 0.0051020407
  %v2040 = vmul.f32 %v1731, 0.0051020407
  %v2041 = vmul.f32 %v1735, 0.0051020407
  %v2042 = vmul.f32 %v1739, 0.0051020407
  %v2043 = vmul.f32 %v1743, 0.0051020407
  %v2044 = vmul.f32 %v1747, 0.0051020407
  %v2045 = vmul.f32 %v1751, 0.0051020407
  %v2046 = vmul.f32 %v1755, 0.0051020407
  %v2047 = vmul.f32 %v1759, 0.0051020407
  %v2048 = vmul.f32 %v1763, 0.0051020407
  %v2049 = vmul.f32 %v1767, 0.0051020407
  %v2050 = vmul.f32 %v1771, 0.0051020407
  %v2051 = vmul.f32 %v1775, 0.0051020407
  %v2052 = vmul.f32 %v1779, 0.0051020407
  %v2053 = vmul.f32 %v1783, 0.0051020407
  %v2054 = vmul.f32 %v1787, 0.0051020407
  %v2055 = vmul.f32 %v1791, 0.0051020407
  %v2056 = vmul.f32 %v1795, 0.0051020407
  %v2057 = vmul.f32 %v1799, 0.0051020407
  %v2058 = vmul.f32 %v1803, 0.0051020407
  %v2059 = vmul.f32 %v1807, 0.0051020407
  %v2060 = vmul.f32 %v1811, 0.0051020407
  %v2061 = vmul.f32 %v1815, 0.0051020407
  %v2062 = vmul.f32 %v1819, 0.0051020407
  %v2063 = vmul.f32 %v1823, 0.0051020407
  %v2064 = vmul.f32 %v1827, 0.0051020407
  %v2065 = vmul.f32 %v1831, 0.0051020407
  %v2066 = vmul.f32 %v1835, 0.0051020407
  %v2067 = vmul.f32 %v1839, 0.0051020407
  %v2068 = vmul.f32 %v1843, 0.0051020407
  %v2069 = vmul.f32 %v1847, 0.0051020407
  %v2070 = vmul.f32 %v1851, 0.0051020407
  %v2071 = vmul.f32 %v1855, 0.0051020407
  %v2072 = vmul.f32 %v1859, 0.0051020407
  %v2073 = vmul.f32 %v1863, 0.0051020407
  %v2074 = vmul.f32 %v1867, 0.0051020407
  %v2075 = vmul.f32 %v1871, 0.0051020407
  %v2076 = vmul.f32 %v1875, 0.0051020407
  %v2077 = vmul.f32 %v1879, 0.0051020407
  %v2078 = vmul.f32 %v1883, 0.0051020407
  %v2079 = vmul.f32 %v1887, 0.0051020407
  %v2080 = vmul.f32 %v1891, 0.0051020407
  %v2081 = vmul.f32 %v1895, 0.0051020407
  %v2082 = vmul.f32 %v1899, 0.0051020407
  %v2083 = vmul.f32 %v1903, 0.0051020407
  %v2084 = vmul.f32 %v1907, 0.0051020407
  %v2085 = vmul.f32 %v1911, 0.0051020407
  %v2086 = vmul.f32 %v1915, 0.0051020407
  %v2087 = vmul.f32 %v1919, 0.0051020407
  %v2088 = vmul.f32 %v1923, 0.0051020407
  %v2089 = vmul.f32 %v1927, 0.0051020407
  %v2090 = vmul.f32 %v1931, 0.0051020407
  %v2091 = vmul.f32 %v1935, 0.0051020407
  %v2092 = vmul.f32 %v1939, 0.0051020407
  %v2093 = vmul.f32 %v1943, 0.0051020407
  %v2094 = vmul.f32 %v1947, 0.0051020407
  %v2095 = vmul.f32 %v1951, 0.0051020407
  %v2096 = vmul.f32 %v1955, 0.0051020407
  %v2097 = vmul.f32 %v1959, 0.0051020407
  %v2098 = vmul.f32 %v1963, 0.0051020407
  %v2099 = vmul.f32 %v1967, 0.0051020407
  %v2100 = vmul.f32 %v1971, 0.0051020407
  %v2101 = vmul.f32 %v1975, 0.0051020407
  %v2102 = vmul.f32 %v1979, 0.0051020407
  %v2103 = vmul.f32 %v1983, 0.0051020407
  %v2104 = vmul.f32 %v1987, 0.0051020407
  %v2105 = vmul.f32 %v1991, 0.0051020407
  %v2106 = vmul.f32 %v1995, 0.0051020407
  %v2107 = vmul.f32 %v1999, 0.0051020407
  %v2108 = vmul.f32 %v2003, 0.0051020407
  %v2109 = vmul.f32 %v2007, 0.0051020407
  %v2110 = vmul.f32 %v2011, 0.0051020407
  %v2111 = vmul.f32 %v2015, 0.0051020407
  %v2112 = vmul.f32 %v2019, 0.0051020407
  %v2113 = vmul.f32 %v2023, 0.0051020407
  %v2114 = vmul.f32 %v1108, %v1108
  %v2115 = vmul.f32 %v1395, %v1395
  %v2116 = vmul.f32 %v1111, %v1111
  %v2117 = vmul.f32 %v1398, %v1398
  %v2118 = vmul.f32 %v1114, %v1114
  %v2119 = vmul.f32 %v1401, %v1401
  %v2120 = vmul.f32 %v1117, %v1117
  %v2121 = vmul.f32 %v1404, %v1404
  %v2122 = vmul.f32 %v1120, %v1120
  %v2123 = vmul.f32 %v1407, %v1407
  %v2124 = vmul.f32 %v1123, %v1123
  %v2125 = vmul.f32 %v1410, %v1410
  %v2126 = vmul.f32 %v1126, %v1126
  %v2127 = vmul.f32 %v1413, %v1413
  %v2128 = vmul.f32 %v1129, %v1129
  %v2129 = vmul.f32 %v1416, %v1416
  %v2130 = vmul.f32 %v1132, %v1132
  %v2131 = vmul.f32 %v1419, %v1419
  %v2132 = vmul.f32 %v1135, %v1135
  %v2133 = vmul.f32 %v1422, %v1422
  %v2134 = vmul.f32 %v1138, %v1138
  %v2135 = vmul.f32 %v1425, %v1425
  %v2136 = vmul.f32 %v1141, %v1141
  %v2137 = vmul.f32 %v1428, %v1428
  %v2138 = vmul.f32 %v1144, %v1144
  %v2139 = vmul.f32 %v1431, %v1431
  %v2140 = vmul.f32 %v1147, %v1147
  %v2141 = vmul.f32 %v1434, %v1434
  %v2142 = vmul.f32 %v1150, %v1150
  %v2143 = vmul.f32 %v1437, %v1437
  %v2144 = vmul.f32 %v1153, %v1153
  %v2145 = vmul.f32 %v1440, %v1440
  %v2146 = vmul.f32 %v1156, %v1156
  %v2147 = vmul.f32 %v1443, %v1443
  %v2148 = vmul.f32 %v1159, %v1159
  %v2149 = vmul.f32 %v1446, %v1446
  %v2150 = vmul.f32 %v1162, %v1162
  %v2151 = vmul.f32 %v1449, %v1449
  %v2152 = vmul.f32 %v1165, %v1165
  %v2153 = vmul.f32 %v1452, %v1452
  %v2154 = vmul.f32 %v1168, %v1168
  %v2155 = vmul.f32 %v1455, %v1455
  %v2156 = vmul.f32 %v1171, %v1171
  %v2157 = vmul.f32 %v1458, %v1458
  %v2158 = vmul.f32 %v1174, %v1174
  %v2159 = vmul.f32 %v1461, %v1461
  %v2160 = vmul.f32 %v1177, %v1177
  %v2161 = vmul.f32 %v1464, %v1464
  %v2162 = vmul.f32 %v1180, %v1180
  %v2163 = vmul.f32 %v1467, %v1467
  %v2164 = vmul.f32 %v1183, %v1183
  %v2165 = vmul.f32 %v1470, %v1470
  %v2166 = vmul.f32 %v1186, %v1186
  %v2167 = vmul.f32 %v1473, %v1473
  %v2168 = vmul.f32 %v1189, %v1189
  %v2169 = vmul.f32 %v1476, %v1476
  %v2170 = vmul.f32 %v1192, %v1192
  %v2171 = vmul.f32 %v1479, %v1479
  %v2172 = vmul.f32 %v1195, %v1195
  %v2173 = vmul.f32 %v1482, %v1482
  %v2174 = vmul.f32 %v1198, %v1198
  %v2175 = vmul.f32 %v1485, %v1485
  %v2176 = vmul.f32 %v1201, %v1201
  %v2177 = vmul.f32 %v1488, %v1488
  %v2178 = vmul.f32 %v1204, %v1204
  %v2179 = vmul.f32 %v1491, %v1491
  %v2180 = vmul.f32 %v1207, %v1207
  %v2181 = vmul.f32 %v1494, %v1494
  %v2182 = vmul.f32 %v1210, %v1210
  %v2183 = vmul.f32 %v1497, %v1497
  %v2184 = vmul.f32 %v1213, %v1213
  %v2185 = vmul.f32 %v1500, %v1500
  %v2186 = vmul.f32 %v1216, %v1216
  %v2187 = vmul.f32 %v1503, %v1503
  %v2188 = vmul.f32 %v1219, %v1219
  %v2189 = vmul.f32 %v1506, %v1506
  %v2190 = vmul.f32 %v1222, %v1222
  %v2191 = vmul.f32 %v1509, %v1509
  %v2192 = vmul.f32 %v1225, %v1225
  %v2193 = vmul.f32 %v1512, %v1512
  %v2194 = vmul.f32 %v1228, %v1228
  %v2195 = vmul.f32 %v1515, %v1515
  %v2196 = vmul.f32 %v1231, %v1231
  %v2197 = vmul.f32 %v1518, %v1518
  %v2198 = vmul.f32 %v1234, %v1234
  %v2199 = vmul.f32 %v1521, %v1521
  %v2200 = vmul.f32 %v1237, %v1237
  %v2201 = vmul.f32 %v1524, %v1524
  %v2202 = vmul.f32 %v1240, %v1240
  %v2203 = vmul.f32 %v1527, %v1527
  %v2204 = vmul.f32 %v1243, %v1243
  %v2205 = vmul.f32 %v1530, %v1530
  %v2206 = vmul.f32 %v1246, %v1246
  %v2207 = vmul.f32 %v1533, %v1533
  %v2208 = vmul.f32 %v1249, %v1249
  %v2209 = vmul.f32 %v1536, %v1536
  %v2210 = vmul.f32 %v1252, %v1252
  %v2211 = vmul.f32 %v1539, %v1539
  %v2212 = vmul.f32 %v1255, %v1255
  %v2213 = vmul.f32 %v1542, %v1542
  %v2214 = vmul.f32 %v1258, %v1258
  %v2215 = vmul.f32 %v1545, %v1545
  %v2216 = vmul.f32 %v1261, %v1261
  %v2217 = vmul.f32 %v1548, %v1548
  %v2218 = vmul.f32 %v1264, %v1264
  %v2219 = vmul.f32 %v1551, %v1551
  %v2220 = vmul.f32 %v1267, %v1267
  %v2221 = vmul.f32 %v1554, %v1554
  %v2222 = vmul.f32 %v1270, %v1270
  %v2223 = vmul.f32 %v1557, %v1557
  %v2224 = vmul.f32 %v1273, %v1273
  %v2225 = vmul.f32 %v1560, %v1560
  %v2226 = vmul.f32 %v1276, %v1276
  %v2227 = vmul.f32 %v1563, %v1563
  %v2228 = vmul.f32 %v1279, %v1279
  %v2229 = vmul.f32 %v1566, %v1566
  %v2230 = vmul.f32 %v1282, %v1282
  %v2231 = vmul.f32 %v1569, %v1569
  %v2232 = vmul.f32 %v1285, %v1285
  %v2233 = vmul.f32 %v1572, %v1572
  %v2234 = vmul.f32 %v1288, %v1288
  %v2235 = vmul.f32 %v1575, %v1575
  %v2236 = vmul.f32 %v1291, %v1291
  %v2237 = vmul.f32 %v1578, %v1578
  %v2238 = vmul.f32 %v1294, %v1294
  %v2239 = vmul.f32 %v1581, %v1581
  %v2240 = vmul.f32 %v1297, %v1297
  %v2241 = vmul.f32 %v1584, %v1584
  %v2242 = vmul.f32 %v1300, %v1300
  %v2243 = vmul.f32 %v1587, %v1587
  %v2244 = vmul.f32 %v1303, %v1303
  %v2245 = vmul.f32 %v1590, %v1590
  %v2246 = vmul.f32 %v1306, %v1306
  %v2247 = vmul.f32 %v1593, %v1593
  %v2248 = vmul.f32 %v1309, %v1309
  %v2249 = vmul.f32 %v1596, %v1596
  %v2250 = vmul.f32 %v1312, %v1312
  %v2251 = vmul.f32 %v1599, %v1599
  %v2252 = vmul.f32 %v1315, %v1315
  %v2253 = vmul.f32 %v1602, %v1602
  %v2254 = vmul.f32 %v1318, %v1318
  %v2255 = vmul.f32 %v1605, %v1605
  %v2256 = vmul.f32 %v1321, %v1321
  %v2257 = vmul.f32 %v1608, %v1608
  %v2258 = vmul.f32 %v1324, %v1324
  %v2259 = vmul.f32 %v1611, %v1611
  %v2260 = vmul.f32 %v1327, %v1327
  %v2261 = vmul.f32 %v1614, %v1614
  %v2262 = vmul.f32 %v1330, %v1330
  %v2263 = vmul.f32 %v1617, %v1617
  %v2264 = vmul.f32 %v1333, %v1333
  %v2265 = vmul.f32 %v1620, %v1620
  %v2266 = vmul.f32 %v1336, %v1336
  %v2267 = vmul.f32 %v1623, %v1623
  %v2268 = vmul.f32 %v1339, %v1339
  %v2269 = vmul.f32 %v1626, %v1626
  %v2270 = vmul.f32 %v1342, %v1342
  %v2271 = vmul.f32 %v1629, %v1629
  %v2272 = vmul.f32 %v1345, %v1345
  %v2273 = vmul.f32 %v1632, %v1632
  %v2274 = vmul.f32 %v1348, %v1348
  %v2275 = vmul.f32 %v1635, %v1635
  %v2276 = vmul.f32 %v1351, %v1351
  %v2277 = vmul.f32 %v1638, %v1638
  %v2278 = vmul.f32 %v1354, %v1354
  %v2279 = vmul.f32 %v1641, %v1641
  %v2280 = vmul.f32 %v1357, %v1357
  %v2281 = vmul.f32 %v1644, %v1644
  %v2282 = vmul.f32 %v1360, %v1360
  %v2283 = vmul.f32 %v1647, %v1647
  %v2284 = vmul.f32 %v1363, %v1363
  %v2285 = vmul.f32 %v1650, %v1650
  %v2286 = vmul.f32 %v1366, %v1366
  %v2287 = vmul.f32 %v1653, %v1653
  %v2288 = vmul.f32 %v1369, %v1369
  %v2289 = vmul.f32 %v1656, %v1656
  %v2290 = vmul.f32 %v1372, %v1372
  %v2291 = vmul.f32 %v1659, %v1659
  %v2292 = vmul.f32 %v1375, %v1375
  %v2293 = vmul.f32 %v1662, %v1662
  %v2294 = vsel %vm53, %v2115, 0.0
  %v2295 = vadd.f32 %v2114, %v2294
  %2296 = vadd.xlane.f32.xlu0 %v2295
  %v2297 = vpop.xlane.xlu0 %2296
  %v2298 = vsel %vm53, %v2117, 0.0
  %v2299 = vadd.f32 %v2116, %v2298
  %2300 = vadd.xlane.f32.xlu0 %v2299
  %v2301 = vpop.xlane.xlu0 %2300
  %v2302 = vsel %vm53, %v2119, 0.0
  %v2303 = vadd.f32 %v2118, %v2302
  %2304 = vadd.xlane.f32.xlu0 %v2303
  %v2305 = vpop.xlane.xlu0 %2304
  %v2306 = vsel %vm53, %v2121, 0.0
  %v2307 = vadd.f32 %v2120, %v2306
  %2308 = vadd.xlane.f32.xlu0 %v2307
  %v2309 = vpop.xlane.xlu0 %2308
  %v2310 = vsel %vm53, %v2123, 0.0
  %v2311 = vadd.f32 %v2122, %v2310
  %2312 = vadd.xlane.f32.xlu0 %v2311
  %v2313 = vpop.xlane.xlu0 %2312
  %v2314 = vsel %vm53, %v2125, 0.0
  %v2315 = vadd.f32 %v2124, %v2314
  %2316 = vadd.xlane.f32.xlu0 %v2315
  %v2317 = vpop.xlane.xlu0 %2316
  %v2318 = vsel %vm53, %v2127, 0.0
  %v2319 = vadd.f32 %v2126, %v2318
  %2320 = vadd.xlane.f32.xlu0 %v2319
  %v2321 = vpop.xlane.xlu0 %2320
  %v2322 = vsel %vm53, %v2129, 0.0
  %v2323 = vadd.f32 %v2128, %v2322
  %2324 = vadd.xlane.f32.xlu0 %v2323
  %v2325 = vpop.xlane.xlu0 %2324
  %v2326 = vsel %vm53, %v2131, 0.0
  %v2327 = vadd.f32 %v2130, %v2326
  %2328 = vadd.xlane.f32.xlu0 %v2327
  %v2329 = vpop.xlane.xlu0 %2328
  %v2330 = vsel %vm53, %v2133, 0.0
  %v2331 = vadd.f32 %v2132, %v2330
  %2332 = vadd.xlane.f32.xlu0 %v2331
  %v2333 = vpop.xlane.xlu0 %2332
  %v2334 = vsel %vm53, %v2135, 0.0
  %v2335 = vadd.f32 %v2134, %v2334
  %2336 = vadd.xlane.f32.xlu0 %v2335
  %v2337 = vpop.xlane.xlu0 %2336
  %v2338 = vsel %vm53, %v2137, 0.0
  %v2339 = vadd.f32 %v2136, %v2338
  %2340 = vadd.xlane.f32.xlu0 %v2339
  %v2341 = vpop.xlane.xlu0 %2340
  %v2342 = vsel %vm53, %v2139, 0.0
  %v2343 = vadd.f32 %v2138, %v2342
  %2344 = vadd.xlane.f32.xlu0 %v2343
  %v2345 = vpop.xlane.xlu0 %2344
  %v2346 = vsel %vm53, %v2141, 0.0
  %v2347 = vadd.f32 %v2140, %v2346
  %2348 = vadd.xlane.f32.xlu0 %v2347
  %v2349 = vpop.xlane.xlu0 %2348
  %v2350 = vsel %vm53, %v2143, 0.0
  %v2351 = vadd.f32 %v2142, %v2350
  %2352 = vadd.xlane.f32.xlu0 %v2351
  %v2353 = vpop.xlane.xlu0 %2352
  %v2354 = vsel %vm53, %v2145, 0.0
  %v2355 = vadd.f32 %v2144, %v2354
  %2356 = vadd.xlane.f32.xlu0 %v2355
  %v2357 = vpop.xlane.xlu0 %2356
  %v2358 = vsel %vm53, %v2147, 0.0
  %v2359 = vadd.f32 %v2146, %v2358
  %2360 = vadd.xlane.f32.xlu0 %v2359
  %v2361 = vpop.xlane.xlu0 %2360
  %v2362 = vsel %vm53, %v2149, 0.0
  %v2363 = vadd.f32 %v2148, %v2362
  %2364 = vadd.xlane.f32.xlu0 %v2363
  %v2365 = vpop.xlane.xlu0 %2364
  %v2366 = vsel %vm53, %v2151, 0.0
  %v2367 = vadd.f32 %v2150, %v2366
  %2368 = vadd.xlane.f32.xlu0 %v2367
  %v2369 = vpop.xlane.xlu0 %2368
  %v2370 = vsel %vm53, %v2153, 0.0
  %v2371 = vadd.f32 %v2152, %v2370
  %2372 = vadd.xlane.f32.xlu0 %v2371
  %v2373 = vpop.xlane.xlu0 %2372
  %v2374 = vsel %vm53, %v2155, 0.0
  %v2375 = vadd.f32 %v2154, %v2374
  %2376 = vadd.xlane.f32.xlu0 %v2375
  %v2377 = vpop.xlane.xlu0 %2376
  %v2378 = vsel %vm53, %v2157, 0.0
  %v2379 = vadd.f32 %v2156, %v2378
  %2380 = vadd.xlane.f32.xlu0 %v2379
  %v2381 = vpop.xlane.xlu0 %2380
  %v2382 = vsel %vm53, %v2159, 0.0
  %v2383 = vadd.f32 %v2158, %v2382
  %2384 = vadd.xlane.f32.xlu0 %v2383
  %v2385 = vpop.xlane.xlu0 %2384
  %v2386 = vsel %vm53, %v2161, 0.0
  %v2387 = vadd.f32 %v2160, %v2386
  %2388 = vadd.xlane.f32.xlu0 %v2387
  %v2389 = vpop.xlane.xlu0 %2388
  %v2390 = vsel %vm53, %v2163, 0.0
  %v2391 = vadd.f32 %v2162, %v2390
  %2392 = vadd.xlane.f32.xlu0 %v2391
  %v2393 = vpop.xlane.xlu0 %2392
  %v2394 = vsel %vm53, %v2165, 0.0
  %v2395 = vadd.f32 %v2164, %v2394
  %2396 = vadd.xlane.f32.xlu0 %v2395
  %v2397 = vpop.xlane.xlu0 %2396
  %v2398 = vsel %vm53, %v2167, 0.0
  %v2399 = vadd.f32 %v2166, %v2398
  %2400 = vadd.xlane.f32.xlu0 %v2399
  %v2401 = vpop.xlane.xlu0 %2400
  %v2402 = vsel %vm53, %v2169, 0.0
  %v2403 = vadd.f32 %v2168, %v2402
  %2404 = vadd.xlane.f32.xlu0 %v2403
  %v2405 = vpop.xlane.xlu0 %2404
  %v2406 = vsel %vm53, %v2171, 0.0
  %v2407 = vadd.f32 %v2170, %v2406
  %2408 = vadd.xlane.f32.xlu0 %v2407
  %v2409 = vpop.xlane.xlu0 %2408
  %v2410 = vsel %vm53, %v2173, 0.0
  %v2411 = vadd.f32 %v2172, %v2410
  %2412 = vadd.xlane.f32.xlu0 %v2411
  %v2413 = vpop.xlane.xlu0 %2412
  %v2414 = vsel %vm53, %v2175, 0.0
  %v2415 = vadd.f32 %v2174, %v2414
  %2416 = vadd.xlane.f32.xlu0 %v2415
  %v2417 = vpop.xlane.xlu0 %2416
  %v2418 = vsel %vm53, %v2177, 0.0
  %v2419 = vadd.f32 %v2176, %v2418
  %2420 = vadd.xlane.f32.xlu0 %v2419
  %v2421 = vpop.xlane.xlu0 %2420
  %v2422 = vsel %vm53, %v2179, 0.0
  %v2423 = vadd.f32 %v2178, %v2422
  %2424 = vadd.xlane.f32.xlu0 %v2423
  %v2425 = vpop.xlane.xlu0 %2424
  %v2426 = vsel %vm53, %v2181, 0.0
  %v2427 = vadd.f32 %v2180, %v2426
  %2428 = vadd.xlane.f32.xlu0 %v2427
  %v2429 = vpop.xlane.xlu0 %2428
  %v2430 = vsel %vm53, %v2183, 0.0
  %v2431 = vadd.f32 %v2182, %v2430
  %2432 = vadd.xlane.f32.xlu0 %v2431
  %v2433 = vpop.xlane.xlu0 %2432
  %v2434 = vsel %vm53, %v2185, 0.0
  %v2435 = vadd.f32 %v2184, %v2434
  %2436 = vadd.xlane.f32.xlu0 %v2435
  %v2437 = vpop.xlane.xlu0 %2436
  %v2438 = vsel %vm53, %v2187, 0.0
  %v2439 = vadd.f32 %v2186, %v2438
  %2440 = vadd.xlane.f32.xlu0 %v2439
  %v2441 = vpop.xlane.xlu0 %2440
  %v2442 = vsel %vm53, %v2189, 0.0
  %v2443 = vadd.f32 %v2188, %v2442
  %2444 = vadd.xlane.f32.xlu0 %v2443
  %v2445 = vpop.xlane.xlu0 %2444
  %v2446 = vsel %vm53, %v2191, 0.0
  %v2447 = vadd.f32 %v2190, %v2446
  %2448 = vadd.xlane.f32.xlu0 %v2447
  %v2449 = vpop.xlane.xlu0 %2448
  %v2450 = vsel %vm53, %v2193, 0.0
  %v2451 = vadd.f32 %v2192, %v2450
  %2452 = vadd.xlane.f32.xlu0 %v2451
  %v2453 = vpop.xlane.xlu0 %2452
  %v2454 = vsel %vm53, %v2195, 0.0
  %v2455 = vadd.f32 %v2194, %v2454
  %2456 = vadd.xlane.f32.xlu0 %v2455
  %v2457 = vpop.xlane.xlu0 %2456
  %v2458 = vsel %vm53, %v2197, 0.0
  %v2459 = vadd.f32 %v2196, %v2458
  %2460 = vadd.xlane.f32.xlu0 %v2459
  %v2461 = vpop.xlane.xlu0 %2460
  %v2462 = vsel %vm53, %v2199, 0.0
  %v2463 = vadd.f32 %v2198, %v2462
  %2464 = vadd.xlane.f32.xlu0 %v2463
  %v2465 = vpop.xlane.xlu0 %2464
  %v2466 = vsel %vm53, %v2201, 0.0
  %v2467 = vadd.f32 %v2200, %v2466
  %2468 = vadd.xlane.f32.xlu0 %v2467
  %v2469 = vpop.xlane.xlu0 %2468
  %v2470 = vsel %vm53, %v2203, 0.0
  %v2471 = vadd.f32 %v2202, %v2470
  %2472 = vadd.xlane.f32.xlu0 %v2471
  %v2473 = vpop.xlane.xlu0 %2472
  %v2474 = vsel %vm53, %v2205, 0.0
  %v2475 = vadd.f32 %v2204, %v2474
  %2476 = vadd.xlane.f32.xlu0 %v2475
  %v2477 = vpop.xlane.xlu0 %2476
  %v2478 = vsel %vm53, %v2207, 0.0
  %v2479 = vadd.f32 %v2206, %v2478
  %2480 = vadd.xlane.f32.xlu0 %v2479
  %v2481 = vpop.xlane.xlu0 %2480
  %v2482 = vsel %vm53, %v2209, 0.0
  %v2483 = vadd.f32 %v2208, %v2482
  %2484 = vadd.xlane.f32.xlu0 %v2483
  %v2485 = vpop.xlane.xlu0 %2484
  %v2486 = vsel %vm53, %v2211, 0.0
  %v2487 = vadd.f32 %v2210, %v2486
  %2488 = vadd.xlane.f32.xlu0 %v2487
  %v2489 = vpop.xlane.xlu0 %2488
  %v2490 = vsel %vm53, %v2213, 0.0
  %v2491 = vadd.f32 %v2212, %v2490
  %2492 = vadd.xlane.f32.xlu0 %v2491
  %v2493 = vpop.xlane.xlu0 %2492
  %v2494 = vsel %vm53, %v2215, 0.0
  %v2495 = vadd.f32 %v2214, %v2494
  %2496 = vadd.xlane.f32.xlu0 %v2495
  %v2497 = vpop.xlane.xlu0 %2496
  %v2498 = vsel %vm53, %v2217, 0.0
  %v2499 = vadd.f32 %v2216, %v2498
  %2500 = vadd.xlane.f32.xlu0 %v2499
  %v2501 = vpop.xlane.xlu0 %2500
  %v2502 = vsel %vm53, %v2219, 0.0
  %v2503 = vadd.f32 %v2218, %v2502
  %2504 = vadd.xlane.f32.xlu0 %v2503
  %v2505 = vpop.xlane.xlu0 %2504
  %v2506 = vsel %vm53, %v2221, 0.0
  %v2507 = vadd.f32 %v2220, %v2506
  %2508 = vadd.xlane.f32.xlu0 %v2507
  %v2509 = vpop.xlane.xlu0 %2508
  %v2510 = vsel %vm53, %v2223, 0.0
  %v2511 = vadd.f32 %v2222, %v2510
  %2512 = vadd.xlane.f32.xlu0 %v2511
  %v2513 = vpop.xlane.xlu0 %2512
  %v2514 = vsel %vm53, %v2225, 0.0
  %v2515 = vadd.f32 %v2224, %v2514
  %2516 = vadd.xlane.f32.xlu0 %v2515
  %v2517 = vpop.xlane.xlu0 %2516
  %v2518 = vsel %vm53, %v2227, 0.0
  %v2519 = vadd.f32 %v2226, %v2518
  %2520 = vadd.xlane.f32.xlu0 %v2519
  %v2521 = vpop.xlane.xlu0 %2520
  %v2522 = vsel %vm53, %v2229, 0.0
  %v2523 = vadd.f32 %v2228, %v2522
  %2524 = vadd.xlane.f32.xlu0 %v2523
  %v2525 = vpop.xlane.xlu0 %2524
  %v2526 = vsel %vm53, %v2231, 0.0
  %v2527 = vadd.f32 %v2230, %v2526
  %2528 = vadd.xlane.f32.xlu0 %v2527
  %v2529 = vpop.xlane.xlu0 %2528
  %v2530 = vsel %vm53, %v2233, 0.0
  %v2531 = vadd.f32 %v2232, %v2530
  %2532 = vadd.xlane.f32.xlu0 %v2531
  %v2533 = vpop.xlane.xlu0 %2532
  %v2534 = vsel %vm53, %v2235, 0.0
  %v2535 = vadd.f32 %v2234, %v2534
  %2536 = vadd.xlane.f32.xlu0 %v2535
  %v2537 = vpop.xlane.xlu0 %2536
  %v2538 = vsel %vm53, %v2237, 0.0
  %v2539 = vadd.f32 %v2236, %v2538
  %2540 = vadd.xlane.f32.xlu0 %v2539
  %v2541 = vpop.xlane.xlu0 %2540
  %v2542 = vsel %vm53, %v2239, 0.0
  %v2543 = vadd.f32 %v2238, %v2542
  %2544 = vadd.xlane.f32.xlu0 %v2543
  %v2545 = vpop.xlane.xlu0 %2544
  %v2546 = vsel %vm53, %v2241, 0.0
  %v2547 = vadd.f32 %v2240, %v2546
  %2548 = vadd.xlane.f32.xlu0 %v2547
  %v2549 = vpop.xlane.xlu0 %2548
  %v2550 = vsel %vm53, %v2243, 0.0
  %v2551 = vadd.f32 %v2242, %v2550
  %2552 = vadd.xlane.f32.xlu0 %v2551
  %v2553 = vpop.xlane.xlu0 %2552
  %v2554 = vsel %vm53, %v2245, 0.0
  %v2555 = vadd.f32 %v2244, %v2554
  %2556 = vadd.xlane.f32.xlu0 %v2555
  %v2557 = vpop.xlane.xlu0 %2556
  %v2558 = vsel %vm53, %v2247, 0.0
  %v2559 = vadd.f32 %v2246, %v2558
  %2560 = vadd.xlane.f32.xlu0 %v2559
  %v2561 = vpop.xlane.xlu0 %2560
  %v2562 = vsel %vm53, %v2249, 0.0
  %v2563 = vadd.f32 %v2248, %v2562
  %2564 = vadd.xlane.f32.xlu0 %v2563
  %v2565 = vpop.xlane.xlu0 %2564
  %v2566 = vsel %vm53, %v2251, 0.0
  %v2567 = vadd.f32 %v2250, %v2566
  %2568 = vadd.xlane.f32.xlu0 %v2567
  %v2569 = vpop.xlane.xlu0 %2568
  %v2570 = vsel %vm53, %v2253, 0.0
  %v2571 = vadd.f32 %v2252, %v2570
  %2572 = vadd.xlane.f32.xlu0 %v2571
  %v2573 = vpop.xlane.xlu0 %2572
  %v2574 = vsel %vm53, %v2255, 0.0
  %v2575 = vadd.f32 %v2254, %v2574
  %2576 = vadd.xlane.f32.xlu0 %v2575
  %v2577 = vpop.xlane.xlu0 %2576
  %v2578 = vsel %vm53, %v2257, 0.0
  %v2579 = vadd.f32 %v2256, %v2578
  %2580 = vadd.xlane.f32.xlu0 %v2579
  %v2581 = vpop.xlane.xlu0 %2580
  %v2582 = vsel %vm53, %v2259, 0.0
  %v2583 = vadd.f32 %v2258, %v2582
  %2584 = vadd.xlane.f32.xlu0 %v2583
  %v2585 = vpop.xlane.xlu0 %2584
  %v2586 = vsel %vm53, %v2261, 0.0
  %v2587 = vadd.f32 %v2260, %v2586
  %2588 = vadd.xlane.f32.xlu0 %v2587
  %v2589 = vpop.xlane.xlu0 %2588
  %v2590 = vsel %vm53, %v2263, 0.0
  %v2591 = vadd.f32 %v2262, %v2590
  %2592 = vadd.xlane.f32.xlu0 %v2591
  %v2593 = vpop.xlane.xlu0 %2592
  %v2594 = vsel %vm53, %v2265, 0.0
  %v2595 = vadd.f32 %v2264, %v2594
  %2596 = vadd.xlane.f32.xlu0 %v2595
  %v2597 = vpop.xlane.xlu0 %2596
  %v2598 = vsel %vm53, %v2267, 0.0
  %v2599 = vadd.f32 %v2266, %v2598
  %2600 = vadd.xlane.f32.xlu0 %v2599
  %v2601 = vpop.xlane.xlu0 %2600
  %v2602 = vsel %vm53, %v2269, 0.0
  %v2603 = vadd.f32 %v2268, %v2602
  %2604 = vadd.xlane.f32.xlu0 %v2603
  %v2605 = vpop.xlane.xlu0 %2604
  %v2606 = vsel %vm53, %v2271, 0.0
  %v2607 = vadd.f32 %v2270, %v2606
  %2608 = vadd.xlane.f32.xlu0 %v2607
  %v2609 = vpop.xlane.xlu0 %2608
  %v2610 = vsel %vm53, %v2273, 0.0
  %v2611 = vadd.f32 %v2272, %v2610
  %2612 = vadd.xlane.f32.xlu0 %v2611
  %v2613 = vpop.xlane.xlu0 %2612
  %v2614 = vsel %vm53, %v2275, 0.0
  %v2615 = vadd.f32 %v2274, %v2614
  %2616 = vadd.xlane.f32.xlu0 %v2615
  %v2617 = vpop.xlane.xlu0 %2616
  %v2618 = vsel %vm53, %v2277, 0.0
  %v2619 = vadd.f32 %v2276, %v2618
  %2620 = vadd.xlane.f32.xlu0 %v2619
  %v2621 = vpop.xlane.xlu0 %2620
  %v2622 = vsel %vm53, %v2279, 0.0
  %v2623 = vadd.f32 %v2278, %v2622
  %2624 = vadd.xlane.f32.xlu0 %v2623
  %v2625 = vpop.xlane.xlu0 %2624
  %v2626 = vsel %vm53, %v2281, 0.0
  %v2627 = vadd.f32 %v2280, %v2626
  %2628 = vadd.xlane.f32.xlu0 %v2627
  %v2629 = vpop.xlane.xlu0 %2628
  %v2630 = vsel %vm53, %v2283, 0.0
  %v2631 = vadd.f32 %v2282, %v2630
  %2632 = vadd.xlane.f32.xlu0 %v2631
  %v2633 = vpop.xlane.xlu0 %2632
  %v2634 = vsel %vm53, %v2285, 0.0
  %v2635 = vadd.f32 %v2284, %v2634
  %2636 = vadd.xlane.f32.xlu0 %v2635
  %v2637 = vpop.xlane.xlu0 %2636
  %v2638 = vsel %vm53, %v2287, 0.0
  %v2639 = vadd.f32 %v2286, %v2638
  %2640 = vadd.xlane.f32.xlu0 %v2639
  %v2641 = vpop.xlane.xlu0 %2640
  %v2642 = vsel %vm53, %v2289, 0.0
  %v2643 = vadd.f32 %v2288, %v2642
  %2644 = vadd.xlane.f32.xlu0 %v2643
  %v2645 = vpop.xlane.xlu0 %2644
  %v2646 = vsel %vm53, %v2291, 0.0
  %v2647 = vadd.f32 %v2290, %v2646
  %2648 = vadd.xlane.f32.xlu0 %v2647
  %v2649 = vpop.xlane.xlu0 %2648
  %v2650 = vsel %vm53, %v2293, 0.0
  %v2651 = vadd.f32 %v2292, %v2650
  %2652 = vadd.xlane.f32.xlu0 %v2651
  %v2653 = vpop.xlane.xlu0 %2652
  %v2654 = vmul.f32 %v2297, 0.0051020407
  %v2655 = vmul.f32 %v2301, 0.0051020407
  %v2656 = vmul.f32 %v2305, 0.0051020407
  %v2657 = vmul.f32 %v2309, 0.0051020407
  %v2658 = vmul.f32 %v2313, 0.0051020407
  %v2659 = vmul.f32 %v2317, 0.0051020407
  %v2660 = vmul.f32 %v2321, 0.0051020407
  %v2661 = vmul.f32 %v2325, 0.0051020407
  %v2662 = vmul.f32 %v2329, 0.0051020407
  %v2663 = vmul.f32 %v2333, 0.0051020407
  %v2664 = vmul.f32 %v2337, 0.0051020407
  %v2665 = vmul.f32 %v2341, 0.0051020407
  %v2666 = vmul.f32 %v2345, 0.0051020407
  %v2667 = vmul.f32 %v2349, 0.0051020407
  %v2668 = vmul.f32 %v2353, 0.0051020407
  %v2669 = vmul.f32 %v2357, 0.0051020407
  %v2670 = vmul.f32 %v2361, 0.0051020407
  %v2671 = vmul.f32 %v2365, 0.0051020407
  %v2672 = vmul.f32 %v2369, 0.0051020407
  %v2673 = vmul.f32 %v2373, 0.0051020407
  %v2674 = vmul.f32 %v2377, 0.0051020407
  %v2675 = vmul.f32 %v2381, 0.0051020407
  %v2676 = vmul.f32 %v2385, 0.0051020407
  %v2677 = vmul.f32 %v2389, 0.0051020407
  %v2678 = vmul.f32 %v2393, 0.0051020407
  %v2679 = vmul.f32 %v2397, 0.0051020407
  %v2680 = vmul.f32 %v2401, 0.0051020407
  %v2681 = vmul.f32 %v2405, 0.0051020407
  %v2682 = vmul.f32 %v2409, 0.0051020407
  %v2683 = vmul.f32 %v2413, 0.0051020407
  %v2684 = vmul.f32 %v2417, 0.0051020407
  %v2685 = vmul.f32 %v2421, 0.0051020407
  %v2686 = vmul.f32 %v2425, 0.0051020407
  %v2687 = vmul.f32 %v2429, 0.0051020407
  %v2688 = vmul.f32 %v2433, 0.0051020407
  %v2689 = vmul.f32 %v2437, 0.0051020407
  %v2690 = vmul.f32 %v2441, 0.0051020407
  %v2691 = vmul.f32 %v2445, 0.0051020407
  %v2692 = vmul.f32 %v2449, 0.0051020407
  %v2693 = vmul.f32 %v2453, 0.0051020407
  %v2694 = vmul.f32 %v2457, 0.0051020407
  %v2695 = vmul.f32 %v2461, 0.0051020407
  %v2696 = vmul.f32 %v2465, 0.0051020407
  %v2697 = vmul.f32 %v2469, 0.0051020407
  %v2698 = vmul.f32 %v2473, 0.0051020407
  %v2699 = vmul.f32 %v2477, 0.0051020407
  %v2700 = vmul.f32 %v2481, 0.0051020407
  %v2701 = vmul.f32 %v2485, 0.0051020407
  %v2702 = vmul.f32 %v2489, 0.0051020407
  %v2703 = vmul.f32 %v2493, 0.0051020407
  %v2704 = vmul.f32 %v2497, 0.0051020407
  %v2705 = vmul.f32 %v2501, 0.0051020407
  %v2706 = vmul.f32 %v2505, 0.0051020407
  %v2707 = vmul.f32 %v2509, 0.0051020407
  %v2708 = vmul.f32 %v2513, 0.0051020407
  %v2709 = vmul.f32 %v2517, 0.0051020407
  %v2710 = vmul.f32 %v2521, 0.0051020407
  %v2711 = vmul.f32 %v2525, 0.0051020407
  %v2712 = vmul.f32 %v2529, 0.0051020407
  %v2713 = vmul.f32 %v2533, 0.0051020407
  %v2714 = vmul.f32 %v2537, 0.0051020407
  %v2715 = vmul.f32 %v2541, 0.0051020407
  %v2716 = vmul.f32 %v2545, 0.0051020407
  %v2717 = vmul.f32 %v2549, 0.0051020407
  %v2718 = vmul.f32 %v2553, 0.0051020407
  %v2719 = vmul.f32 %v2557, 0.0051020407
  %v2720 = vmul.f32 %v2561, 0.0051020407
  %v2721 = vmul.f32 %v2565, 0.0051020407
  %v2722 = vmul.f32 %v2569, 0.0051020407
  %v2723 = vmul.f32 %v2573, 0.0051020407
  %v2724 = vmul.f32 %v2577, 0.0051020407
  %v2725 = vmul.f32 %v2581, 0.0051020407
  %v2726 = vmul.f32 %v2585, 0.0051020407
  %v2727 = vmul.f32 %v2589, 0.0051020407
  %v2728 = vmul.f32 %v2593, 0.0051020407
  %v2729 = vmul.f32 %v2597, 0.0051020407
  %v2730 = vmul.f32 %v2601, 0.0051020407
  %v2731 = vmul.f32 %v2605, 0.0051020407
  %v2732 = vmul.f32 %v2609, 0.0051020407
  %v2733 = vmul.f32 %v2613, 0.0051020407
  %v2734 = vmul.f32 %v2617, 0.0051020407
  %v2735 = vmul.f32 %v2621, 0.0051020407
  %v2736 = vmul.f32 %v2625, 0.0051020407
  %v2737 = vmul.f32 %v2629, 0.0051020407
  %v2738 = vmul.f32 %v2633, 0.0051020407
  %v2739 = vmul.f32 %v2637, 0.0051020407
  %v2740 = vmul.f32 %v2641, 0.0051020407
  %v2741 = vmul.f32 %v2645, 0.0051020407
  %v2742 = vmul.f32 %v2649, 0.0051020407
  %v2743 = vmul.f32 %v2653, 0.0051020407
  %v2744 = vmul.f32 %v2024, %v2024
  %v2745 = vmul.f32 %v2025, %v2025
  %v2746 = vmul.f32 %v2026, %v2026
  %v2747 = vmul.f32 %v2027, %v2027
  %v2748 = vmul.f32 %v2028, %v2028
  %v2749 = vmul.f32 %v2029, %v2029
  %v2750 = vmul.f32 %v2030, %v2030
  %v2751 = vmul.f32 %v2031, %v2031
  %v2752 = vmul.f32 %v2032, %v2032
  %v2753 = vmul.f32 %v2033, %v2033
  %v2754 = vmul.f32 %v2034, %v2034
  %v2755 = vmul.f32 %v2035, %v2035
  %v2756 = vmul.f32 %v2036, %v2036
  %v2757 = vmul.f32 %v2037, %v2037
  %v2758 = vmul.f32 %v2038, %v2038
  %v2759 = vmul.f32 %v2039, %v2039
  %v2760 = vmul.f32 %v2040, %v2040
  %v2761 = vmul.f32 %v2041, %v2041
  %v2762 = vmul.f32 %v2042, %v2042
  %v2763 = vmul.f32 %v2043, %v2043
  %v2764 = vmul.f32 %v2044, %v2044
  %v2765 = vmul.f32 %v2045, %v2045
  %v2766 = vmul.f32 %v2046, %v2046
  %v2767 = vmul.f32 %v2047, %v2047
  %v2768 = vmul.f32 %v2048, %v2048
  %v2769 = vmul.f32 %v2049, %v2049
  %v2770 = vmul.f32 %v2050, %v2050
  %v2771 = vmul.f32 %v2051, %v2051
  %v2772 = vmul.f32 %v2052, %v2052
  %v2773 = vmul.f32 %v2053, %v2053
  %v2774 = vmul.f32 %v2054, %v2054
  %v2775 = vmul.f32 %v2055, %v2055
  %v2776 = vmul.f32 %v2056, %v2056
  %v2777 = vmul.f32 %v2057, %v2057
  %v2778 = vmul.f32 %v2058, %v2058
  %v2779 = vmul.f32 %v2059, %v2059
  %v2780 = vmul.f32 %v2060, %v2060
  %v2781 = vmul.f32 %v2061, %v2061
  %v2782 = vmul.f32 %v2062, %v2062
  %v2783 = vmul.f32 %v2063, %v2063
  %v2784 = vmul.f32 %v2064, %v2064
  %v2785 = vmul.f32 %v2065, %v2065
  %v2786 = vmul.f32 %v2066, %v2066
  %v2787 = vmul.f32 %v2067, %v2067
  %v2788 = vmul.f32 %v2068, %v2068
  %v2789 = vmul.f32 %v2069, %v2069
  %v2790 = vmul.f32 %v2070, %v2070
  %v2791 = vmul.f32 %v2071, %v2071
  %v2792 = vmul.f32 %v2072, %v2072
  %v2793 = vmul.f32 %v2073, %v2073
  %v2794 = vmul.f32 %v2074, %v2074
  %v2795 = vmul.f32 %v2075, %v2075
  %v2796 = vmul.f32 %v2076, %v2076
  %v2797 = vmul.f32 %v2077, %v2077
  %v2798 = vmul.f32 %v2078, %v2078
  %v2799 = vmul.f32 %v2079, %v2079
  %v2800 = vmul.f32 %v2080, %v2080
  %v2801 = vmul.f32 %v2081, %v2081
  %v2802 = vmul.f32 %v2082, %v2082
  %v2803 = vmul.f32 %v2083, %v2083
  %v2804 = vmul.f32 %v2084, %v2084
  %v2805 = vmul.f32 %v2085, %v2085
  %v2806 = vmul.f32 %v2086, %v2086
  %v2807 = vmul.f32 %v2087, %v2087
  %v2808 = vmul.f32 %v2088, %v2088
  %v2809 = vmul.f32 %v2089, %v2089
  %v2810 = vmul.f32 %v2090, %v2090
  %v2811 = vmul.f32 %v2091, %v2091
  %v2812 = vmul.f32 %v2092, %v2092
  %v2813 = vmul.f32 %v2093, %v2093
  %v2814 = vmul.f32 %v2094, %v2094
  %v2815 = vmul.f32 %v2095, %v2095
  %v2816 = vmul.f32 %v2096, %v2096
  %v2817 = vmul.f32 %v2097, %v2097
  %v2818 = vmul.f32 %v2098, %v2098
  %v2819 = vmul.f32 %v2099, %v2099
  %v2820 = vmul.f32 %v2100, %v2100
  %v2821 = vmul.f32 %v2101, %v2101
  %v2822 = vmul.f32 %v2102, %v2102
  %v2823 = vmul.f32 %v2103, %v2103
  %v2824 = vmul.f32 %v2104, %v2104
  %v2825 = vmul.f32 %v2105, %v2105
  %v2826 = vmul.f32 %v2106, %v2106
  %v2827 = vmul.f32 %v2107, %v2107
  %v2828 = vmul.f32 %v2108, %v2108
  %v2829 = vmul.f32 %v2109, %v2109
  %v2830 = vmul.f32 %v2110, %v2110
  %v2831 = vmul.f32 %v2111, %v2111
  %v2832 = vmul.f32 %v2112, %v2112
  %v2833 = vmul.f32 %v2113, %v2113
  %v2834 = vsub.f32 %v2654, %v2744
  %v2835 = vsub.f32 %v2655, %v2745
  %v2836 = vsub.f32 %v2656, %v2746
  %v2837 = vsub.f32 %v2657, %v2747
  %v2838 = vsub.f32 %v2658, %v2748
  %v2839 = vsub.f32 %v2659, %v2749
  %v2840 = vsub.f32 %v2660, %v2750
  %v2841 = vsub.f32 %v2661, %v2751
  %v2842 = vsub.f32 %v2662, %v2752
  %v2843 = vsub.f32 %v2663, %v2753
  %v2844 = vsub.f32 %v2664, %v2754
  %v2845 = vsub.f32 %v2665, %v2755
  %v2846 = vsub.f32 %v2666, %v2756
  %v2847 = vsub.f32 %v2667, %v2757
  %v2848 = vsub.f32 %v2668, %v2758
  %v2849 = vsub.f32 %v2669, %v2759
  %v2850 = vsub.f32 %v2670, %v2760
  %v2851 = vsub.f32 %v2671, %v2761
  %v2852 = vsub.f32 %v2672, %v2762
  %v2853 = vsub.f32 %v2673, %v2763
  %v2854 = vsub.f32 %v2674, %v2764
  %v2855 = vsub.f32 %v2675, %v2765
  %v2856 = vsub.f32 %v2676, %v2766
  %v2857 = vsub.f32 %v2677, %v2767
  %v2858 = vsub.f32 %v2678, %v2768
  %v2859 = vsub.f32 %v2679, %v2769
  %v2860 = vsub.f32 %v2680, %v2770
  %v2861 = vsub.f32 %v2681, %v2771
  %v2862 = vsub.f32 %v2682, %v2772
  %v2863 = vsub.f32 %v2683, %v2773
  %v2864 = vsub.f32 %v2684, %v2774
  %v2865 = vsub.f32 %v2685, %v2775
  %v2866 = vsub.f32 %v2686, %v2776
  %v2867 = vsub.f32 %v2687, %v2777
  %v2868 = vsub.f32 %v2688, %v2778
  %v2869 = vsub.f32 %v2689, %v2779
  %v2870 = vsub.f32 %v2690, %v2780
  %v2871 = vsub.f32 %v2691, %v2781
  %v2872 = vsub.f32 %v2692, %v2782
  %v2873 = vsub.f32 %v2693, %v2783
  %v2874 = vsub.f32 %v2694, %v2784
  %v2875 = vsub.f32 %v2695, %v2785
  %v2876 = vsub.f32 %v2696, %v2786
  %v2877 = vsub.f32 %v2697, %v2787
  %v2878 = vsub.f32 %v2698, %v2788
  %v2879 = vsub.f32 %v2699, %v2789
  %v2880 = vsub.f32 %v2700, %v2790
  %v2881 = vsub.f32 %v2701, %v2791
  %v2882 = vsub.f32 %v2702, %v2792
  %v2883 = vsub.f32 %v2703, %v2793
  %v2884 = vsub.f32 %v2704, %v2794
  %v2885 = vsub.f32 %v2705, %v2795
  %v2886 = vsub.f32 %v2706, %v2796
  %v2887 = vsub.f32 %v2707, %v2797
  %v2888 = vsub.f32 %v2708, %v2798
  %v2889 = vsub.f32 %v2709, %v2799
  %v2890 = vsub.f32 %v2710, %v2800
  %v2891 = vsub.f32 %v2711, %v2801
  %v2892 = vsub.f32 %v2712, %v2802
  %v2893 = vsub.f32 %v2713, %v2803
  %v2894 = vsub.f32 %v2714, %v2804
  %v2895 = vsub.f32 %v2715, %v2805
  %v2896 = vsub.f32 %v2716, %v2806
  %v2897 = vsub.f32 %v2717, %v2807
  %v2898 = vsub.f32 %v2718, %v2808
  %v2899 = vsub.f32 %v2719, %v2809
  %v2900 = vsub.f32 %v2720, %v2810
  %v2901 = vsub.f32 %v2721, %v2811
  %v2902 = vsub.f32 %v2722, %v2812
  %v2903 = vsub.f32 %v2723, %v2813
  %v2904 = vsub.f32 %v2724, %v2814
  %v2905 = vsub.f32 %v2725, %v2815
  %v2906 = vsub.f32 %v2726, %v2816
  %v2907 = vsub.f32 %v2727, %v2817
  %v2908 = vsub.f32 %v2728, %v2818
  %v2909 = vsub.f32 %v2729, %v2819
  %v2910 = vsub.f32 %v2730, %v2820
  %v2911 = vsub.f32 %v2731, %v2821
  %v2912 = vsub.f32 %v2732, %v2822
  %v2913 = vsub.f32 %v2733, %v2823
  %v2914 = vsub.f32 %v2734, %v2824
  %v2915 = vsub.f32 %v2735, %v2825
  %v2916 = vsub.f32 %v2736, %v2826
  %v2917 = vsub.f32 %v2737, %v2827
  %v2918 = vsub.f32 %v2738, %v2828
  %v2919 = vsub.f32 %v2739, %v2829
  %v2920 = vsub.f32 %v2740, %v2830
  %v2921 = vsub.f32 %v2741, %v2831
  %v2922 = vsub.f32 %v2742, %v2832
  %v2923 = vsub.f32 %v2743, %v2833
  %v2924 = vmax.f32 %v2834, 0.0
  %v2925 = vmax.f32 %v2835, 0.0
  %v2926 = vmax.f32 %v2836, 0.0
  %v2927 = vmax.f32 %v2837, 0.0
  %v2928 = vmax.f32 %v2838, 0.0
  %v2929 = vmax.f32 %v2839, 0.0
  %v2930 = vmax.f32 %v2840, 0.0
  %v2931 = vmax.f32 %v2841, 0.0
  %v2932 = vmax.f32 %v2842, 0.0
  %v2933 = vmax.f32 %v2843, 0.0
  %v2934 = vmax.f32 %v2844, 0.0
  %v2935 = vmax.f32 %v2845, 0.0
  %v2936 = vmax.f32 %v2846, 0.0
  %v2937 = vmax.f32 %v2847, 0.0
  %v2938 = vmax.f32 %v2848, 0.0
  %v2939 = vmax.f32 %v2849, 0.0
  %v2940 = vmax.f32 %v2850, 0.0
  %v2941 = vmax.f32 %v2851, 0.0
  %v2942 = vmax.f32 %v2852, 0.0
  %v2943 = vmax.f32 %v2853, 0.0
  %v2944 = vmax.f32 %v2854, 0.0
  %v2945 = vmax.f32 %v2855, 0.0
  %v2946 = vmax.f32 %v2856, 0.0
  %v2947 = vmax.f32 %v2857, 0.0
  %v2948 = vmax.f32 %v2858, 0.0
  %v2949 = vmax.f32 %v2859, 0.0
  %v2950 = vmax.f32 %v2860, 0.0
  %v2951 = vmax.f32 %v2861, 0.0
  %v2952 = vmax.f32 %v2862, 0.0
  %v2953 = vmax.f32 %v2863, 0.0
  %v2954 = vmax.f32 %v2864, 0.0
  %v2955 = vmax.f32 %v2865, 0.0
  %v2956 = vmax.f32 %v2866, 0.0
  %v2957 = vmax.f32 %v2867, 0.0
  %v2958 = vmax.f32 %v2868, 0.0
  %v2959 = vmax.f32 %v2869, 0.0
  %v2960 = vmax.f32 %v2870, 0.0
  %v2961 = vmax.f32 %v2871, 0.0
  %v2962 = vmax.f32 %v2872, 0.0
  %v2963 = vmax.f32 %v2873, 0.0
  %v2964 = vmax.f32 %v2874, 0.0
  %v2965 = vmax.f32 %v2875, 0.0
  %v2966 = vmax.f32 %v2876, 0.0
  %v2967 = vmax.f32 %v2877, 0.0
  %v2968 = vmax.f32 %v2878, 0.0
  %v2969 = vmax.f32 %v2879, 0.0
  %v2970 = vmax.f32 %v2880, 0.0
  %v2971 = vmax.f32 %v2881, 0.0
  %v2972 = vmax.f32 %v2882, 0.0
  %v2973 = vmax.f32 %v2883, 0.0
  %v2974 = vmax.f32 %v2884, 0.0
  %v2975 = vmax.f32 %v2885, 0.0
  %v2976 = vmax.f32 %v2886, 0.0
  %v2977 = vmax.f32 %v2887, 0.0
  %v2978 = vmax.f32 %v2888, 0.0
  %v2979 = vmax.f32 %v2889, 0.0
  %v2980 = vmax.f32 %v2890, 0.0
  %v2981 = vmax.f32 %v2891, 0.0
  %v2982 = vmax.f32 %v2892, 0.0
  %v2983 = vmax.f32 %v2893, 0.0
  %v2984 = vmax.f32 %v2894, 0.0
  %v2985 = vmax.f32 %v2895, 0.0
  %v2986 = vmax.f32 %v2896, 0.0
  %v2987 = vmax.f32 %v2897, 0.0
  %v2988 = vmax.f32 %v2898, 0.0
  %v2989 = vmax.f32 %v2899, 0.0
  %v2990 = vmax.f32 %v2900, 0.0
  %v2991 = vmax.f32 %v2901, 0.0
  %v2992 = vmax.f32 %v2902, 0.0
  %v2993 = vmax.f32 %v2903, 0.0
  %v2994 = vmax.f32 %v2904, 0.0
  %v2995 = vmax.f32 %v2905, 0.0
  %v2996 = vmax.f32 %v2906, 0.0
  %v2997 = vmax.f32 %v2907, 0.0
  %v2998 = vmax.f32 %v2908, 0.0
  %v2999 = vmax.f32 %v2909, 0.0
  %v3000 = vmax.f32 %v2910, 0.0
  %v3001 = vmax.f32 %v2911, 0.0
  %v3002 = vmax.f32 %v2912, 0.0
  %v3003 = vmax.f32 %v2913, 0.0
  %v3004 = vmax.f32 %v2914, 0.0
  %v3005 = vmax.f32 %v2915, 0.0
  %v3006 = vmax.f32 %v2916, 0.0
  %v3007 = vmax.f32 %v2917, 0.0
  %v3008 = vmax.f32 %v2918, 0.0
  %v3009 = vmax.f32 %v2919, 0.0
  %v3010 = vmax.f32 %v2920, 0.0
  %v3011 = vmax.f32 %v2921, 0.0
  %v3012 = vmax.f32 %v2922, 0.0
  %v3013 = vmax.f32 %v2923, 0.0
  %v3014 = vld [vmem:[%s4] sm:$0xff]
  %v3015 = vld [vmem:[%s4 + $0x8] sm:$0xff]
  %v3016 = vld [vmem:[%s4 + $0x10] sm:$0xff]
  %v3017 = vld [vmem:[%s4 + $0x18] sm:$0xff]
  %v3018 = vld [vmem:[%s4 + $0x20] sm:$0xff]
  %v3019 = vld [vmem:[%s4 + $0x28] sm:$0xff]
  %v3020 = vld [vmem:[%s4 + $0x30] sm:$0xff]
  %v3021 = vld [vmem:[%s4 + $0x38] sm:$0xff]
  %v3022 = vld [vmem:[%s4 + $0x40] sm:$0xff]
  %v3023 = vld [vmem:[%s4 + $0x48] sm:$0xff]
  %v3024 = vld [vmem:[%s4 + $0x50] sm:$0xff]
  %v3025 = vld [vmem:[%s4 + $0x58] sm:$0xff]
  %v3026 = vld [vmem:[%s4 + $0x60] sm:$0xff]
  %v3027 = vld [vmem:[%s4 + $0x68] sm:$0xff]
  %v3028 = vld [vmem:[%s4 + $0x70] sm:$0xff]
  %v3029 = vld [vmem:[%s4 + $0x78] sm:$0xff]
  %v3030 = vld [vmem:[%s4 + $0x80] sm:$0xff]
  %v3031 = vld [vmem:[%s4 + $0x88] sm:$0xff]
  %v3032 = vld [vmem:[%s4 + $0x90] sm:$0xff]
  %v3033 = vld [vmem:[%s4 + $0x98] sm:$0xff]
  %v3034 = vld [vmem:[%s4 + $0xa0] sm:$0xff]
  %v3035 = vld [vmem:[%s4 + $0xa8] sm:$0xff]
  %v3036 = vld [vmem:[%s4 + $0xb0] sm:$0xff]
  %v3037 = vld [vmem:[%s4 + $0xb8] sm:$0xff]
  %v3038 = vld [vmem:[%s4 + $0xc0] sm:$0xff]
  %v3039 = vld [vmem:[%s4 + $0xc8] sm:$0xff]
  %v3040 = vld [vmem:[%s4 + $0xd0] sm:$0xff]
  %v3041 = vld [vmem:[%s4 + $0xd8] sm:$0xff]
  %v3042 = vld [vmem:[%s4 + $0xe0] sm:$0xff]
  %v3043 = vld [vmem:[%s4 + $0xe8] sm:$0xff]
  %v3044 = vld [vmem:[%s4 + $0xf0] sm:$0xff]
  %v3045 = vld [vmem:[%s4 + $0xf8] sm:$0xff]
  %v3046 = vld [vmem:[%s4 + $0x100] sm:$0xff]
  %v3047 = vld [vmem:[%s4 + $0x108] sm:$0xff]
  %v3048 = vld [vmem:[%s4 + $0x110] sm:$0xff]
  %v3049 = vld [vmem:[%s4 + $0x118] sm:$0xff]
  %v3050 = vld [vmem:[%s4 + $0x120] sm:$0xff]
  %v3051 = vld [vmem:[%s4 + $0x128] sm:$0xff]
  %v3052 = vld [vmem:[%s4 + $0x130] sm:$0xff]
  %v3053 = vld [vmem:[%s4 + $0x138] sm:$0xff]
  %v3054 = vld [vmem:[%s4 + $0x140] sm:$0xff]
  %v3055 = vld [vmem:[%s4 + $0x148] sm:$0xff]
  %v3056 = vld [vmem:[%s4 + $0x150] sm:$0xff]
  %v3057 = vld [vmem:[%s4 + $0x158] sm:$0xff]
  %v3058 = vld [vmem:[%s4 + $0x160] sm:$0xff]
  %v3059 = vld [vmem:[%s4 + $0x168] sm:$0xff]
  %v3060 = vld [vmem:[%s4 + $0x170] sm:$0xff]
  %v3061 = vld [vmem:[%s4 + $0x178] sm:$0xff]
  %v3062 = vld [vmem:[%s4 + $0x180] sm:$0xff]
  %v3063 = vld [vmem:[%s4 + $0x188] sm:$0xff]
  %v3064 = vld [vmem:[%s4 + $0x190] sm:$0xff]
  %v3065 = vld [vmem:[%s4 + $0x198] sm:$0xff]
  %v3066 = vld [vmem:[%s4 + $0x1a0] sm:$0xff]
  %v3067 = vld [vmem:[%s4 + $0x1a8] sm:$0xff]
  %v3068 = vld [vmem:[%s4 + $0x1b0] sm:$0xff]
  %v3069 = vld [vmem:[%s4 + $0x1b8] sm:$0xff]
  %v3070 = vld [vmem:[%s4 + $0x1c0] sm:$0xff]
  %v3071 = vld [vmem:[%s4 + $0x1c8] sm:$0xff]
  %v3072 = vld [vmem:[%s4 + $0x1d0] sm:$0xff]
  %v3073 = vld [vmem:[%s4 + $0x1d8] sm:$0xff]
  %v3074 = vld [vmem:[%s4 + $0x1e0] sm:$0xff]
  %v3075 = vld [vmem:[%s4 + $0x1e8] sm:$0xff]
  %v3076 = vld [vmem:[%s4 + $0x1f0] sm:$0xff]
  %v3077 = vld [vmem:[%s4 + $0x1f8] sm:$0xff]
  %v3078 = vld [vmem:[%s4 + $0x200] sm:$0xff]
  %v3079 = vld [vmem:[%s4 + $0x208] sm:$0xff]
  %v3080 = vld [vmem:[%s4 + $0x210] sm:$0xff]
  %v3081 = vld [vmem:[%s4 + $0x218] sm:$0xff]
  %v3082 = vld [vmem:[%s4 + $0x220] sm:$0xff]
  %v3083 = vld [vmem:[%s4 + $0x228] sm:$0xff]
  %v3084 = vld [vmem:[%s4 + $0x230] sm:$0xff]
  %v3085 = vld [vmem:[%s4 + $0x238] sm:$0xff]
  %v3086 = vld [vmem:[%s4 + $0x240] sm:$0xff]
  %v3087 = vld [vmem:[%s4 + $0x248] sm:$0xff]
  %v3088 = vld [vmem:[%s4 + $0x250] sm:$0xff]
  %v3089 = vld [vmem:[%s4 + $0x258] sm:$0xff]
  %v3090 = vld [vmem:[%s4 + $0x260] sm:$0xff]
  %v3091 = vld [vmem:[%s4 + $0x268] sm:$0xff]
  %v3092 = vld [vmem:[%s4 + $0x270] sm:$0xff]
  %v3093 = vld [vmem:[%s4 + $0x278] sm:$0xff]
  %v3094 = vld [vmem:[%s4 + $0x280] sm:$0xff]
  %v3095 = vld [vmem:[%s4 + $0x288] sm:$0xff]
  %v3096 = vld [vmem:[%s4 + $0x290] sm:$0xff]
  %v3097 = vld [vmem:[%s4 + $0x298] sm:$0xff]
  %v3098 = vld [vmem:[%s4 + $0x2a0] sm:$0xff]
  %v3099 = vld [vmem:[%s4 + $0x2a8] sm:$0xff]
  %v3100 = vld [vmem:[%s4 + $0x2b0] sm:$0xff]
  %v3101 = vld [vmem:[%s4 + $0x2b8] sm:$0xff]
  %v3102 = vld [vmem:[%s4 + $0x2c0] sm:$0xff]
  %v3103 = vld [vmem:[%s4 + $0x2c8] sm:$0xff]
  %v3104 = vadd.f32 %v2924, 1e-05
  %v3105 = vadd.f32 %v2925, 1e-05
  %v3106 = vadd.f32 %v2926, 1e-05
  %v3107 = vadd.f32 %v2927, 1e-05
  %v3108 = vadd.f32 %v2928, 1e-05
  %v3109 = vadd.f32 %v2929, 1e-05
  %v3110 = vadd.f32 %v2930, 1e-05
  %v3111 = vadd.f32 %v2931, 1e-05
  %v3112 = vadd.f32 %v2932, 1e-05
  %v3113 = vadd.f32 %v2933, 1e-05
  %v3114 = vadd.f32 %v2934, 1e-05
  %v3115 = vadd.f32 %v2935, 1e-05
  %v3116 = vadd.f32 %v2936, 1e-05
  %v3117 = vadd.f32 %v2937, 1e-05
  %v3118 = vadd.f32 %v2938, 1e-05
  %v3119 = vadd.f32 %v2939, 1e-05
  %v3120 = vadd.f32 %v2940, 1e-05
  %v3121 = vadd.f32 %v2941, 1e-05
  %v3122 = vadd.f32 %v2942, 1e-05
  %v3123 = vadd.f32 %v2943, 1e-05
  %v3124 = vadd.f32 %v2944, 1e-05
  %v3125 = vadd.f32 %v2945, 1e-05
  %v3126 = vadd.f32 %v2946, 1e-05
  %v3127 = vadd.f32 %v2947, 1e-05
  %v3128 = vadd.f32 %v2948, 1e-05
  %v3129 = vadd.f32 %v2949, 1e-05
  %v3130 = vadd.f32 %v2950, 1e-05
  %v3131 = vadd.f32 %v2951, 1e-05
  %v3132 = vadd.f32 %v2952, 1e-05
  %v3133 = vadd.f32 %v2953, 1e-05
  %v3134 = vadd.f32 %v2954, 1e-05
  %v3135 = vadd.f32 %v2955, 1e-05
  %v3136 = vadd.f32 %v2956, 1e-05
  %v3137 = vadd.f32 %v2957, 1e-05
  %v3138 = vadd.f32 %v2958, 1e-05
  %v3139 = vadd.f32 %v2959, 1e-05
  %v3140 = vadd.f32 %v2960, 1e-05
  %v3141 = vadd.f32 %v2961, 1e-05
  %v3142 = vadd.f32 %v2962, 1e-05
  %v3143 = vadd.f32 %v2963, 1e-05
  %v3144 = vadd.f32 %v2964, 1e-05
  %v3145 = vadd.f32 %v2965, 1e-05
  %v3146 = vadd.f32 %v2966, 1e-05
  %v3147 = vadd.f32 %v2967, 1e-05
  %v3148 = vadd.f32 %v2968, 1e-05
  %v3149 = vadd.f32 %v2969, 1e-05
  %v3150 = vadd.f32 %v2970, 1e-05
  %v3151 = vadd.f32 %v2971, 1e-05
  %v3152 = vadd.f32 %v2972, 1e-05
  %v3153 = vadd.f32 %v2973, 1e-05
  %v3154 = vadd.f32 %v2974, 1e-05
  %v3155 = vadd.f32 %v2975, 1e-05
  %v3156 = vadd.f32 %v2976, 1e-05
  %v3157 = vadd.f32 %v2977, 1e-05
  %v3158 = vadd.f32 %v2978, 1e-05
  %v3159 = vadd.f32 %v2979, 1e-05
  %v3160 = vadd.f32 %v2980, 1e-05
  %v3161 = vadd.f32 %v2981, 1e-05
  %v3162 = vadd.f32 %v2982, 1e-05
  %v3163 = vadd.f32 %v2983, 1e-05
  %v3164 = vadd.f32 %v2984, 1e-05
  %v3165 = vadd.f32 %v2985, 1e-05
  %v3166 = vadd.f32 %v2986, 1e-05
  %v3167 = vadd.f32 %v2987, 1e-05
  %v3168 = vadd.f32 %v2988, 1e-05
  %v3169 = vadd.f32 %v2989, 1e-05
  %v3170 = vadd.f32 %v2990, 1e-05
  %v3171 = vadd.f32 %v2991, 1e-05
  %v3172 = vadd.f32 %v2992, 1e-05
  %v3173 = vadd.f32 %v2993, 1e-05
  %v3174 = vadd.f32 %v2994, 1e-05
  %v3175 = vadd.f32 %v2995, 1e-05
  %v3176 = vadd.f32 %v2996, 1e-05
  %v3177 = vadd.f32 %v2997, 1e-05
  %v3178 = vadd.f32 %v2998, 1e-05
  %v3179 = vadd.f32 %v2999, 1e-05
  %v3180 = vadd.f32 %v3000, 1e-05
  %v3181 = vadd.f32 %v3001, 1e-05
  %v3182 = vadd.f32 %v3002, 1e-05
  %v3183 = vadd.f32 %v3003, 1e-05
  %v3184 = vadd.f32 %v3004, 1e-05
  %v3185 = vadd.f32 %v3005, 1e-05
  %v3186 = vadd.f32 %v3006, 1e-05
  %v3187 = vadd.f32 %v3007, 1e-05
  %v3188 = vadd.f32 %v3008, 1e-05
  %v3189 = vadd.f32 %v3009, 1e-05
  %v3190 = vadd.f32 %v3010, 1e-05
  %v3191 = vadd.f32 %v3011, 1e-05
  %v3192 = vadd.f32 %v3012, 1e-05
  %v3193 = vadd.f32 %v3013, 1e-05
  %v3194 = vrsqrt.pop %v3104
  %v3195 = vmul.f32 %v3194, %v3104
  %v3196 = vmul.f32 %v3195, %v3194
  %v3197 = vmul.f32 0.5, %v3196
  %v3198 = vsub.f32 1.5, %v3197
  %v3199 = vmul.f32 %v3194, %v3198
  %vm3200 = vweird.f32 %v3104
  %vm3201 = vweird.f32 %v3194
  %vm3202 = vmor %vm3200, %vm3201
  %v3203 = vsel %vm3202, %v3194, %v3199
  %v3204 = vrsqrt.pop %v3105
  %v3205 = vmul.f32 %v3204, %v3105
  %v3206 = vmul.f32 %v3205, %v3204
  %v3207 = vmul.f32 0.5, %v3206
  %v3208 = vsub.f32 1.5, %v3207
  %v3209 = vmul.f32 %v3204, %v3208
  %vm3210 = vweird.f32 %v3105
  %vm3211 = vweird.f32 %v3204
  %vm3212 = vmor %vm3210, %vm3211
  %v3213 = vsel %vm3212, %v3204, %v3209
  %v3214 = vrsqrt.pop %v3106
  %v3215 = vmul.f32 %v3214, %v3106
  %v3216 = vmul.f32 %v3215, %v3214
  %v3217 = vmul.f32 0.5, %v3216
  %v3218 = vsub.f32 1.5, %v3217
  %v3219 = vmul.f32 %v3214, %v3218
  %vm3220 = vweird.f32 %v3106
  %vm3221 = vweird.f32 %v3214
  %vm3222 = vmor %vm3220, %vm3221
  %v3223 = vsel %vm3222, %v3214, %v3219
  %v3224 = vrsqrt.pop %v3107
  %v3225 = vmul.f32 %v3224, %v3107
  %v3226 = vmul.f32 %v3225, %v3224
  %v3227 = vmul.f32 0.5, %v3226
  %v3228 = vsub.f32 1.5, %v3227
  %v3229 = vmul.f32 %v3224, %v3228
  %vm3230 = vweird.f32 %v3107
  %vm3231 = vweird.f32 %v3224
  %vm3232 = vmor %vm3230, %vm3231
  %v3233 = vsel %vm3232, %v3224, %v3229
  %v3234 = vrsqrt.pop %v3108
  %v3235 = vmul.f32 %v3234, %v3108
  %v3236 = vmul.f32 %v3235, %v3234
  %v3237 = vmul.f32 0.5, %v3236
  %v3238 = vsub.f32 1.5, %v3237
  %v3239 = vmul.f32 %v3234, %v3238
  %vm3240 = vweird.f32 %v3108
  %vm3241 = vweird.f32 %v3234
  %vm3242 = vmor %vm3240, %vm3241
  %v3243 = vsel %vm3242, %v3234, %v3239
  %v3244 = vrsqrt.pop %v3109
  %v3245 = vmul.f32 %v3244, %v3109
  %v3246 = vmul.f32 %v3245, %v3244
  %v3247 = vmul.f32 0.5, %v3246
  %v3248 = vsub.f32 1.5, %v3247
  %v3249 = vmul.f32 %v3244, %v3248
  %vm3250 = vweird.f32 %v3109
  %vm3251 = vweird.f32 %v3244
  %vm3252 = vmor %vm3250, %vm3251
  %v3253 = vsel %vm3252, %v3244, %v3249
  %v3254 = vrsqrt.pop %v3110
  %v3255 = vmul.f32 %v3254, %v3110
  %v3256 = vmul.f32 %v3255, %v3254
  %v3257 = vmul.f32 0.5, %v3256
  %v3258 = vsub.f32 1.5, %v3257
  %v3259 = vmul.f32 %v3254, %v3258
  %vm3260 = vweird.f32 %v3110
  %vm3261 = vweird.f32 %v3254
  %vm3262 = vmor %vm3260, %vm3261
  %v3263 = vsel %vm3262, %v3254, %v3259
  %v3264 = vrsqrt.pop %v3111
  %v3265 = vmul.f32 %v3264, %v3111
  %v3266 = vmul.f32 %v3265, %v3264
  %v3267 = vmul.f32 0.5, %v3266
  %v3268 = vsub.f32 1.5, %v3267
  %v3269 = vmul.f32 %v3264, %v3268
  %vm3270 = vweird.f32 %v3111
  %vm3271 = vweird.f32 %v3264
  %vm3272 = vmor %vm3270, %vm3271
  %v3273 = vsel %vm3272, %v3264, %v3269
  %v3274 = vrsqrt.pop %v3112
  %v3275 = vmul.f32 %v3274, %v3112
  %v3276 = vmul.f32 %v3275, %v3274
  %v3277 = vmul.f32 0.5, %v3276
  %v3278 = vsub.f32 1.5, %v3277
  %v3279 = vmul.f32 %v3274, %v3278
  %vm3280 = vweird.f32 %v3112
  %vm3281 = vweird.f32 %v3274
  %vm3282 = vmor %vm3280, %vm3281
  %v3283 = vsel %vm3282, %v3274, %v3279
  %v3284 = vrsqrt.pop %v3113
  %v3285 = vmul.f32 %v3284, %v3113
  %v3286 = vmul.f32 %v3285, %v3284
  %v3287 = vmul.f32 0.5, %v3286
  %v3288 = vsub.f32 1.5, %v3287
  %v3289 = vmul.f32 %v3284, %v3288
  %vm3290 = vweird.f32 %v3113
  %vm3291 = vweird.f32 %v3284
  %vm3292 = vmor %vm3290, %vm3291
  %v3293 = vsel %vm3292, %v3284, %v3289
  %v3294 = vrsqrt.pop %v3114
  %v3295 = vmul.f32 %v3294, %v3114
  %v3296 = vmul.f32 %v3295, %v3294
  %v3297 = vmul.f32 0.5, %v3296
  %v3298 = vsub.f32 1.5, %v3297
  %v3299 = vmul.f32 %v3294, %v3298
  %vm3300 = vweird.f32 %v3114
  %vm3301 = vweird.f32 %v3294
  %vm3302 = vmor %vm3300, %vm3301
  %v3303 = vsel %vm3302, %v3294, %v3299
  %v3304 = vrsqrt.pop %v3115
  %v3305 = vmul.f32 %v3304, %v3115
  %v3306 = vmul.f32 %v3305, %v3304
  %v3307 = vmul.f32 0.5, %v3306
  %v3308 = vsub.f32 1.5, %v3307
  %v3309 = vmul.f32 %v3304, %v3308
  %vm3310 = vweird.f32 %v3115
  %vm3311 = vweird.f32 %v3304
  %vm3312 = vmor %vm3310, %vm3311
  %v3313 = vsel %vm3312, %v3304, %v3309
  %v3314 = vrsqrt.pop %v3116
  %v3315 = vmul.f32 %v3314, %v3116
  %v3316 = vmul.f32 %v3315, %v3314
  %v3317 = vmul.f32 0.5, %v3316
  %v3318 = vsub.f32 1.5, %v3317
  %v3319 = vmul.f32 %v3314, %v3318
  %vm3320 = vweird.f32 %v3116
  %vm3321 = vweird.f32 %v3314
  %vm3322 = vmor %vm3320, %vm3321
  %v3323 = vsel %vm3322, %v3314, %v3319
  %v3324 = vrsqrt.pop %v3117
  %v3325 = vmul.f32 %v3324, %v3117
  %v3326 = vmul.f32 %v3325, %v3324
  %v3327 = vmul.f32 0.5, %v3326
  %v3328 = vsub.f32 1.5, %v3327
  %v3329 = vmul.f32 %v3324, %v3328
  %vm3330 = vweird.f32 %v3117
  %vm3331 = vweird.f32 %v3324
  %vm3332 = vmor %vm3330, %vm3331
  %v3333 = vsel %vm3332, %v3324, %v3329
  %v3334 = vrsqrt.pop %v3118
  %v3335 = vmul.f32 %v3334, %v3118
  %v3336 = vmul.f32 %v3335, %v3334
  %v3337 = vmul.f32 0.5, %v3336
  %v3338 = vsub.f32 1.5, %v3337
  %v3339 = vmul.f32 %v3334, %v3338
  %vm3340 = vweird.f32 %v3118
  %vm3341 = vweird.f32 %v3334
  %vm3342 = vmor %vm3340, %vm3341
  %v3343 = vsel %vm3342, %v3334, %v3339
  %v3344 = vrsqrt.pop %v3119
  %v3345 = vmul.f32 %v3344, %v3119
  %v3346 = vmul.f32 %v3345, %v3344
  %v3347 = vmul.f32 0.5, %v3346
  %v3348 = vsub.f32 1.5, %v3347
  %v3349 = vmul.f32 %v3344, %v3348
  %vm3350 = vweird.f32 %v3119
  %vm3351 = vweird.f32 %v3344
  %vm3352 = vmor %vm3350, %vm3351
  %v3353 = vsel %vm3352, %v3344, %v3349
  %v3354 = vrsqrt.pop %v3120
  %v3355 = vmul.f32 %v3354, %v3120
  %v3356 = vmul.f32 %v3355, %v3354
  %v3357 = vmul.f32 0.5, %v3356
  %v3358 = vsub.f32 1.5, %v3357
  %v3359 = vmul.f32 %v3354, %v3358
  %vm3360 = vweird.f32 %v3120
  %vm3361 = vweird.f32 %v3354
  %vm3362 = vmor %vm3360, %vm3361
  %v3363 = vsel %vm3362, %v3354, %v3359
  %v3364 = vrsqrt.pop %v3121
  %v3365 = vmul.f32 %v3364, %v3121
  %v3366 = vmul.f32 %v3365, %v3364
  %v3367 = vmul.f32 0.5, %v3366
  %v3368 = vsub.f32 1.5, %v3367
  %v3369 = vmul.f32 %v3364, %v3368
  %vm3370 = vweird.f32 %v3121
  %vm3371 = vweird.f32 %v3364
  %vm3372 = vmor %vm3370, %vm3371
  %v3373 = vsel %vm3372, %v3364, %v3369
  %v3374 = vrsqrt.pop %v3122
  %v3375 = vmul.f32 %v3374, %v3122
  %v3376 = vmul.f32 %v3375, %v3374
  %v3377 = vmul.f32 0.5, %v3376
  %v3378 = vsub.f32 1.5, %v3377
  %v3379 = vmul.f32 %v3374, %v3378
  %vm3380 = vweird.f32 %v3122
  %vm3381 = vweird.f32 %v3374
  %vm3382 = vmor %vm3380, %vm3381
  %v3383 = vsel %vm3382, %v3374, %v3379
  %v3384 = vrsqrt.pop %v3123
  %v3385 = vmul.f32 %v3384, %v3123
  %v3386 = vmul.f32 %v3385, %v3384
  %v3387 = vmul.f32 0.5, %v3386
  %v3388 = vsub.f32 1.5, %v3387
  %v3389 = vmul.f32 %v3384, %v3388
  %vm3390 = vweird.f32 %v3123
  %vm3391 = vweird.f32 %v3384
  %vm3392 = vmor %vm3390, %vm3391
  %v3393 = vsel %vm3392, %v3384, %v3389
  %v3394 = vrsqrt.pop %v3124
  %v3395 = vmul.f32 %v3394, %v3124
  %v3396 = vmul.f32 %v3395, %v3394
  %v3397 = vmul.f32 0.5, %v3396
  %v3398 = vsub.f32 1.5, %v3397
  %v3399 = vmul.f32 %v3394, %v3398
  %vm3400 = vweird.f32 %v3124
  %vm3401 = vweird.f32 %v3394
  %vm3402 = vmor %vm3400, %vm3401
  %v3403 = vsel %vm3402, %v3394, %v3399
  %v3404 = vrsqrt.pop %v3125
  %v3405 = vmul.f32 %v3404, %v3125
  %v3406 = vmul.f32 %v3405, %v3404
  %v3407 = vmul.f32 0.5, %v3406
  %v3408 = vsub.f32 1.5, %v3407
  %v3409 = vmul.f32 %v3404, %v3408
  %vm3410 = vweird.f32 %v3125
  %vm3411 = vweird.f32 %v3404
  %vm3412 = vmor %vm3410, %vm3411
  %v3413 = vsel %vm3412, %v3404, %v3409
  %v3414 = vrsqrt.pop %v3126
  %v3415 = vmul.f32 %v3414, %v3126
  %v3416 = vmul.f32 %v3415, %v3414
  %v3417 = vmul.f32 0.5, %v3416
  %v3418 = vsub.f32 1.5, %v3417
  %v3419 = vmul.f32 %v3414, %v3418
  %vm3420 = vweird.f32 %v3126
  %vm3421 = vweird.f32 %v3414
  %vm3422 = vmor %vm3420, %vm3421
  %v3423 = vsel %vm3422, %v3414, %v3419
  %v3424 = vrsqrt.pop %v3127
  %v3425 = vmul.f32 %v3424, %v3127
  %v3426 = vmul.f32 %v3425, %v3424
  %v3427 = vmul.f32 0.5, %v3426
  %v3428 = vsub.f32 1.5, %v3427
  %v3429 = vmul.f32 %v3424, %v3428
  %vm3430 = vweird.f32 %v3127
  %vm3431 = vweird.f32 %v3424
  %vm3432 = vmor %vm3430, %vm3431
  %v3433 = vsel %vm3432, %v3424, %v3429
  %v3434 = vrsqrt.pop %v3128
  %v3435 = vmul.f32 %v3434, %v3128
  %v3436 = vmul.f32 %v3435, %v3434
  %v3437 = vmul.f32 0.5, %v3436
  %v3438 = vsub.f32 1.5, %v3437
  %v3439 = vmul.f32 %v3434, %v3438
  %vm3440 = vweird.f32 %v3128
  %vm3441 = vweird.f32 %v3434
  %vm3442 = vmor %vm3440, %vm3441
  %v3443 = vsel %vm3442, %v3434, %v3439
  %v3444 = vrsqrt.pop %v3129
  %v3445 = vmul.f32 %v3444, %v3129
  %v3446 = vmul.f32 %v3445, %v3444
  %v3447 = vmul.f32 0.5, %v3446
  %v3448 = vsub.f32 1.5, %v3447
  %v3449 = vmul.f32 %v3444, %v3448
  %vm3450 = vweird.f32 %v3129
  %vm3451 = vweird.f32 %v3444
  %vm3452 = vmor %vm3450, %vm3451
  %v3453 = vsel %vm3452, %v3444, %v3449
  %v3454 = vrsqrt.pop %v3130
  %v3455 = vmul.f32 %v3454, %v3130
  %v3456 = vmul.f32 %v3455, %v3454
  %v3457 = vmul.f32 0.5, %v3456
  %v3458 = vsub.f32 1.5, %v3457
  %v3459 = vmul.f32 %v3454, %v3458
  %vm3460 = vweird.f32 %v3130
  %vm3461 = vweird.f32 %v3454
  %vm3462 = vmor %vm3460, %vm3461
  %v3463 = vsel %vm3462, %v3454, %v3459
  %v3464 = vrsqrt.pop %v3131
  %v3465 = vmul.f32 %v3464, %v3131
  %v3466 = vmul.f32 %v3465, %v3464
  %v3467 = vmul.f32 0.5, %v3466
  %v3468 = vsub.f32 1.5, %v3467
  %v3469 = vmul.f32 %v3464, %v3468
  %vm3470 = vweird.f32 %v3131
  %vm3471 = vweird.f32 %v3464
  %vm3472 = vmor %vm3470, %vm3471
  %v3473 = vsel %vm3472, %v3464, %v3469
  %v3474 = vrsqrt.pop %v3132
  %v3475 = vmul.f32 %v3474, %v3132
  %v3476 = vmul.f32 %v3475, %v3474
  %v3477 = vmul.f32 0.5, %v3476
  %v3478 = vsub.f32 1.5, %v3477
  %v3479 = vmul.f32 %v3474, %v3478
  %vm3480 = vweird.f32 %v3132
  %vm3481 = vweird.f32 %v3474
  %vm3482 = vmor %vm3480, %vm3481
  %v3483 = vsel %vm3482, %v3474, %v3479
  %v3484 = vrsqrt.pop %v3133
  %v3485 = vmul.f32 %v3484, %v3133
  %v3486 = vmul.f32 %v3485, %v3484
  %v3487 = vmul.f32 0.5, %v3486
  %v3488 = vsub.f32 1.5, %v3487
  %v3489 = vmul.f32 %v3484, %v3488
  %vm3490 = vweird.f32 %v3133
  %vm3491 = vweird.f32 %v3484
  %vm3492 = vmor %vm3490, %vm3491
  %v3493 = vsel %vm3492, %v3484, %v3489
  %v3494 = vrsqrt.pop %v3134
  %v3495 = vmul.f32 %v3494, %v3134
  %v3496 = vmul.f32 %v3495, %v3494
  %v3497 = vmul.f32 0.5, %v3496
  %v3498 = vsub.f32 1.5, %v3497
  %v3499 = vmul.f32 %v3494, %v3498
  %vm3500 = vweird.f32 %v3134
  %vm3501 = vweird.f32 %v3494
  %vm3502 = vmor %vm3500, %vm3501
  %v3503 = vsel %vm3502, %v3494, %v3499
  %v3504 = vrsqrt.pop %v3135
  %v3505 = vmul.f32 %v3504, %v3135
  %v3506 = vmul.f32 %v3505, %v3504
  %v3507 = vmul.f32 0.5, %v3506
  %v3508 = vsub.f32 1.5, %v3507
  %v3509 = vmul.f32 %v3504, %v3508
  %vm3510 = vweird.f32 %v3135
  %vm3511 = vweird.f32 %v3504
  %vm3512 = vmor %vm3510, %vm3511
  %v3513 = vsel %vm3512, %v3504, %v3509
  %v3514 = vrsqrt.pop %v3136
  %v3515 = vmul.f32 %v3514, %v3136
  %v3516 = vmul.f32 %v3515, %v3514
  %v3517 = vmul.f32 0.5, %v3516
  %v3518 = vsub.f32 1.5, %v3517
  %v3519 = vmul.f32 %v3514, %v3518
  %vm3520 = vweird.f32 %v3136
  %vm3521 = vweird.f32 %v3514
  %vm3522 = vmor %vm3520, %vm3521
  %v3523 = vsel %vm3522, %v3514, %v3519
  %v3524 = vrsqrt.pop %v3137
  %v3525 = vmul.f32 %v3524, %v3137
  %v3526 = vmul.f32 %v3525, %v3524
  %v3527 = vmul.f32 0.5, %v3526
  %v3528 = vsub.f32 1.5, %v3527
  %v3529 = vmul.f32 %v3524, %v3528
  %vm3530 = vweird.f32 %v3137
  %vm3531 = vweird.f32 %v3524
  %vm3532 = vmor %vm3530, %vm3531
  %v3533 = vsel %vm3532, %v3524, %v3529
  %v3534 = vrsqrt.pop %v3138
  %v3535 = vmul.f32 %v3534, %v3138
  %v3536 = vmul.f32 %v3535, %v3534
  %v3537 = vmul.f32 0.5, %v3536
  %v3538 = vsub.f32 1.5, %v3537
  %v3539 = vmul.f32 %v3534, %v3538
  %vm3540 = vweird.f32 %v3138
  %vm3541 = vweird.f32 %v3534
  %vm3542 = vmor %vm3540, %vm3541
  %v3543 = vsel %vm3542, %v3534, %v3539
  %v3544 = vrsqrt.pop %v3139
  %v3545 = vmul.f32 %v3544, %v3139
  %v3546 = vmul.f32 %v3545, %v3544
  %v3547 = vmul.f32 0.5, %v3546
  %v3548 = vsub.f32 1.5, %v3547
  %v3549 = vmul.f32 %v3544, %v3548
  %vm3550 = vweird.f32 %v3139
  %vm3551 = vweird.f32 %v3544
  %vm3552 = vmor %vm3550, %vm3551
  %v3553 = vsel %vm3552, %v3544, %v3549
  %v3554 = vrsqrt.pop %v3140
  %v3555 = vmul.f32 %v3554, %v3140
  %v3556 = vmul.f32 %v3555, %v3554
  %v3557 = vmul.f32 0.5, %v3556
  %v3558 = vsub.f32 1.5, %v3557
  %v3559 = vmul.f32 %v3554, %v3558
  %vm3560 = vweird.f32 %v3140
  %vm3561 = vweird.f32 %v3554
  %vm3562 = vmor %vm3560, %vm3561
  %v3563 = vsel %vm3562, %v3554, %v3559
  %v3564 = vrsqrt.pop %v3141
  %v3565 = vmul.f32 %v3564, %v3141
  %v3566 = vmul.f32 %v3565, %v3564
  %v3567 = vmul.f32 0.5, %v3566
  %v3568 = vsub.f32 1.5, %v3567
  %v3569 = vmul.f32 %v3564, %v3568
  %vm3570 = vweird.f32 %v3141
  %vm3571 = vweird.f32 %v3564
  %vm3572 = vmor %vm3570, %vm3571
  %v3573 = vsel %vm3572, %v3564, %v3569
  %v3574 = vrsqrt.pop %v3142
  %v3575 = vmul.f32 %v3574, %v3142
  %v3576 = vmul.f32 %v3575, %v3574
  %v3577 = vmul.f32 0.5, %v3576
  %v3578 = vsub.f32 1.5, %v3577
  %v3579 = vmul.f32 %v3574, %v3578
  %vm3580 = vweird.f32 %v3142
  %vm3581 = vweird.f32 %v3574
  %vm3582 = vmor %vm3580, %vm3581
  %v3583 = vsel %vm3582, %v3574, %v3579
  %v3584 = vrsqrt.pop %v3143
  %v3585 = vmul.f32 %v3584, %v3143
  %v3586 = vmul.f32 %v3585, %v3584
  %v3587 = vmul.f32 0.5, %v3586
  %v3588 = vsub.f32 1.5, %v3587
  %v3589 = vmul.f32 %v3584, %v3588
  %vm3590 = vweird.f32 %v3143
  %vm3591 = vweird.f32 %v3584
  %vm3592 = vmor %vm3590, %vm3591
  %v3593 = vsel %vm3592, %v3584, %v3589
  %v3594 = vrsqrt.pop %v3144
  %v3595 = vmul.f32 %v3594, %v3144
  %v3596 = vmul.f32 %v3595, %v3594
  %v3597 = vmul.f32 0.5, %v3596
  %v3598 = vsub.f32 1.5, %v3597
  %v3599 = vmul.f32 %v3594, %v3598
  %vm3600 = vweird.f32 %v3144
  %vm3601 = vweird.f32 %v3594
  %vm3602 = vmor %vm3600, %vm3601
  %v3603 = vsel %vm3602, %v3594, %v3599
  %v3604 = vrsqrt.pop %v3145
  %v3605 = vmul.f32 %v3604, %v3145
  %v3606 = vmul.f32 %v3605, %v3604
  %v3607 = vmul.f32 0.5, %v3606
  %v3608 = vsub.f32 1.5, %v3607
  %v3609 = vmul.f32 %v3604, %v3608
  %vm3610 = vweird.f32 %v3145
  %vm3611 = vweird.f32 %v3604
  %vm3612 = vmor %vm3610, %vm3611
  %v3613 = vsel %vm3612, %v3604, %v3609
  %v3614 = vrsqrt.pop %v3146
  %v3615 = vmul.f32 %v3614, %v3146
  %v3616 = vmul.f32 %v3615, %v3614
  %v3617 = vmul.f32 0.5, %v3616
  %v3618 = vsub.f32 1.5, %v3617
  %v3619 = vmul.f32 %v3614, %v3618
  %vm3620 = vweird.f32 %v3146
  %vm3621 = vweird.f32 %v3614
  %vm3622 = vmor %vm3620, %vm3621
  %v3623 = vsel %vm3622, %v3614, %v3619
  %v3624 = vrsqrt.pop %v3147
  %v3625 = vmul.f32 %v3624, %v3147
  %v3626 = vmul.f32 %v3625, %v3624
  %v3627 = vmul.f32 0.5, %v3626
  %v3628 = vsub.f32 1.5, %v3627
  %v3629 = vmul.f32 %v3624, %v3628
  %vm3630 = vweird.f32 %v3147
  %vm3631 = vweird.f32 %v3624
  %vm3632 = vmor %vm3630, %vm3631
  %v3633 = vsel %vm3632, %v3624, %v3629
  %v3634 = vrsqrt.pop %v3148
  %v3635 = vmul.f32 %v3634, %v3148
  %v3636 = vmul.f32 %v3635, %v3634
  %v3637 = vmul.f32 0.5, %v3636
  %v3638 = vsub.f32 1.5, %v3637
  %v3639 = vmul.f32 %v3634, %v3638
  %vm3640 = vweird.f32 %v3148
  %vm3641 = vweird.f32 %v3634
  %vm3642 = vmor %vm3640, %vm3641
  %v3643 = vsel %vm3642, %v3634, %v3639
  %v3644 = vrsqrt.pop %v3149
  %v3645 = vmul.f32 %v3644, %v3149
  %v3646 = vmul.f32 %v3645, %v3644
  %v3647 = vmul.f32 0.5, %v3646
  %v3648 = vsub.f32 1.5, %v3647
  %v3649 = vmul.f32 %v3644, %v3648
  %vm3650 = vweird.f32 %v3149
  %vm3651 = vweird.f32 %v3644
  %vm3652 = vmor %vm3650, %vm3651
  %v3653 = vsel %vm3652, %v3644, %v3649
  %v3654 = vrsqrt.pop %v3150
  %v3655 = vmul.f32 %v3654, %v3150
  %v3656 = vmul.f32 %v3655, %v3654
  %v3657 = vmul.f32 0.5, %v3656
  %v3658 = vsub.f32 1.5, %v3657
  %v3659 = vmul.f32 %v3654, %v3658
  %vm3660 = vweird.f32 %v3150
  %vm3661 = vweird.f32 %v3654
  %vm3662 = vmor %vm3660, %vm3661
  %v3663 = vsel %vm3662, %v3654, %v3659
  %v3664 = vrsqrt.pop %v3151
  %v3665 = vmul.f32 %v3664, %v3151
  %v3666 = vmul.f32 %v3665, %v3664
  %v3667 = vmul.f32 0.5, %v3666
  %v3668 = vsub.f32 1.5, %v3667
  %v3669 = vmul.f32 %v3664, %v3668
  %vm3670 = vweird.f32 %v3151
  %vm3671 = vweird.f32 %v3664
  %vm3672 = vmor %vm3670, %vm3671
  %v3673 = vsel %vm3672, %v3664, %v3669
  %v3674 = vrsqrt.pop %v3152
  %v3675 = vmul.f32 %v3674, %v3152
  %v3676 = vmul.f32 %v3675, %v3674
  %v3677 = vmul.f32 0.5, %v3676
  %v3678 = vsub.f32 1.5, %v3677
  %v3679 = vmul.f32 %v3674, %v3678
  %vm3680 = vweird.f32 %v3152
  %vm3681 = vweird.f32 %v3674
  %vm3682 = vmor %vm3680, %vm3681
  %v3683 = vsel %vm3682, %v3674, %v3679
  %v3684 = vrsqrt.pop %v3153
  %v3685 = vmul.f32 %v3684, %v3153
  %v3686 = vmul.f32 %v3685, %v3684
  %v3687 = vmul.f32 0.5, %v3686
  %v3688 = vsub.f32 1.5, %v3687
  %v3689 = vmul.f32 %v3684, %v3688
  %vm3690 = vweird.f32 %v3153
  %vm3691 = vweird.f32 %v3684
  %vm3692 = vmor %vm3690, %vm3691
  %v3693 = vsel %vm3692, %v3684, %v3689
  %v3694 = vrsqrt.pop %v3154
  %v3695 = vmul.f32 %v3694, %v3154
  %v3696 = vmul.f32 %v3695, %v3694
  %v3697 = vmul.f32 0.5, %v3696
  %v3698 = vsub.f32 1.5, %v3697
  %v3699 = vmul.f32 %v3694, %v3698
  %vm3700 = vweird.f32 %v3154
  %vm3701 = vweird.f32 %v3694
  %vm3702 = vmor %vm3700, %vm3701
  %v3703 = vsel %vm3702, %v3694, %v3699
  %v3704 = vrsqrt.pop %v3155
  %v3705 = vmul.f32 %v3704, %v3155
  %v3706 = vmul.f32 %v3705, %v3704
  %v3707 = vmul.f32 0.5, %v3706
  %v3708 = vsub.f32 1.5, %v3707
  %v3709 = vmul.f32 %v3704, %v3708
  %vm3710 = vweird.f32 %v3155
  %vm3711 = vweird.f32 %v3704
  %vm3712 = vmor %vm3710, %vm3711
  %v3713 = vsel %vm3712, %v3704, %v3709
  %v3714 = vrsqrt.pop %v3156
  %v3715 = vmul.f32 %v3714, %v3156
  %v3716 = vmul.f32 %v3715, %v3714
  %v3717 = vmul.f32 0.5, %v3716
  %v3718 = vsub.f32 1.5, %v3717
  %v3719 = vmul.f32 %v3714, %v3718
  %vm3720 = vweird.f32 %v3156
  %vm3721 = vweird.f32 %v3714
  %vm3722 = vmor %vm3720, %vm3721
  %v3723 = vsel %vm3722, %v3714, %v3719
  %v3724 = vrsqrt.pop %v3157
  %v3725 = vmul.f32 %v3724, %v3157
  %v3726 = vmul.f32 %v3725, %v3724
  %v3727 = vmul.f32 0.5, %v3726
  %v3728 = vsub.f32 1.5, %v3727
  %v3729 = vmul.f32 %v3724, %v3728
  %vm3730 = vweird.f32 %v3157
  %vm3731 = vweird.f32 %v3724
  %vm3732 = vmor %vm3730, %vm3731
  %v3733 = vsel %vm3732, %v3724, %v3729
  %v3734 = vrsqrt.pop %v3158
  %v3735 = vmul.f32 %v3734, %v3158
  %v3736 = vmul.f32 %v3735, %v3734
  %v3737 = vmul.f32 0.5, %v3736
  %v3738 = vsub.f32 1.5, %v3737
  %v3739 = vmul.f32 %v3734, %v3738
  %vm3740 = vweird.f32 %v3158
  %vm3741 = vweird.f32 %v3734
  %vm3742 = vmor %vm3740, %vm3741
  %v3743 = vsel %vm3742, %v3734, %v3739
  %v3744 = vrsqrt.pop %v3159
  %v3745 = vmul.f32 %v3744, %v3159
  %v3746 = vmul.f32 %v3745, %v3744
  %v3747 = vmul.f32 0.5, %v3746
  %v3748 = vsub.f32 1.5, %v3747
  %v3749 = vmul.f32 %v3744, %v3748
  %vm3750 = vweird.f32 %v3159
  %vm3751 = vweird.f32 %v3744
  %vm3752 = vmor %vm3750, %vm3751
  %v3753 = vsel %vm3752, %v3744, %v3749
  %v3754 = vrsqrt.pop %v3160
  %v3755 = vmul.f32 %v3754, %v3160
  %v3756 = vmul.f32 %v3755, %v3754
  %v3757 = vmul.f32 0.5, %v3756
  %v3758 = vsub.f32 1.5, %v3757
  %v3759 = vmul.f32 %v3754, %v3758
  %vm3760 = vweird.f32 %v3160
  %vm3761 = vweird.f32 %v3754
  %vm3762 = vmor %vm3760, %vm3761
  %v3763 = vsel %vm3762, %v3754, %v3759
  %v3764 = vrsqrt.pop %v3161
  %v3765 = vmul.f32 %v3764, %v3161
  %v3766 = vmul.f32 %v3765, %v3764
  %v3767 = vmul.f32 0.5, %v3766
  %v3768 = vsub.f32 1.5, %v3767
  %v3769 = vmul.f32 %v3764, %v3768
  %vm3770 = vweird.f32 %v3161
  %vm3771 = vweird.f32 %v3764
  %vm3772 = vmor %vm3770, %vm3771
  %v3773 = vsel %vm3772, %v3764, %v3769
  %v3774 = vrsqrt.pop %v3162
  %v3775 = vmul.f32 %v3774, %v3162
  %v3776 = vmul.f32 %v3775, %v3774
  %v3777 = vmul.f32 0.5, %v3776
  %v3778 = vsub.f32 1.5, %v3777
  %v3779 = vmul.f32 %v3774, %v3778
  %vm3780 = vweird.f32 %v3162
  %vm3781 = vweird.f32 %v3774
  %vm3782 = vmor %vm3780, %vm3781
  %v3783 = vsel %vm3782, %v3774, %v3779
  %v3784 = vrsqrt.pop %v3163
  %v3785 = vmul.f32 %v3784, %v3163
  %v3786 = vmul.f32 %v3785, %v3784
  %v3787 = vmul.f32 0.5, %v3786
  %v3788 = vsub.f32 1.5, %v3787
  %v3789 = vmul.f32 %v3784, %v3788
  %vm3790 = vweird.f32 %v3163
  %vm3791 = vweird.f32 %v3784
  %vm3792 = vmor %vm3790, %vm3791
  %v3793 = vsel %vm3792, %v3784, %v3789
  %v3794 = vrsqrt.pop %v3164
  %v3795 = vmul.f32 %v3794, %v3164
  %v3796 = vmul.f32 %v3795, %v3794
  %v3797 = vmul.f32 0.5, %v3796
  %v3798 = vsub.f32 1.5, %v3797
  %v3799 = vmul.f32 %v3794, %v3798
  %vm3800 = vweird.f32 %v3164
  %vm3801 = vweird.f32 %v3794
  %vm3802 = vmor %vm3800, %vm3801
  %v3803 = vsel %vm3802, %v3794, %v3799
  %v3804 = vrsqrt.pop %v3165
  %v3805 = vmul.f32 %v3804, %v3165
  %v3806 = vmul.f32 %v3805, %v3804
  %v3807 = vmul.f32 0.5, %v3806
  %v3808 = vsub.f32 1.5, %v3807
  %v3809 = vmul.f32 %v3804, %v3808
  %vm3810 = vweird.f32 %v3165
  %vm3811 = vweird.f32 %v3804
  %vm3812 = vmor %vm3810, %vm3811
  %v3813 = vsel %vm3812, %v3804, %v3809
  %v3814 = vrsqrt.pop %v3166
  %v3815 = vmul.f32 %v3814, %v3166
  %v3816 = vmul.f32 %v3815, %v3814
  %v3817 = vmul.f32 0.5, %v3816
  %v3818 = vsub.f32 1.5, %v3817
  %v3819 = vmul.f32 %v3814, %v3818
  %vm3820 = vweird.f32 %v3166
  %vm3821 = vweird.f32 %v3814
  %vm3822 = vmor %vm3820, %vm3821
  %v3823 = vsel %vm3822, %v3814, %v3819
  %v3824 = vrsqrt.pop %v3167
  %v3825 = vmul.f32 %v3824, %v3167
  %v3826 = vmul.f32 %v3825, %v3824
  %v3827 = vmul.f32 0.5, %v3826
  %v3828 = vsub.f32 1.5, %v3827
  %v3829 = vmul.f32 %v3824, %v3828
  %vm3830 = vweird.f32 %v3167
  %vm3831 = vweird.f32 %v3824
  %vm3832 = vmor %vm3830, %vm3831
  %v3833 = vsel %vm3832, %v3824, %v3829
  %v3834 = vrsqrt.pop %v3168
  %v3835 = vmul.f32 %v3834, %v3168
  %v3836 = vmul.f32 %v3835, %v3834
  %v3837 = vmul.f32 0.5, %v3836
  %v3838 = vsub.f32 1.5, %v3837
  %v3839 = vmul.f32 %v3834, %v3838
  %vm3840 = vweird.f32 %v3168
  %vm3841 = vweird.f32 %v3834
  %vm3842 = vmor %vm3840, %vm3841
  %v3843 = vsel %vm3842, %v3834, %v3839
  %v3844 = vrsqrt.pop %v3169
  %v3845 = vmul.f32 %v3844, %v3169
  %v3846 = vmul.f32 %v3845, %v3844
  %v3847 = vmul.f32 0.5, %v3846
  %v3848 = vsub.f32 1.5, %v3847
  %v3849 = vmul.f32 %v3844, %v3848
  %vm3850 = vweird.f32 %v3169
  %vm3851 = vweird.f32 %v3844
  %vm3852 = vmor %vm3850, %vm3851
  %v3853 = vsel %vm3852, %v3844, %v3849
  %v3854 = vrsqrt.pop %v3170
  %v3855 = vmul.f32 %v3854, %v3170
  %v3856 = vmul.f32 %v3855, %v3854
  %v3857 = vmul.f32 0.5, %v3856
  %v3858 = vsub.f32 1.5, %v3857
  %v3859 = vmul.f32 %v3854, %v3858
  %vm3860 = vweird.f32 %v3170
  %vm3861 = vweird.f32 %v3854
  %vm3862 = vmor %vm3860, %vm3861
  %v3863 = vsel %vm3862, %v3854, %v3859
  %v3864 = vrsqrt.pop %v3171
  %v3865 = vmul.f32 %v3864, %v3171
  %v3866 = vmul.f32 %v3865, %v3864
  %v3867 = vmul.f32 0.5, %v3866
  %v3868 = vsub.f32 1.5, %v3867
  %v3869 = vmul.f32 %v3864, %v3868
  %vm3870 = vweird.f32 %v3171
  %vm3871 = vweird.f32 %v3864
  %vm3872 = vmor %vm3870, %vm3871
  %v3873 = vsel %vm3872, %v3864, %v3869
  %v3874 = vrsqrt.pop %v3172
  %v3875 = vmul.f32 %v3874, %v3172
  %v3876 = vmul.f32 %v3875, %v3874
  %v3877 = vmul.f32 0.5, %v3876
  %v3878 = vsub.f32 1.5, %v3877
  %v3879 = vmul.f32 %v3874, %v3878
  %vm3880 = vweird.f32 %v3172
  %vm3881 = vweird.f32 %v3874
  %vm3882 = vmor %vm3880, %vm3881
  %v3883 = vsel %vm3882, %v3874, %v3879
  %v3884 = vrsqrt.pop %v3173
  %v3885 = vmul.f32 %v3884, %v3173
  %v3886 = vmul.f32 %v3885, %v3884
  %v3887 = vmul.f32 0.5, %v3886
  %v3888 = vsub.f32 1.5, %v3887
  %v3889 = vmul.f32 %v3884, %v3888
  %vm3890 = vweird.f32 %v3173
  %vm3891 = vweird.f32 %v3884
  %vm3892 = vmor %vm3890, %vm3891
  %v3893 = vsel %vm3892, %v3884, %v3889
  %v3894 = vrsqrt.pop %v3174
  %v3895 = vmul.f32 %v3894, %v3174
  %v3896 = vmul.f32 %v3895, %v3894
  %v3897 = vmul.f32 0.5, %v3896
  %v3898 = vsub.f32 1.5, %v3897
  %v3899 = vmul.f32 %v3894, %v3898
  %vm3900 = vweird.f32 %v3174
  %vm3901 = vweird.f32 %v3894
  %vm3902 = vmor %vm3900, %vm3901
  %v3903 = vsel %vm3902, %v3894, %v3899
  %v3904 = vrsqrt.pop %v3175
  %v3905 = vmul.f32 %v3904, %v3175
  %v3906 = vmul.f32 %v3905, %v3904
  %v3907 = vmul.f32 0.5, %v3906
  %v3908 = vsub.f32 1.5, %v3907
  %v3909 = vmul.f32 %v3904, %v3908
  %vm3910 = vweird.f32 %v3175
  %vm3911 = vweird.f32 %v3904
  %vm3912 = vmor %vm3910, %vm3911
  %v3913 = vsel %vm3912, %v3904, %v3909
  %v3914 = vrsqrt.pop %v3176
  %v3915 = vmul.f32 %v3914, %v3176
  %v3916 = vmul.f32 %v3915, %v3914
  %v3917 = vmul.f32 0.5, %v3916
  %v3918 = vsub.f32 1.5, %v3917
  %v3919 = vmul.f32 %v3914, %v3918
  %vm3920 = vweird.f32 %v3176
  %vm3921 = vweird.f32 %v3914
  %vm3922 = vmor %vm3920, %vm3921
  %v3923 = vsel %vm3922, %v3914, %v3919
  %v3924 = vrsqrt.pop %v3177
  %v3925 = vmul.f32 %v3924, %v3177
  %v3926 = vmul.f32 %v3925, %v3924
  %v3927 = vmul.f32 0.5, %v3926
  %v3928 = vsub.f32 1.5, %v3927
  %v3929 = vmul.f32 %v3924, %v3928
  %vm3930 = vweird.f32 %v3177
  %vm3931 = vweird.f32 %v3924
  %vm3932 = vmor %vm3930, %vm3931
  %v3933 = vsel %vm3932, %v3924, %v3929
  %v3934 = vrsqrt.pop %v3178
  %v3935 = vmul.f32 %v3934, %v3178
  %v3936 = vmul.f32 %v3935, %v3934
  %v3937 = vmul.f32 0.5, %v3936
  %v3938 = vsub.f32 1.5, %v3937
  %v3939 = vmul.f32 %v3934, %v3938
  %vm3940 = vweird.f32 %v3178
  %vm3941 = vweird.f32 %v3934
  %vm3942 = vmor %vm3940, %vm3941
  %v3943 = vsel %vm3942, %v3934, %v3939
  %v3944 = vrsqrt.pop %v3179
  %v3945 = vmul.f32 %v3944, %v3179
  %v3946 = vmul.f32 %v3945, %v3944
  %v3947 = vmul.f32 0.5, %v3946
  %v3948 = vsub.f32 1.5, %v3947
  %v3949 = vmul.f32 %v3944, %v3948
  %vm3950 = vweird.f32 %v3179
  %vm3951 = vweird.f32 %v3944
  %vm3952 = vmor %vm3950, %vm3951
  %v3953 = vsel %vm3952, %v3944, %v3949
  %v3954 = vrsqrt.pop %v3180
  %v3955 = vmul.f32 %v3954, %v3180
  %v3956 = vmul.f32 %v3955, %v3954
  %v3957 = vmul.f32 0.5, %v3956
  %v3958 = vsub.f32 1.5, %v3957
  %v3959 = vmul.f32 %v3954, %v3958
  %vm3960 = vweird.f32 %v3180
  %vm3961 = vweird.f32 %v3954
  %vm3962 = vmor %vm3960, %vm3961
  %v3963 = vsel %vm3962, %v3954, %v3959
  %v3964 = vrsqrt.pop %v3181
  %v3965 = vmul.f32 %v3964, %v3181
  %v3966 = vmul.f32 %v3965, %v3964
  %v3967 = vmul.f32 0.5, %v3966
  %v3968 = vsub.f32 1.5, %v3967
  %v3969 = vmul.f32 %v3964, %v3968
  %vm3970 = vweird.f32 %v3181
  %vm3971 = vweird.f32 %v3964
  %vm3972 = vmor %vm3970, %vm3971
  %v3973 = vsel %vm3972, %v3964, %v3969
  %v3974 = vrsqrt.pop %v3182
  %v3975 = vmul.f32 %v3974, %v3182
  %v3976 = vmul.f32 %v3975, %v3974
  %v3977 = vmul.f32 0.5, %v3976
  %v3978 = vsub.f32 1.5, %v3977
  %v3979 = vmul.f32 %v3974, %v3978
  %vm3980 = vweird.f32 %v3182
  %vm3981 = vweird.f32 %v3974
  %vm3982 = vmor %vm3980, %vm3981
  %v3983 = vsel %vm3982, %v3974, %v3979
  %v3984 = vrsqrt.pop %v3183
  %v3985 = vmul.f32 %v3984, %v3183
  %v3986 = vmul.f32 %v3985, %v3984
  %v3987 = vmul.f32 0.5, %v3986
  %v3988 = vsub.f32 1.5, %v3987
  %v3989 = vmul.f32 %v3984, %v3988
  %vm3990 = vweird.f32 %v3183
  %vm3991 = vweird.f32 %v3984
  %vm3992 = vmor %vm3990, %vm3991
  %v3993 = vsel %vm3992, %v3984, %v3989
  %v3994 = vrsqrt.pop %v3184
  %v3995 = vmul.f32 %v3994, %v3184
  %v3996 = vmul.f32 %v3995, %v3994
  %v3997 = vmul.f32 0.5, %v3996
  %v3998 = vsub.f32 1.5, %v3997
  %v3999 = vmul.f32 %v3994, %v3998
  %vm4000 = vweird.f32 %v3184
  %vm4001 = vweird.f32 %v3994
  %vm4002 = vmor %vm4000, %vm4001
  %v4003 = vsel %vm4002, %v3994, %v3999
  %v4004 = vrsqrt.pop %v3185
  %v4005 = vmul.f32 %v4004, %v3185
  %v4006 = vmul.f32 %v4005, %v4004
  %v4007 = vmul.f32 0.5, %v4006
  %v4008 = vsub.f32 1.5, %v4007
  %v4009 = vmul.f32 %v4004, %v4008
  %vm4010 = vweird.f32 %v3185
  %vm4011 = vweird.f32 %v4004
  %vm4012 = vmor %vm4010, %vm4011
  %v4013 = vsel %vm4012, %v4004, %v4009
  %v4014 = vrsqrt.pop %v3186
  %v4015 = vmul.f32 %v4014, %v3186
  %v4016 = vmul.f32 %v4015, %v4014
  %v4017 = vmul.f32 0.5, %v4016
  %v4018 = vsub.f32 1.5, %v4017
  %v4019 = vmul.f32 %v4014, %v4018
  %vm4020 = vweird.f32 %v3186
  %vm4021 = vweird.f32 %v4014
  %vm4022 = vmor %vm4020, %vm4021
  %v4023 = vsel %vm4022, %v4014, %v4019
  %v4024 = vrsqrt.pop %v3187
  %v4025 = vmul.f32 %v4024, %v3187
  %v4026 = vmul.f32 %v4025, %v4024
  %v4027 = vmul.f32 0.5, %v4026
  %v4028 = vsub.f32 1.5, %v4027
  %v4029 = vmul.f32 %v4024, %v4028
  %vm4030 = vweird.f32 %v3187
  %vm4031 = vweird.f32 %v4024
  %vm4032 = vmor %vm4030, %vm4031
  %v4033 = vsel %vm4032, %v4024, %v4029
  %v4034 = vrsqrt.pop %v3188
  %v4035 = vmul.f32 %v4034, %v3188
  %v4036 = vmul.f32 %v4035, %v4034
  %v4037 = vmul.f32 0.5, %v4036
  %v4038 = vsub.f32 1.5, %v4037
  %v4039 = vmul.f32 %v4034, %v4038
  %vm4040 = vweird.f32 %v3188
  %vm4041 = vweird.f32 %v4034
  %vm4042 = vmor %vm4040, %vm4041
  %v4043 = vsel %vm4042, %v4034, %v4039
  %v4044 = vrsqrt.pop %v3189
  %v4045 = vmul.f32 %v4044, %v3189
  %v4046 = vmul.f32 %v4045, %v4044
  %v4047 = vmul.f32 0.5, %v4046
  %v4048 = vsub.f32 1.5, %v4047
  %v4049 = vmul.f32 %v4044, %v4048
  %vm4050 = vweird.f32 %v3189
  %vm4051 = vweird.f32 %v4044
  %vm4052 = vmor %vm4050, %vm4051
  %v4053 = vsel %vm4052, %v4044, %v4049
  %v4054 = vrsqrt.pop %v3190
  %v4055 = vmul.f32 %v4054, %v3190
  %v4056 = vmul.f32 %v4055, %v4054
  %v4057 = vmul.f32 0.5, %v4056
  %v4058 = vsub.f32 1.5, %v4057
  %v4059 = vmul.f32 %v4054, %v4058
  %vm4060 = vweird.f32 %v3190
  %vm4061 = vweird.f32 %v4054
  %vm4062 = vmor %vm4060, %vm4061
  %v4063 = vsel %vm4062, %v4054, %v4059
  %v4064 = vrsqrt.pop %v3191
  %v4065 = vmul.f32 %v4064, %v3191
  %v4066 = vmul.f32 %v4065, %v4064
  %v4067 = vmul.f32 0.5, %v4066
  %v4068 = vsub.f32 1.5, %v4067
  %v4069 = vmul.f32 %v4064, %v4068
  %vm4070 = vweird.f32 %v3191
  %vm4071 = vweird.f32 %v4064
  %vm4072 = vmor %vm4070, %vm4071
  %v4073 = vsel %vm4072, %v4064, %v4069
  %v4074 = vrsqrt.pop %v3192
  %v4075 = vmul.f32 %v4074, %v3192
  %v4076 = vmul.f32 %v4075, %v4074
  %v4077 = vmul.f32 0.5, %v4076
  %v4078 = vsub.f32 1.5, %v4077
  %v4079 = vmul.f32 %v4074, %v4078
  %vm4080 = vweird.f32 %v3192
  %vm4081 = vweird.f32 %v4074
  %vm4082 = vmor %vm4080, %vm4081
  %v4083 = vsel %vm4082, %v4074, %v4079
  %v4084 = vrsqrt.pop %v3193
  %v4085 = vmul.f32 %v4084, %v3193
  %v4086 = vmul.f32 %v4085, %v4084
  %v4087 = vmul.f32 0.5, %v4086
  %v4088 = vsub.f32 1.5, %v4087
  %v4089 = vmul.f32 %v4084, %v4088
  %vm4090 = vweird.f32 %v3193
  %vm4091 = vweird.f32 %v4084
  %vm4092 = vmor %vm4090, %vm4091
  %v4093 = vsel %vm4092, %v4084, %v4089
  %v4094 = vmul.f32 %v3014, %v3203
  %v4095 = vmul.f32 %v3015, %v3213
  %v4096 = vmul.f32 %v3016, %v3223
  %v4097 = vmul.f32 %v3017, %v3233
  %v4098 = vmul.f32 %v3018, %v3243
  %v4099 = vmul.f32 %v3019, %v3253
  %v4100 = vmul.f32 %v3020, %v3263
  %v4101 = vmul.f32 %v3021, %v3273
  %v4102 = vmul.f32 %v3022, %v3283
  %v4103 = vmul.f32 %v3023, %v3293
  %v4104 = vmul.f32 %v3024, %v3303
  %v4105 = vmul.f32 %v3025, %v3313
  %v4106 = vmul.f32 %v3026, %v3323
  %v4107 = vmul.f32 %v3027, %v3333
  %v4108 = vmul.f32 %v3028, %v3343
  %v4109 = vmul.f32 %v3029, %v3353
  %v4110 = vmul.f32 %v3030, %v3363
  %v4111 = vmul.f32 %v3031, %v3373
  %v4112 = vmul.f32 %v3032, %v3383
  %v4113 = vmul.f32 %v3033, %v3393
  %v4114 = vmul.f32 %v3034, %v3403
  %v4115 = vmul.f32 %v3035, %v3413
  %v4116 = vmul.f32 %v3036, %v3423
  %v4117 = vmul.f32 %v3037, %v3433
  %v4118 = vmul.f32 %v3038, %v3443
  %v4119 = vmul.f32 %v3039, %v3453
  %v4120 = vmul.f32 %v3040, %v3463
  %v4121 = vmul.f32 %v3041, %v3473
  %v4122 = vmul.f32 %v3042, %v3483
  %v4123 = vmul.f32 %v3043, %v3493
  %v4124 = vmul.f32 %v3044, %v3503
  %v4125 = vmul.f32 %v3045, %v3513
  %v4126 = vmul.f32 %v3046, %v3523
  %v4127 = vmul.f32 %v3047, %v3533
  %v4128 = vmul.f32 %v3048, %v3543
  %v4129 = vmul.f32 %v3049, %v3553
  %v4130 = vmul.f32 %v3050, %v3563
  %v4131 = vmul.f32 %v3051, %v3573
  %v4132 = vmul.f32 %v3052, %v3583
  %v4133 = vmul.f32 %v3053, %v3593
  %v4134 = vmul.f32 %v3054, %v3603
  %v4135 = vmul.f32 %v3055, %v3613
  %v4136 = vmul.f32 %v3056, %v3623
  %v4137 = vmul.f32 %v3057, %v3633
  %v4138 = vmul.f32 %v3058, %v3643
  %v4139 = vmul.f32 %v3059, %v3653
  %v4140 = vmul.f32 %v3060, %v3663
  %v4141 = vmul.f32 %v3061, %v3673
  %v4142 = vmul.f32 %v3062, %v3683
  %v4143 = vmul.f32 %v3063, %v3693
  %v4144 = vmul.f32 %v3064, %v3703
  %v4145 = vmul.f32 %v3065, %v3713
  %v4146 = vmul.f32 %v3066, %v3723
  %v4147 = vmul.f32 %v3067, %v3733
  %v4148 = vmul.f32 %v3068, %v3743
  %v4149 = vmul.f32 %v3069, %v3753
  %v4150 = vmul.f32 %v3070, %v3763
  %v4151 = vmul.f32 %v3071, %v3773
  %v4152 = vmul.f32 %v3072, %v3783
  %v4153 = vmul.f32 %v3073, %v3793
  %v4154 = vmul.f32 %v3074, %v3803
  %v4155 = vmul.f32 %v3075, %v3813
  %v4156 = vmul.f32 %v3076, %v3823
  %v4157 = vmul.f32 %v3077, %v3833
  %v4158 = vmul.f32 %v3078, %v3843
  %v4159 = vmul.f32 %v3079, %v3853
  %v4160 = vmul.f32 %v3080, %v3863
  %v4161 = vmul.f32 %v3081, %v3873
  %v4162 = vmul.f32 %v3082, %v3883
  %v4163 = vmul.f32 %v3083, %v3893
  %v4164 = vmul.f32 %v3084, %v3903
  %v4165 = vmul.f32 %v3085, %v3913
  %v4166 = vmul.f32 %v3086, %v3923
  %v4167 = vmul.f32 %v3087, %v3933
  %v4168 = vmul.f32 %v3088, %v3943
  %v4169 = vmul.f32 %v3089, %v3953
  %v4170 = vmul.f32 %v3090, %v3963
  %v4171 = vmul.f32 %v3091, %v3973
  %v4172 = vmul.f32 %v3092, %v3983
  %v4173 = vmul.f32 %v3093, %v3993
  %v4174 = vmul.f32 %v3094, %v4003
  %v4175 = vmul.f32 %v3095, %v4013
  %v4176 = vmul.f32 %v3096, %v4023
  %v4177 = vmul.f32 %v3097, %v4033
  %v4178 = vmul.f32 %v3098, %v4043
  %v4179 = vmul.f32 %v3099, %v4053
  %v4180 = vmul.f32 %v3100, %v4063
  %v4181 = vmul.f32 %v3101, %v4073
  %v4182 = vmul.f32 %v3102, %v4083
  %v4183 = vmul.f32 %v3103, %v4093
  %v4184 = vld [vmem:[%s5] sm:$0xff]
  %v4185 = vld [vmem:[%s5 + $0x8] sm:$0xff]
  %v4186 = vld [vmem:[%s5 + $0x10] sm:$0xff]
  %v4187 = vld [vmem:[%s5 + $0x18] sm:$0xff]
  %v4188 = vld [vmem:[%s5 + $0x20] sm:$0xff]
  %v4189 = vld [vmem:[%s5 + $0x28] sm:$0xff]
  %v4190 = vld [vmem:[%s5 + $0x30] sm:$0xff]
  %v4191 = vld [vmem:[%s5 + $0x38] sm:$0xff]
  %v4192 = vld [vmem:[%s5 + $0x40] sm:$0xff]
  %v4193 = vld [vmem:[%s5 + $0x48] sm:$0xff]
  %v4194 = vld [vmem:[%s5 + $0x50] sm:$0xff]
  %v4195 = vld [vmem:[%s5 + $0x58] sm:$0xff]
  %v4196 = vld [vmem:[%s5 + $0x60] sm:$0xff]
  %v4197 = vld [vmem:[%s5 + $0x68] sm:$0xff]
  %v4198 = vld [vmem:[%s5 + $0x70] sm:$0xff]
  %v4199 = vld [vmem:[%s5 + $0x78] sm:$0xff]
  %v4200 = vld [vmem:[%s5 + $0x80] sm:$0xff]
  %v4201 = vld [vmem:[%s5 + $0x88] sm:$0xff]
  %v4202 = vld [vmem:[%s5 + $0x90] sm:$0xff]
  %v4203 = vld [vmem:[%s5 + $0x98] sm:$0xff]
  %v4204 = vld [vmem:[%s5 + $0xa0] sm:$0xff]
  %v4205 = vld [vmem:[%s5 + $0xa8] sm:$0xff]
  %v4206 = vld [vmem:[%s5 + $0xb0] sm:$0xff]
  %v4207 = vld [vmem:[%s5 + $0xb8] sm:$0xff]
  %v4208 = vld [vmem:[%s5 + $0xc0] sm:$0xff]
  %v4209 = vld [vmem:[%s5 + $0xc8] sm:$0xff]
  %v4210 = vld [vmem:[%s5 + $0xd0] sm:$0xff]
  %v4211 = vld [vmem:[%s5 + $0xd8] sm:$0xff]
  %v4212 = vld [vmem:[%s5 + $0xe0] sm:$0xff]
  %v4213 = vld [vmem:[%s5 + $0xe8] sm:$0xff]
  %v4214 = vld [vmem:[%s5 + $0xf0] sm:$0xff]
  %v4215 = vld [vmem:[%s5 + $0xf8] sm:$0xff]
  %v4216 = vld [vmem:[%s5 + $0x100] sm:$0xff]
  %v4217 = vld [vmem:[%s5 + $0x108] sm:$0xff]
  %v4218 = vld [vmem:[%s5 + $0x110] sm:$0xff]
  %v4219 = vld [vmem:[%s5 + $0x118] sm:$0xff]
  %v4220 = vld [vmem:[%s5 + $0x120] sm:$0xff]
  %v4221 = vld [vmem:[%s5 + $0x128] sm:$0xff]
  %v4222 = vld [vmem:[%s5 + $0x130] sm:$0xff]
  %v4223 = vld [vmem:[%s5 + $0x138] sm:$0xff]
  %v4224 = vld [vmem:[%s5 + $0x140] sm:$0xff]
  %v4225 = vld [vmem:[%s5 + $0x148] sm:$0xff]
  %v4226 = vld [vmem:[%s5 + $0x150] sm:$0xff]
  %v4227 = vld [vmem:[%s5 + $0x158] sm:$0xff]
  %v4228 = vld [vmem:[%s5 + $0x160] sm:$0xff]
  %v4229 = vld [vmem:[%s5 + $0x168] sm:$0xff]
  %v4230 = vld [vmem:[%s5 + $0x170] sm:$0xff]
  %v4231 = vld [vmem:[%s5 + $0x178] sm:$0xff]
  %v4232 = vld [vmem:[%s5 + $0x180] sm:$0xff]
  %v4233 = vld [vmem:[%s5 + $0x188] sm:$0xff]
  %v4234 = vld [vmem:[%s5 + $0x190] sm:$0xff]
  %v4235 = vld [vmem:[%s5 + $0x198] sm:$0xff]
  %v4236 = vld [vmem:[%s5 + $0x1a0] sm:$0xff]
  %v4237 = vld [vmem:[%s5 + $0x1a8] sm:$0xff]
  %v4238 = vld [vmem:[%s5 + $0x1b0] sm:$0xff]
  %v4239 = vld [vmem:[%s5 + $0x1b8] sm:$0xff]
  %v4240 = vld [vmem:[%s5 + $0x1c0] sm:$0xff]
  %v4241 = vld [vmem:[%s5 + $0x1c8] sm:$0xff]
  %v4242 = vld [vmem:[%s5 + $0x1d0] sm:$0xff]
  %v4243 = vld [vmem:[%s5 + $0x1d8] sm:$0xff]
  %v4244 = vld [vmem:[%s5 + $0x1e0] sm:$0xff]
  %v4245 = vld [vmem:[%s5 + $0x1e8] sm:$0xff]
  %v4246 = vld [vmem:[%s5 + $0x1f0] sm:$0xff]
  %v4247 = vld [vmem:[%s5 + $0x1f8] sm:$0xff]
  %v4248 = vld [vmem:[%s5 + $0x200] sm:$0xff]
  %v4249 = vld [vmem:[%s5 + $0x208] sm:$0xff]
  %v4250 = vld [vmem:[%s5 + $0x210] sm:$0xff]
  %v4251 = vld [vmem:[%s5 + $0x218] sm:$0xff]
  %v4252 = vld [vmem:[%s5 + $0x220] sm:$0xff]
  %v4253 = vld [vmem:[%s5 + $0x228] sm:$0xff]
  %v4254 = vld [vmem:[%s5 + $0x230] sm:$0xff]
  %v4255 = vld [vmem:[%s5 + $0x238] sm:$0xff]
  %v4256 = vld [vmem:[%s5 + $0x240] sm:$0xff]
  %v4257 = vld [vmem:[%s5 + $0x248] sm:$0xff]
  %v4258 = vld [vmem:[%s5 + $0x250] sm:$0xff]
  %v4259 = vld [vmem:[%s5 + $0x258] sm:$0xff]
  %v4260 = vld [vmem:[%s5 + $0x260] sm:$0xff]
  %v4261 = vld [vmem:[%s5 + $0x268] sm:$0xff]
  %v4262 = vld [vmem:[%s5 + $0x270] sm:$0xff]
  %v4263 = vld [vmem:[%s5 + $0x278] sm:$0xff]
  %v4264 = vld [vmem:[%s5 + $0x280] sm:$0xff]
  %v4265 = vld [vmem:[%s5 + $0x288] sm:$0xff]
  %v4266 = vld [vmem:[%s5 + $0x290] sm:$0xff]
  %v4267 = vld [vmem:[%s5 + $0x298] sm:$0xff]
  %v4268 = vld [vmem:[%s5 + $0x2a0] sm:$0xff]
  %v4269 = vld [vmem:[%s5 + $0x2a8] sm:$0xff]
  %v4270 = vld [vmem:[%s5 + $0x2b0] sm:$0xff]
  %v4271 = vld [vmem:[%s5 + $0x2b8] sm:$0xff]
  %v4272 = vld [vmem:[%s5 + $0x2c0] sm:$0xff]
  %v4273 = vld [vmem:[%s5 + $0x2c8] sm:$0xff]
  %v4274 = vmul.f32 %v2024, %v4094
  %v4275 = vmul.f32 %v2025, %v4095
  %v4276 = vmul.f32 %v2026, %v4096
  %v4277 = vmul.f32 %v2027, %v4097
  %v4278 = vmul.f32 %v2028, %v4098
  %v4279 = vmul.f32 %v2029, %v4099
  %v4280 = vmul.f32 %v2030, %v4100
  %v4281 = vmul.f32 %v2031, %v4101
  %v4282 = vmul.f32 %v2032, %v4102
  %v4283 = vmul.f32 %v2033, %v4103
  %v4284 = vmul.f32 %v2034, %v4104
  %v4285 = vmul.f32 %v2035, %v4105
  %v4286 = vmul.f32 %v2036, %v4106
  %v4287 = vmul.f32 %v2037, %v4107
  %v4288 = vmul.f32 %v2038, %v4108
  %v4289 = vmul.f32 %v2039, %v4109
  %v4290 = vmul.f32 %v2040, %v4110
  %v4291 = vmul.f32 %v2041, %v4111
  %v4292 = vmul.f32 %v2042, %v4112
  %v4293 = vmul.f32 %v2043, %v4113
  %v4294 = vmul.f32 %v2044, %v4114
  %v4295 = vmul.f32 %v2045, %v4115
  %v4296 = vmul.f32 %v2046, %v4116
  %v4297 = vmul.f32 %v2047, %v4117
  %v4298 = vmul.f32 %v2048, %v4118
  %v4299 = vmul.f32 %v2049, %v4119
  %v4300 = vmul.f32 %v2050, %v4120
  %v4301 = vmul.f32 %v2051, %v4121
  %v4302 = vmul.f32 %v2052, %v4122
  %v4303 = vmul.f32 %v2053, %v4123
  %v4304 = vmul.f32 %v2054, %v4124
  %v4305 = vmul.f32 %v2055, %v4125
  %v4306 = vmul.f32 %v2056, %v4126
  %v4307 = vmul.f32 %v2057, %v4127
  %v4308 = vmul.f32 %v2058, %v4128
  %v4309 = vmul.f32 %v2059, %v4129
  %v4310 = vmul.f32 %v2060, %v4130
  %v4311 = vmul.f32 %v2061, %v4131
  %v4312 = vmul.f32 %v2062, %v4132
  %v4313 = vmul.f32 %v2063, %v4133
  %v4314 = vmul.f32 %v2064, %v4134
  %v4315 = vmul.f32 %v2065, %v4135
  %v4316 = vmul.f32 %v2066, %v4136
  %v4317 = vmul.f32 %v2067, %v4137
  %v4318 = vmul.f32 %v2068, %v4138
  %v4319 = vmul.f32 %v2069, %v4139
  %v4320 = vmul.f32 %v2070, %v4140
  %v4321 = vmul.f32 %v2071, %v4141
  %v4322 = vmul.f32 %v2072, %v4142
  %v4323 = vmul.f32 %v2073, %v4143
  %v4324 = vmul.f32 %v2074, %v4144
  %v4325 = vmul.f32 %v2075, %v4145
  %v4326 = vmul.f32 %v2076, %v4146
  %v4327 = vmul.f32 %v2077, %v4147
  %v4328 = vmul.f32 %v2078, %v4148
  %v4329 = vmul.f32 %v2079, %v4149
  %v4330 = vmul.f32 %v2080, %v4150
  %v4331 = vmul.f32 %v2081, %v4151
  %v4332 = vmul.f32 %v2082, %v4152
  %v4333 = vmul.f32 %v2083, %v4153
  %v4334 = vmul.f32 %v2084, %v4154
  %v4335 = vmul.f32 %v2085, %v4155
  %v4336 = vmul.f32 %v2086, %v4156
  %v4337 = vmul.f32 %v2087, %v4157
  %v4338 = vmul.f32 %v2088, %v4158
  %v4339 = vmul.f32 %v2089, %v4159
  %v4340 = vmul.f32 %v2090, %v4160
  %v4341 = vmul.f32 %v2091, %v4161
  %v4342 = vmul.f32 %v2092, %v4162
  %v4343 = vmul.f32 %v2093, %v4163
  %v4344 = vmul.f32 %v2094, %v4164
  %v4345 = vmul.f32 %v2095, %v4165
  %v4346 = vmul.f32 %v2096, %v4166
  %v4347 = vmul.f32 %v2097, %v4167
  %v4348 = vmul.f32 %v2098, %v4168
  %v4349 = vmul.f32 %v2099, %v4169
  %v4350 = vmul.f32 %v2100, %v4170
  %v4351 = vmul.f32 %v2101, %v4171
  %v4352 = vmul.f32 %v2102, %v4172
  %v4353 = vmul.f32 %v2103, %v4173
  %v4354 = vmul.f32 %v2104, %v4174
  %v4355 = vmul.f32 %v2105, %v4175
  %v4356 = vmul.f32 %v2106, %v4176
  %v4357 = vmul.f32 %v2107, %v4177
  %v4358 = vmul.f32 %v2108, %v4178
  %v4359 = vmul.f32 %v2109, %v4179
  %v4360 = vmul.f32 %v2110, %v4180
  %v4361 = vmul.f32 %v2111, %v4181
  %v4362 = vmul.f32 %v2112, %v4182
  %v4363 = vmul.f32 %v2113, %v4183
  %v4364 = vsub.f32 %v4184, %v4274
  %v4365 = vsub.f32 %v4185, %v4275
  %v4366 = vsub.f32 %v4186, %v4276
  %v4367 = vsub.f32 %v4187, %v4277
  %v4368 = vsub.f32 %v4188, %v4278
  %v4369 = vsub.f32 %v4189, %v4279
  %v4370 = vsub.f32 %v4190, %v4280
  %v4371 = vsub.f32 %v4191, %v4281
  %v4372 = vsub.f32 %v4192, %v4282
  %v4373 = vsub.f32 %v4193, %v4283
  %v4374 = vsub.f32 %v4194, %v4284
  %v4375 = vsub.f32 %v4195, %v4285
  %v4376 = vsub.f32 %v4196, %v4286
  %v4377 = vsub.f32 %v4197, %v4287
  %v4378 = vsub.f32 %v4198, %v4288
  %v4379 = vsub.f32 %v4199, %v4289
  %v4380 = vsub.f32 %v4200, %v4290
  %v4381 = vsub.f32 %v4201, %v4291
  %v4382 = vsub.f32 %v4202, %v4292
  %v4383 = vsub.f32 %v4203, %v4293
  %v4384 = vsub.f32 %v4204, %v4294
  %v4385 = vsub.f32 %v4205, %v4295
  %v4386 = vsub.f32 %v4206, %v4296
  %v4387 = vsub.f32 %v4207, %v4297
  %v4388 = vsub.f32 %v4208, %v4298
  %v4389 = vsub.f32 %v4209, %v4299
  %v4390 = vsub.f32 %v4210, %v4300
  %v4391 = vsub.f32 %v4211, %v4301
  %v4392 = vsub.f32 %v4212, %v4302
  %v4393 = vsub.f32 %v4213, %v4303
  %v4394 = vsub.f32 %v4214, %v4304
  %v4395 = vsub.f32 %v4215, %v4305
  %v4396 = vsub.f32 %v4216, %v4306
  %v4397 = vsub.f32 %v4217, %v4307
  %v4398 = vsub.f32 %v4218, %v4308
  %v4399 = vsub.f32 %v4219, %v4309
  %v4400 = vsub.f32 %v4220, %v4310
  %v4401 = vsub.f32 %v4221, %v4311
  %v4402 = vsub.f32 %v4222, %v4312
  %v4403 = vsub.f32 %v4223, %v4313
  %v4404 = vsub.f32 %v4224, %v4314
  %v4405 = vsub.f32 %v4225, %v4315
  %v4406 = vsub.f32 %v4226, %v4316
  %v4407 = vsub.f32 %v4227, %v4317
  %v4408 = vsub.f32 %v4228, %v4318
  %v4409 = vsub.f32 %v4229, %v4319
  %v4410 = vsub.f32 %v4230, %v4320
  %v4411 = vsub.f32 %v4231, %v4321
  %v4412 = vsub.f32 %v4232, %v4322
  %v4413 = vsub.f32 %v4233, %v4323
  %v4414 = vsub.f32 %v4234, %v4324
  %v4415 = vsub.f32 %v4235, %v4325
  %v4416 = vsub.f32 %v4236, %v4326
  %v4417 = vsub.f32 %v4237, %v4327
  %v4418 = vsub.f32 %v4238, %v4328
  %v4419 = vsub.f32 %v4239, %v4329
  %v4420 = vsub.f32 %v4240, %v4330
  %v4421 = vsub.f32 %v4241, %v4331
  %v4422 = vsub.f32 %v4242, %v4332
  %v4423 = vsub.f32 %v4243, %v4333
  %v4424 = vsub.f32 %v4244, %v4334
  %v4425 = vsub.f32 %v4245, %v4335
  %v4426 = vsub.f32 %v4246, %v4336
  %v4427 = vsub.f32 %v4247, %v4337
  %v4428 = vsub.f32 %v4248, %v4338
  %v4429 = vsub.f32 %v4249, %v4339
  %v4430 = vsub.f32 %v4250, %v4340
  %v4431 = vsub.f32 %v4251, %v4341
  %v4432 = vsub.f32 %v4252, %v4342
  %v4433 = vsub.f32 %v4253, %v4343
  %v4434 = vsub.f32 %v4254, %v4344
  %v4435 = vsub.f32 %v4255, %v4345
  %v4436 = vsub.f32 %v4256, %v4346
  %v4437 = vsub.f32 %v4257, %v4347
  %v4438 = vsub.f32 %v4258, %v4348
  %v4439 = vsub.f32 %v4259, %v4349
  %v4440 = vsub.f32 %v4260, %v4350
  %v4441 = vsub.f32 %v4261, %v4351
  %v4442 = vsub.f32 %v4262, %v4352
  %v4443 = vsub.f32 %v4263, %v4353
  %v4444 = vsub.f32 %v4264, %v4354
  %v4445 = vsub.f32 %v4265, %v4355
  %v4446 = vsub.f32 %v4266, %v4356
  %v4447 = vsub.f32 %v4267, %v4357
  %v4448 = vsub.f32 %v4268, %v4358
  %v4449 = vsub.f32 %v4269, %v4359
  %v4450 = vsub.f32 %v4270, %v4360
  %v4451 = vsub.f32 %v4271, %v4361
  %v4452 = vsub.f32 %v4272, %v4362
  %v4453 = vsub.f32 %v4273, %v4363
  %4455 = vset.pattern.permute.xlu0 0
  %4456 = vperm.xlu0 %4455, %v4094
  %v4457 = vpop.permute.xlu0 %4456
  %4460 = vset.pattern.permute.xlu0 0
  %4461 = vperm.xlu0 %4460, %v4095
  %v4462 = vpop.permute.xlu0 %4461
  %4465 = vset.pattern.permute.xlu0 0
  %4466 = vperm.xlu0 %4465, %v4096
  %v4467 = vpop.permute.xlu0 %4466
  %4470 = vset.pattern.permute.xlu0 0
  %4471 = vperm.xlu0 %4470, %v4097
  %v4472 = vpop.permute.xlu0 %4471
  %4475 = vset.pattern.permute.xlu0 0
  %4476 = vperm.xlu0 %4475, %v4098
  %v4477 = vpop.permute.xlu0 %4476
  %4480 = vset.pattern.permute.xlu0 0
  %4481 = vperm.xlu0 %4480, %v4099
  %v4482 = vpop.permute.xlu0 %4481
  %4485 = vset.pattern.permute.xlu0 0
  %4486 = vperm.xlu0 %4485, %v4100
  %v4487 = vpop.permute.xlu0 %4486
  %4490 = vset.pattern.permute.xlu0 0
  %4491 = vperm.xlu0 %4490, %v4101
  %v4492 = vpop.permute.xlu0 %4491
  %4495 = vset.pattern.permute.xlu0 0
  %4496 = vperm.xlu0 %4495, %v4102
  %v4497 = vpop.permute.xlu0 %4496
  %4500 = vset.pattern.permute.xlu0 0
  %4501 = vperm.xlu0 %4500, %v4103
  %v4502 = vpop.permute.xlu0 %4501
  %4505 = vset.pattern.permute.xlu0 0
  %4506 = vperm.xlu0 %4505, %v4104
  %v4507 = vpop.permute.xlu0 %4506
  %4510 = vset.pattern.permute.xlu0 0
  %4511 = vperm.xlu0 %4510, %v4105
  %v4512 = vpop.permute.xlu0 %4511
  %4515 = vset.pattern.permute.xlu0 0
  %4516 = vperm.xlu0 %4515, %v4106
  %v4517 = vpop.permute.xlu0 %4516
  %4520 = vset.pattern.permute.xlu0 0
  %4521 = vperm.xlu0 %4520, %v4107
  %v4522 = vpop.permute.xlu0 %4521
  %4525 = vset.pattern.permute.xlu0 0
  %4526 = vperm.xlu0 %4525, %v4108
  %v4527 = vpop.permute.xlu0 %4526
  %4530 = vset.pattern.permute.xlu0 0
  %4531 = vperm.xlu0 %4530, %v4109
  %v4532 = vpop.permute.xlu0 %4531
  %4535 = vset.pattern.permute.xlu0 0
  %4536 = vperm.xlu0 %4535, %v4110
  %v4537 = vpop.permute.xlu0 %4536
  %4540 = vset.pattern.permute.xlu0 0
  %4541 = vperm.xlu0 %4540, %v4111
  %v4542 = vpop.permute.xlu0 %4541
  %4545 = vset.pattern.permute.xlu0 0
  %4546 = vperm.xlu0 %4545, %v4112
  %v4547 = vpop.permute.xlu0 %4546
  %4550 = vset.pattern.permute.xlu0 0
  %4551 = vperm.xlu0 %4550, %v4113
  %v4552 = vpop.permute.xlu0 %4551
  %4555 = vset.pattern.permute.xlu0 0
  %4556 = vperm.xlu0 %4555, %v4114
  %v4557 = vpop.permute.xlu0 %4556
  %4560 = vset.pattern.permute.xlu0 0
  %4561 = vperm.xlu0 %4560, %v4115
  %v4562 = vpop.permute.xlu0 %4561
  %4565 = vset.pattern.permute.xlu0 0
  %4566 = vperm.xlu0 %4565, %v4116
  %v4567 = vpop.permute.xlu0 %4566
  %4570 = vset.pattern.permute.xlu0 0
  %4571 = vperm.xlu0 %4570, %v4117
  %v4572 = vpop.permute.xlu0 %4571
  %4575 = vset.pattern.permute.xlu0 0
  %4576 = vperm.xlu0 %4575, %v4118
  %v4577 = vpop.permute.xlu0 %4576
  %4580 = vset.pattern.permute.xlu0 0
  %4581 = vperm.xlu0 %4580, %v4119
  %v4582 = vpop.permute.xlu0 %4581
  %4585 = vset.pattern.permute.xlu0 0
  %4586 = vperm.xlu0 %4585, %v4120
  %v4587 = vpop.permute.xlu0 %4586
  %4590 = vset.pattern.permute.xlu0 0
  %4591 = vperm.xlu0 %4590, %v4121
  %v4592 = vpop.permute.xlu0 %4591
  %4595 = vset.pattern.permute.xlu0 0
  %4596 = vperm.xlu0 %4595, %v4122
  %v4597 = vpop.permute.xlu0 %4596
  %4600 = vset.pattern.permute.xlu0 0
  %4601 = vperm.xlu0 %4600, %v4123
  %v4602 = vpop.permute.xlu0 %4601
  %4605 = vset.pattern.permute.xlu0 0
  %4606 = vperm.xlu0 %4605, %v4124
  %v4607 = vpop.permute.xlu0 %4606
  %4610 = vset.pattern.permute.xlu0 0
  %4611 = vperm.xlu0 %4610, %v4125
  %v4612 = vpop.permute.xlu0 %4611
  %4615 = vset.pattern.permute.xlu0 0
  %4616 = vperm.xlu0 %4615, %v4126
  %v4617 = vpop.permute.xlu0 %4616
  %4620 = vset.pattern.permute.xlu0 0
  %4621 = vperm.xlu0 %4620, %v4127
  %v4622 = vpop.permute.xlu0 %4621
  %4625 = vset.pattern.permute.xlu0 0
  %4626 = vperm.xlu0 %4625, %v4128
  %v4627 = vpop.permute.xlu0 %4626
  %4630 = vset.pattern.permute.xlu0 0
  %4631 = vperm.xlu0 %4630, %v4129
  %v4632 = vpop.permute.xlu0 %4631
  %4635 = vset.pattern.permute.xlu0 0
  %4636 = vperm.xlu0 %4635, %v4130
  %v4637 = vpop.permute.xlu0 %4636
  %4640 = vset.pattern.permute.xlu0 0
  %4641 = vperm.xlu0 %4640, %v4131
  %v4642 = vpop.permute.xlu0 %4641
  %4645 = vset.pattern.permute.xlu0 0
  %4646 = vperm.xlu0 %4645, %v4132
  %v4647 = vpop.permute.xlu0 %4646
  %4650 = vset.pattern.permute.xlu0 0
  %4651 = vperm.xlu0 %4650, %v4133
  %v4652 = vpop.permute.xlu0 %4651
  %4655 = vset.pattern.permute.xlu0 0
  %4656 = vperm.xlu0 %4655, %v4134
  %v4657 = vpop.permute.xlu0 %4656
  %4660 = vset.pattern.permute.xlu0 0
  %4661 = vperm.xlu0 %4660, %v4135
  %v4662 = vpop.permute.xlu0 %4661
  %4665 = vset.pattern.permute.xlu0 0
  %4666 = vperm.xlu0 %4665, %v4136
  %v4667 = vpop.permute.xlu0 %4666
  %4670 = vset.pattern.permute.xlu0 0
  %4671 = vperm.xlu0 %4670, %v4137
  %v4672 = vpop.permute.xlu0 %4671
  %4675 = vset.pattern.permute.xlu0 0
  %4676 = vperm.xlu0 %4675, %v4138
  %v4677 = vpop.permute.xlu0 %4676
  %4680 = vset.pattern.permute.xlu0 0
  %4681 = vperm.xlu0 %4680, %v4139
  %v4682 = vpop.permute.xlu0 %4681
  %4685 = vset.pattern.permute.xlu0 0
  %4686 = vperm.xlu0 %4685, %v4140
  %v4687 = vpop.permute.xlu0 %4686
  %4690 = vset.pattern.permute.xlu0 0
  %4691 = vperm.xlu0 %4690, %v4141
  %v4692 = vpop.permute.xlu0 %4691
  %4695 = vset.pattern.permute.xlu0 0
  %4696 = vperm.xlu0 %4695, %v4142
  %v4697 = vpop.permute.xlu0 %4696
  %4700 = vset.pattern.permute.xlu0 0
  %4701 = vperm.xlu0 %4700, %v4143
  %v4702 = vpop.permute.xlu0 %4701
  %4705 = vset.pattern.permute.xlu0 0
  %4706 = vperm.xlu0 %4705, %v4144
  %v4707 = vpop.permute.xlu0 %4706
  %4710 = vset.pattern.permute.xlu0 0
  %4711 = vperm.xlu0 %4710, %v4145
  %v4712 = vpop.permute.xlu0 %4711
  %4715 = vset.pattern.permute.xlu0 0
  %4716 = vperm.xlu0 %4715, %v4146
  %v4717 = vpop.permute.xlu0 %4716
  %4720 = vset.pattern.permute.xlu0 0
  %4721 = vperm.xlu0 %4720, %v4147
  %v4722 = vpop.permute.xlu0 %4721
  %4725 = vset.pattern.permute.xlu0 0
  %4726 = vperm.xlu0 %4725, %v4148
  %v4727 = vpop.permute.xlu0 %4726
  %4730 = vset.pattern.permute.xlu0 0
  %4731 = vperm.xlu0 %4730, %v4149
  %v4732 = vpop.permute.xlu0 %4731
  %4735 = vset.pattern.permute.xlu0 0
  %4736 = vperm.xlu0 %4735, %v4150
  %v4737 = vpop.permute.xlu0 %4736
  %4740 = vset.pattern.permute.xlu0 0
  %4741 = vperm.xlu0 %4740, %v4151
  %v4742 = vpop.permute.xlu0 %4741
  %4745 = vset.pattern.permute.xlu0 0
  %4746 = vperm.xlu0 %4745, %v4152
  %v4747 = vpop.permute.xlu0 %4746
  %4750 = vset.pattern.permute.xlu0 0
  %4751 = vperm.xlu0 %4750, %v4153
  %v4752 = vpop.permute.xlu0 %4751
  %4755 = vset.pattern.permute.xlu0 0
  %4756 = vperm.xlu0 %4755, %v4154
  %v4757 = vpop.permute.xlu0 %4756
  %4760 = vset.pattern.permute.xlu0 0
  %4761 = vperm.xlu0 %4760, %v4155
  %v4762 = vpop.permute.xlu0 %4761
  %4765 = vset.pattern.permute.xlu0 0
  %4766 = vperm.xlu0 %4765, %v4156
  %v4767 = vpop.permute.xlu0 %4766
  %4770 = vset.pattern.permute.xlu0 0
  %4771 = vperm.xlu0 %4770, %v4157
  %v4772 = vpop.permute.xlu0 %4771
  %4775 = vset.pattern.permute.xlu0 0
  %4776 = vperm.xlu0 %4775, %v4158
  %v4777 = vpop.permute.xlu0 %4776
  %4780 = vset.pattern.permute.xlu0 0
  %4781 = vperm.xlu0 %4780, %v4159
  %v4782 = vpop.permute.xlu0 %4781
  %4785 = vset.pattern.permute.xlu0 0
  %4786 = vperm.xlu0 %4785, %v4160
  %v4787 = vpop.permute.xlu0 %4786
  %4790 = vset.pattern.permute.xlu0 0
  %4791 = vperm.xlu0 %4790, %v4161
  %v4792 = vpop.permute.xlu0 %4791
  %4795 = vset.pattern.permute.xlu0 0
  %4796 = vperm.xlu0 %4795, %v4162
  %v4797 = vpop.permute.xlu0 %4796
  %4800 = vset.pattern.permute.xlu0 0
  %4801 = vperm.xlu0 %4800, %v4163
  %v4802 = vpop.permute.xlu0 %4801
  %4805 = vset.pattern.permute.xlu0 0
  %4806 = vperm.xlu0 %4805, %v4164
  %v4807 = vpop.permute.xlu0 %4806
  %4810 = vset.pattern.permute.xlu0 0
  %4811 = vperm.xlu0 %4810, %v4165
  %v4812 = vpop.permute.xlu0 %4811
  %4815 = vset.pattern.permute.xlu0 0
  %4816 = vperm.xlu0 %4815, %v4166
  %v4817 = vpop.permute.xlu0 %4816
  %4820 = vset.pattern.permute.xlu0 0
  %4821 = vperm.xlu0 %4820, %v4167
  %v4822 = vpop.permute.xlu0 %4821
  %4825 = vset.pattern.permute.xlu0 0
  %4826 = vperm.xlu0 %4825, %v4168
  %v4827 = vpop.permute.xlu0 %4826
  %4830 = vset.pattern.permute.xlu0 0
  %4831 = vperm.xlu0 %4830, %v4169
  %v4832 = vpop.permute.xlu0 %4831
  %4835 = vset.pattern.permute.xlu0 0
  %4836 = vperm.xlu0 %4835, %v4170
  %v4837 = vpop.permute.xlu0 %4836
  %4840 = vset.pattern.permute.xlu0 0
  %4841 = vperm.xlu0 %4840, %v4171
  %v4842 = vpop.permute.xlu0 %4841
  %4845 = vset.pattern.permute.xlu0 0
  %4846 = vperm.xlu0 %4845, %v4172
  %v4847 = vpop.permute.xlu0 %4846
  %4850 = vset.pattern.permute.xlu0 0
  %4851 = vperm.xlu0 %4850, %v4173
  %v4852 = vpop.permute.xlu0 %4851
  %4855 = vset.pattern.permute.xlu0 0
  %4856 = vperm.xlu0 %4855, %v4174
  %v4857 = vpop.permute.xlu0 %4856
  %4860 = vset.pattern.permute.xlu0 0
  %4861 = vperm.xlu0 %4860, %v4175
  %v4862 = vpop.permute.xlu0 %4861
  %4865 = vset.pattern.permute.xlu0 0
  %4866 = vperm.xlu0 %4865, %v4176
  %v4867 = vpop.permute.xlu0 %4866
  %4870 = vset.pattern.permute.xlu0 0
  %4871 = vperm.xlu0 %4870, %v4177
  %v4872 = vpop.permute.xlu0 %4871
  %4875 = vset.pattern.permute.xlu0 0
  %4876 = vperm.xlu0 %4875, %v4178
  %v4877 = vpop.permute.xlu0 %4876
  %4880 = vset.pattern.permute.xlu0 0
  %4881 = vperm.xlu0 %4880, %v4179
  %v4882 = vpop.permute.xlu0 %4881
  %4885 = vset.pattern.permute.xlu0 0
  %4886 = vperm.xlu0 %4885, %v4180
  %v4887 = vpop.permute.xlu0 %4886
  %4890 = vset.pattern.permute.xlu0 0
  %4891 = vperm.xlu0 %4890, %v4181
  %v4892 = vpop.permute.xlu0 %4891
  %4895 = vset.pattern.permute.xlu0 0
  %4896 = vperm.xlu0 %4895, %v4182
  %v4897 = vpop.permute.xlu0 %4896
  %4900 = vset.pattern.permute.xlu0 0
  %4901 = vperm.xlu0 %4900, %v4183
  %v4902 = vpop.permute.xlu0 %4901
  %v4904 = vmul.f32 %v1108, %v4457
  %v4905 = vmul.f32 %v1395, %v4457
  %v4906 = vmul.f32 %v1111, %v4462
  %v4907 = vmul.f32 %v1398, %v4462
  %v4908 = vmul.f32 %v1114, %v4467
  %v4909 = vmul.f32 %v1401, %v4467
  %v4910 = vmul.f32 %v1117, %v4472
  %v4911 = vmul.f32 %v1404, %v4472
  %v4912 = vmul.f32 %v1120, %v4477
  %v4913 = vmul.f32 %v1407, %v4477
  %v4914 = vmul.f32 %v1123, %v4482
  %v4915 = vmul.f32 %v1410, %v4482
  %v4916 = vmul.f32 %v1126, %v4487
  %v4917 = vmul.f32 %v1413, %v4487
  %v4918 = vmul.f32 %v1129, %v4492
  %v4919 = vmul.f32 %v1416, %v4492
  %v4920 = vmul.f32 %v1132, %v4497
  %v4921 = vmul.f32 %v1419, %v4497
  %v4922 = vmul.f32 %v1135, %v4502
  %v4923 = vmul.f32 %v1422, %v4502
  %v4924 = vmul.f32 %v1138, %v4507
  %v4925 = vmul.f32 %v1425, %v4507
  %v4926 = vmul.f32 %v1141, %v4512
  %v4927 = vmul.f32 %v1428, %v4512
  %v4928 = vmul.f32 %v1144, %v4517
  %v4929 = vmul.f32 %v1431, %v4517
  %v4930 = vmul.f32 %v1147, %v4522
  %v4931 = vmul.f32 %v1434, %v4522
  %v4932 = vmul.f32 %v1150, %v4527
  %v4933 = vmul.f32 %v1437, %v4527
  %v4934 = vmul.f32 %v1153, %v4532
  %v4935 = vmul.f32 %v1440, %v4532
  %v4936 = vmul.f32 %v1156, %v4537
  %v4937 = vmul.f32 %v1443, %v4537
  %v4938 = vmul.f32 %v1159, %v4542
  %v4939 = vmul.f32 %v1446, %v4542
  %v4940 = vmul.f32 %v1162, %v4547
  %v4941 = vmul.f32 %v1449, %v4547
  %v4942 = vmul.f32 %v1165, %v4552
  %v4943 = vmul.f32 %v1452, %v4552
  %v4944 = vmul.f32 %v1168, %v4557
  %v4945 = vmul.f32 %v1455, %v4557
  %v4946 = vmul.f32 %v1171, %v4562
  %v4947 = vmul.f32 %v1458, %v4562
  %v4948 = vmul.f32 %v1174, %v4567
  %v4949 = vmul.f32 %v1461, %v4567
  %v4950 = vmul.f32 %v1177, %v4572
  %v4951 = vmul.f32 %v1464, %v4572
  %v4952 = vmul.f32 %v1180, %v4577
  %v4953 = vmul.f32 %v1467, %v4577
  %v4954 = vmul.f32 %v1183, %v4582
  %v4955 = vmul.f32 %v1470, %v4582
  %v4956 = vmul.f32 %v1186, %v4587
  %v4957 = vmul.f32 %v1473, %v4587
  %v4958 = vmul.f32 %v1189, %v4592
  %v4959 = vmul.f32 %v1476, %v4592
  %v4960 = vmul.f32 %v1192, %v4597
  %v4961 = vmul.f32 %v1479, %v4597
  %v4962 = vmul.f32 %v1195, %v4602
  %v4963 = vmul.f32 %v1482, %v4602
  %v4964 = vmul.f32 %v1198, %v4607
  %v4965 = vmul.f32 %v1485, %v4607
  %v4966 = vmul.f32 %v1201, %v4612
  %v4967 = vmul.f32 %v1488, %v4612
  %v4968 = vmul.f32 %v1204, %v4617
  %v4969 = vmul.f32 %v1491, %v4617
  %v4970 = vmul.f32 %v1207, %v4622
  %v4971 = vmul.f32 %v1494, %v4622
  %v4972 = vmul.f32 %v1210, %v4627
  %v4973 = vmul.f32 %v1497, %v4627
  %v4974 = vmul.f32 %v1213, %v4632
  %v4975 = vmul.f32 %v1500, %v4632
  %v4976 = vmul.f32 %v1216, %v4637
  %v4977 = vmul.f32 %v1503, %v4637
  %v4978 = vmul.f32 %v1219, %v4642
  %v4979 = vmul.f32 %v1506, %v4642
  %v4980 = vmul.f32 %v1222, %v4647
  %v4981 = vmul.f32 %v1509, %v4647
  %v4982 = vmul.f32 %v1225, %v4652
  %v4983 = vmul.f32 %v1512, %v4652
  %v4984 = vmul.f32 %v1228, %v4657
  %v4985 = vmul.f32 %v1515, %v4657
  %v4986 = vmul.f32 %v1231, %v4662
  %v4987 = vmul.f32 %v1518, %v4662
  %v4988 = vmul.f32 %v1234, %v4667
  %v4989 = vmul.f32 %v1521, %v4667
  %v4990 = vmul.f32 %v1237, %v4672
  %v4991 = vmul.f32 %v1524, %v4672
  %v4992 = vmul.f32 %v1240, %v4677
  %v4993 = vmul.f32 %v1527, %v4677
  %v4994 = vmul.f32 %v1243, %v4682
  %v4995 = vmul.f32 %v1530, %v4682
  %v4996 = vmul.f32 %v1246, %v4687
  %v4997 = vmul.f32 %v1533, %v4687
  %v4998 = vmul.f32 %v1249, %v4692
  %v4999 = vmul.f32 %v1536, %v4692
  %v5000 = vmul.f32 %v1252, %v4697
  %v5001 = vmul.f32 %v1539, %v4697
  %v5002 = vmul.f32 %v1255, %v4702
  %v5003 = vmul.f32 %v1542, %v4702
  %v5004 = vmul.f32 %v1258, %v4707
  %v5005 = vmul.f32 %v1545, %v4707
  %v5006 = vmul.f32 %v1261, %v4712
  %v5007 = vmul.f32 %v1548, %v4712
  %v5008 = vmul.f32 %v1264, %v4717
  %v5009 = vmul.f32 %v1551, %v4717
  %v5010 = vmul.f32 %v1267, %v4722
  %v5011 = vmul.f32 %v1554, %v4722
  %v5012 = vmul.f32 %v1270, %v4727
  %v5013 = vmul.f32 %v1557, %v4727
  %v5014 = vmul.f32 %v1273, %v4732
  %v5015 = vmul.f32 %v1560, %v4732
  %v5016 = vmul.f32 %v1276, %v4737
  %v5017 = vmul.f32 %v1563, %v4737
  %v5018 = vmul.f32 %v1279, %v4742
  %v5019 = vmul.f32 %v1566, %v4742
  %v5020 = vmul.f32 %v1282, %v4747
  %v5021 = vmul.f32 %v1569, %v4747
  %v5022 = vmul.f32 %v1285, %v4752
  %v5023 = vmul.f32 %v1572, %v4752
  %v5024 = vmul.f32 %v1288, %v4757
  %v5025 = vmul.f32 %v1575, %v4757
  %v5026 = vmul.f32 %v1291, %v4762
  %v5027 = vmul.f32 %v1578, %v4762
  %v5028 = vmul.f32 %v1294, %v4767
  %v5029 = vmul.f32 %v1581, %v4767
  %v5030 = vmul.f32 %v1297, %v4772
  %v5031 = vmul.f32 %v1584, %v4772
  %v5032 = vmul.f32 %v1300, %v4777
  %v5033 = vmul.f32 %v1587, %v4777
  %v5034 = vmul.f32 %v1303, %v4782
  %v5035 = vmul.f32 %v1590, %v4782
  %v5036 = vmul.f32 %v1306, %v4787
  %v5037 = vmul.f32 %v1593, %v4787
  %v5038 = vmul.f32 %v1309, %v4792
  %v5039 = vmul.f32 %v1596, %v4792
  %v5040 = vmul.f32 %v1312, %v4797
  %v5041 = vmul.f32 %v1599, %v4797
  %v5042 = vmul.f32 %v1315, %v4802
  %v5043 = vmul.f32 %v1602, %v4802
  %v5044 = vmul.f32 %v1318, %v4807
  %v5045 = vmul.f32 %v1605, %v4807
  %v5046 = vmul.f32 %v1321, %v4812
  %v5047 = vmul.f32 %v1608, %v4812
  %v5048 = vmul.f32 %v1324, %v4817
  %v5049 = vmul.f32 %v1611, %v4817
  %v5050 = vmul.f32 %v1327, %v4822
  %v5051 = vmul.f32 %v1614, %v4822
  %v5052 = vmul.f32 %v1330, %v4827
  %v5053 = vmul.f32 %v1617, %v4827
  %v5054 = vmul.f32 %v1333, %v4832
  %v5055 = vmul.f32 %v1620, %v4832
  %v5056 = vmul.f32 %v1336, %v4837
  %v5057 = vmul.f32 %v1623, %v4837
  %v5058 = vmul.f32 %v1339, %v4842
  %v5059 = vmul.f32 %v1626, %v4842
  %v5060 = vmul.f32 %v1342, %v4847
  %v5061 = vmul.f32 %v1629, %v4847
  %v5062 = vmul.f32 %v1345, %v4852
  %v5063 = vmul.f32 %v1632, %v4852
  %v5064 = vmul.f32 %v1348, %v4857
  %v5065 = vmul.f32 %v1635, %v4857
  %v5066 = vmul.f32 %v1351, %v4862
  %v5067 = vmul.f32 %v1638, %v4862
  %v5068 = vmul.f32 %v1354, %v4867
  %v5069 = vmul.f32 %v1641, %v4867
  %v5070 = vmul.f32 %v1357, %v4872
  %v5071 = vmul.f32 %v1644, %v4872
  %v5072 = vmul.f32 %v1360, %v4877
  %v5073 = vmul.f32 %v1647, %v4877
  %v5074 = vmul.f32 %v1363, %v4882
  %v5075 = vmul.f32 %v1650, %v4882
  %v5076 = vmul.f32 %v1366, %v4887
  %v5077 = vmul.f32 %v1653, %v4887
  %v5078 = vmul.f32 %v1369, %v4892
  %v5079 = vmul.f32 %v1656, %v4892
  %v5080 = vmul.f32 %v1372, %v4897
  %v5081 = vmul.f32 %v1659, %v4897
  %v5082 = vmul.f32 %v1375, %v4902
  %v5083 = vmul.f32 %v1662, %v4902
  %5085 = vset.pattern.permute.xlu0 0
  %5086 = vperm.xlu0 %5085, %v4364
  %v5087 = vpop.permute.xlu0 %5086
  %5090 = vset.pattern.permute.xlu0 0
  %5091 = vperm.xlu0 %5090, %v4365
  %v5092 = vpop.permute.xlu0 %5091
  %5095 = vset.pattern.permute.xlu0 0
  %5096 = vperm.xlu0 %5095, %v4366
  %v5097 = vpop.permute.xlu0 %5096
  %5100 = vset.pattern.permute.xlu0 0
  %5101 = vperm.xlu0 %5100, %v4367
  %v5102 = vpop.permute.xlu0 %5101
  %5105 = vset.pattern.permute.xlu0 0
  %5106 = vperm.xlu0 %5105, %v4368
  %v5107 = vpop.permute.xlu0 %5106
  %5110 = vset.pattern.permute.xlu0 0
  %5111 = vperm.xlu0 %5110, %v4369
  %v5112 = vpop.permute.xlu0 %5111
  %5115 = vset.pattern.permute.xlu0 0
  %5116 = vperm.xlu0 %5115, %v4370
  %v5117 = vpop.permute.xlu0 %5116
  %5120 = vset.pattern.permute.xlu0 0
  %5121 = vperm.xlu0 %5120, %v4371
  %v5122 = vpop.permute.xlu0 %5121
  %5125 = vset.pattern.permute.xlu0 0
  %5126 = vperm.xlu0 %5125, %v4372
  %v5127 = vpop.permute.xlu0 %5126
  %5130 = vset.pattern.permute.xlu0 0
  %5131 = vperm.xlu0 %5130, %v4373
  %v5132 = vpop.permute.xlu0 %5131
  %5135 = vset.pattern.permute.xlu0 0
  %5136 = vperm.xlu0 %5135, %v4374
  %v5137 = vpop.permute.xlu0 %5136
  %5140 = vset.pattern.permute.xlu0 0
  %5141 = vperm.xlu0 %5140, %v4375
  %v5142 = vpop.permute.xlu0 %5141
  %5145 = vset.pattern.permute.xlu0 0
  %5146 = vperm.xlu0 %5145, %v4376
  %v5147 = vpop.permute.xlu0 %5146
  %5150 = vset.pattern.permute.xlu0 0
  %5151 = vperm.xlu0 %5150, %v4377
  %v5152 = vpop.permute.xlu0 %5151
  %5155 = vset.pattern.permute.xlu0 0
  %5156 = vperm.xlu0 %5155, %v4378
  %v5157 = vpop.permute.xlu0 %5156
  %5160 = vset.pattern.permute.xlu0 0
  %5161 = vperm.xlu0 %5160, %v4379
  %v5162 = vpop.permute.xlu0 %5161
  %5165 = vset.pattern.permute.xlu0 0
  %5166 = vperm.xlu0 %5165, %v4380
  %v5167 = vpop.permute.xlu0 %5166
  %5170 = vset.pattern.permute.xlu0 0
  %5171 = vperm.xlu0 %5170, %v4381
  %v5172 = vpop.permute.xlu0 %5171
  %5175 = vset.pattern.permute.xlu0 0
  %5176 = vperm.xlu0 %5175, %v4382
  %v5177 = vpop.permute.xlu0 %5176
  %5180 = vset.pattern.permute.xlu0 0
  %5181 = vperm.xlu0 %5180, %v4383
  %v5182 = vpop.permute.xlu0 %5181
  %5185 = vset.pattern.permute.xlu0 0
  %5186 = vperm.xlu0 %5185, %v4384
  %v5187 = vpop.permute.xlu0 %5186
  %5190 = vset.pattern.permute.xlu0 0
  %5191 = vperm.xlu0 %5190, %v4385
  %v5192 = vpop.permute.xlu0 %5191
  %5195 = vset.pattern.permute.xlu0 0
  %5196 = vperm.xlu0 %5195, %v4386
  %v5197 = vpop.permute.xlu0 %5196
  %5200 = vset.pattern.permute.xlu0 0
  %5201 = vperm.xlu0 %5200, %v4387
  %v5202 = vpop.permute.xlu0 %5201
  %5205 = vset.pattern.permute.xlu0 0
  %5206 = vperm.xlu0 %5205, %v4388
  %v5207 = vpop.permute.xlu0 %5206
  %5210 = vset.pattern.permute.xlu0 0
  %5211 = vperm.xlu0 %5210, %v4389
  %v5212 = vpop.permute.xlu0 %5211
  %5215 = vset.pattern.permute.xlu0 0
  %5216 = vperm.xlu0 %5215, %v4390
  %v5217 = vpop.permute.xlu0 %5216
  %5220 = vset.pattern.permute.xlu0 0
  %5221 = vperm.xlu0 %5220, %v4391
  %v5222 = vpop.permute.xlu0 %5221
  %5225 = vset.pattern.permute.xlu0 0
  %5226 = vperm.xlu0 %5225, %v4392
  %v5227 = vpop.permute.xlu0 %5226
  %5230 = vset.pattern.permute.xlu0 0
  %5231 = vperm.xlu0 %5230, %v4393
  %v5232 = vpop.permute.xlu0 %5231
  %5235 = vset.pattern.permute.xlu0 0
  %5236 = vperm.xlu0 %5235, %v4394
  %v5237 = vpop.permute.xlu0 %5236
  %5240 = vset.pattern.permute.xlu0 0
  %5241 = vperm.xlu0 %5240, %v4395
  %v5242 = vpop.permute.xlu0 %5241
  %5245 = vset.pattern.permute.xlu0 0
  %5246 = vperm.xlu0 %5245, %v4396
  %v5247 = vpop.permute.xlu0 %5246
  %5250 = vset.pattern.permute.xlu0 0
  %5251 = vperm.xlu0 %5250, %v4397
  %v5252 = vpop.permute.xlu0 %5251
  %5255 = vset.pattern.permute.xlu0 0
  %5256 = vperm.xlu0 %5255, %v4398
  %v5257 = vpop.permute.xlu0 %5256
  %5260 = vset.pattern.permute.xlu0 0
  %5261 = vperm.xlu0 %5260, %v4399
  %v5262 = vpop.permute.xlu0 %5261
  %5265 = vset.pattern.permute.xlu0 0
  %5266 = vperm.xlu0 %5265, %v4400
  %v5267 = vpop.permute.xlu0 %5266
  %5270 = vset.pattern.permute.xlu0 0
  %5271 = vperm.xlu0 %5270, %v4401
  %v5272 = vpop.permute.xlu0 %5271
  %5275 = vset.pattern.permute.xlu0 0
  %5276 = vperm.xlu0 %5275, %v4402
  %v5277 = vpop.permute.xlu0 %5276
  %5280 = vset.pattern.permute.xlu0 0
  %5281 = vperm.xlu0 %5280, %v4403
  %v5282 = vpop.permute.xlu0 %5281
  %5285 = vset.pattern.permute.xlu0 0
  %5286 = vperm.xlu0 %5285, %v4404
  %v5287 = vpop.permute.xlu0 %5286
  %5290 = vset.pattern.permute.xlu0 0
  %5291 = vperm.xlu0 %5290, %v4405
  %v5292 = vpop.permute.xlu0 %5291
  %5295 = vset.pattern.permute.xlu0 0
  %5296 = vperm.xlu0 %5295, %v4406
  %v5297 = vpop.permute.xlu0 %5296
  %5300 = vset.pattern.permute.xlu0 0
  %5301 = vperm.xlu0 %5300, %v4407
  %v5302 = vpop.permute.xlu0 %5301
  %5305 = vset.pattern.permute.xlu0 0
  %5306 = vperm.xlu0 %5305, %v4408
  %v5307 = vpop.permute.xlu0 %5306
  %5310 = vset.pattern.permute.xlu0 0
  %5311 = vperm.xlu0 %5310, %v4409
  %v5312 = vpop.permute.xlu0 %5311
  %5315 = vset.pattern.permute.xlu0 0
  %5316 = vperm.xlu0 %5315, %v4410
  %v5317 = vpop.permute.xlu0 %5316
  %5320 = vset.pattern.permute.xlu0 0
  %5321 = vperm.xlu0 %5320, %v4411
  %v5322 = vpop.permute.xlu0 %5321
  %5325 = vset.pattern.permute.xlu0 0
  %5326 = vperm.xlu0 %5325, %v4412
  %v5327 = vpop.permute.xlu0 %5326
  %5330 = vset.pattern.permute.xlu0 0
  %5331 = vperm.xlu0 %5330, %v4413
  %v5332 = vpop.permute.xlu0 %5331
  %5335 = vset.pattern.permute.xlu0 0
  %5336 = vperm.xlu0 %5335, %v4414
  %v5337 = vpop.permute.xlu0 %5336
  %5340 = vset.pattern.permute.xlu0 0
  %5341 = vperm.xlu0 %5340, %v4415
  %v5342 = vpop.permute.xlu0 %5341
  %5345 = vset.pattern.permute.xlu0 0
  %5346 = vperm.xlu0 %5345, %v4416
  %v5347 = vpop.permute.xlu0 %5346
  %5350 = vset.pattern.permute.xlu0 0
  %5351 = vperm.xlu0 %5350, %v4417
  %v5352 = vpop.permute.xlu0 %5351
  %5355 = vset.pattern.permute.xlu0 0
  %5356 = vperm.xlu0 %5355, %v4418
  %v5357 = vpop.permute.xlu0 %5356
  %5360 = vset.pattern.permute.xlu0 0
  %5361 = vperm.xlu0 %5360, %v4419
  %v5362 = vpop.permute.xlu0 %5361
  %5365 = vset.pattern.permute.xlu0 0
  %5366 = vperm.xlu0 %5365, %v4420
  %v5367 = vpop.permute.xlu0 %5366
  %5370 = vset.pattern.permute.xlu0 0
  %5371 = vperm.xlu0 %5370, %v4421
  %v5372 = vpop.permute.xlu0 %5371
  %5375 = vset.pattern.permute.xlu0 0
  %5376 = vperm.xlu0 %5375, %v4422
  %v5377 = vpop.permute.xlu0 %5376
  %5380 = vset.pattern.permute.xlu0 0
  %5381 = vperm.xlu0 %5380, %v4423
  %v5382 = vpop.permute.xlu0 %5381
  %5385 = vset.pattern.permute.xlu0 0
  %5386 = vperm.xlu0 %5385, %v4424
  %v5387 = vpop.permute.xlu0 %5386
  %5390 = vset.pattern.permute.xlu0 0
  %5391 = vperm.xlu0 %5390, %v4425
  %v5392 = vpop.permute.xlu0 %5391
  %5395 = vset.pattern.permute.xlu0 0
  %5396 = vperm.xlu0 %5395, %v4426
  %v5397 = vpop.permute.xlu0 %5396
  %5400 = vset.pattern.permute.xlu0 0
  %5401 = vperm.xlu0 %5400, %v4427
  %v5402 = vpop.permute.xlu0 %5401
  %5405 = vset.pattern.permute.xlu0 0
  %5406 = vperm.xlu0 %5405, %v4428
  %v5407 = vpop.permute.xlu0 %5406
  %5410 = vset.pattern.permute.xlu0 0
  %5411 = vperm.xlu0 %5410, %v4429
  %v5412 = vpop.permute.xlu0 %5411
  %5415 = vset.pattern.permute.xlu0 0
  %5416 = vperm.xlu0 %5415, %v4430
  %v5417 = vpop.permute.xlu0 %5416
  %5420 = vset.pattern.permute.xlu0 0
  %5421 = vperm.xlu0 %5420, %v4431
  %v5422 = vpop.permute.xlu0 %5421
  %5425 = vset.pattern.permute.xlu0 0
  %5426 = vperm.xlu0 %5425, %v4432
  %v5427 = vpop.permute.xlu0 %5426
  %5430 = vset.pattern.permute.xlu0 0
  %5431 = vperm.xlu0 %5430, %v4433
  %v5432 = vpop.permute.xlu0 %5431
  %5435 = vset.pattern.permute.xlu0 0
  %5436 = vperm.xlu0 %5435, %v4434
  %v5437 = vpop.permute.xlu0 %5436
  %5440 = vset.pattern.permute.xlu0 0
  %5441 = vperm.xlu0 %5440, %v4435
  %v5442 = vpop.permute.xlu0 %5441
  %5445 = vset.pattern.permute.xlu0 0
  %5446 = vperm.xlu0 %5445, %v4436
  %v5447 = vpop.permute.xlu0 %5446
  %5450 = vset.pattern.permute.xlu0 0
  %5451 = vperm.xlu0 %5450, %v4437
  %v5452 = vpop.permute.xlu0 %5451
  %5455 = vset.pattern.permute.xlu0 0
  %5456 = vperm.xlu0 %5455, %v4438
  %v5457 = vpop.permute.xlu0 %5456
  %5460 = vset.pattern.permute.xlu0 0
  %5461 = vperm.xlu0 %5460, %v4439
  %v5462 = vpop.permute.xlu0 %5461
  %5465 = vset.pattern.permute.xlu0 0
  %5466 = vperm.xlu0 %5465, %v4440
  %v5467 = vpop.permute.xlu0 %5466
  %5470 = vset.pattern.permute.xlu0 0
  %5471 = vperm.xlu0 %5470, %v4441
  %v5472 = vpop.permute.xlu0 %5471
  %5475 = vset.pattern.permute.xlu0 0
  %5476 = vperm.xlu0 %5475, %v4442
  %v5477 = vpop.permute.xlu0 %5476
  %5480 = vset.pattern.permute.xlu0 0
  %5481 = vperm.xlu0 %5480, %v4443
  %v5482 = vpop.permute.xlu0 %5481
  %5485 = vset.pattern.permute.xlu0 0
  %5486 = vperm.xlu0 %5485, %v4444
  %v5487 = vpop.permute.xlu0 %5486
  %5490 = vset.pattern.permute.xlu0 0
  %5491 = vperm.xlu0 %5490, %v4445
  %v5492 = vpop.permute.xlu0 %5491
  %5495 = vset.pattern.permute.xlu0 0
  %5496 = vperm.xlu0 %5495, %v4446
  %v5497 = vpop.permute.xlu0 %5496
  %5500 = vset.pattern.permute.xlu0 0
  %5501 = vperm.xlu0 %5500, %v4447
  %v5502 = vpop.permute.xlu0 %5501
  %5505 = vset.pattern.permute.xlu0 0
  %5506 = vperm.xlu0 %5505, %v4448
  %v5507 = vpop.permute.xlu0 %5506
  %5510 = vset.pattern.permute.xlu0 0
  %5511 = vperm.xlu0 %5510, %v4449
  %v5512 = vpop.permute.xlu0 %5511
  %5515 = vset.pattern.permute.xlu0 0
  %5516 = vperm.xlu0 %5515, %v4450
  %v5517 = vpop.permute.xlu0 %5516
  %5520 = vset.pattern.permute.xlu0 0
  %5521 = vperm.xlu0 %5520, %v4451
  %v5522 = vpop.permute.xlu0 %5521
  %5525 = vset.pattern.permute.xlu0 0
  %5526 = vperm.xlu0 %5525, %v4452
  %v5527 = vpop.permute.xlu0 %5526
  %5530 = vset.pattern.permute.xlu0 0
  %5531 = vperm.xlu0 %5530, %v4453
  %v5532 = vpop.permute.xlu0 %5531
  %v5534 = vadd.f32 %v4904, %v5087
  %v5535 = vadd.f32 %v4905, %v5087
  %v5536 = vadd.f32 %v4906, %v5092
  %v5537 = vadd.f32 %v4907, %v5092
  %v5538 = vadd.f32 %v4908, %v5097
  %v5539 = vadd.f32 %v4909, %v5097
  %v5540 = vadd.f32 %v4910, %v5102
  %v5541 = vadd.f32 %v4911, %v5102
  %v5542 = vadd.f32 %v4912, %v5107
  %v5543 = vadd.f32 %v4913, %v5107
  %v5544 = vadd.f32 %v4914, %v5112
  %v5545 = vadd.f32 %v4915, %v5112
  %v5546 = vadd.f32 %v4916, %v5117
  %v5547 = vadd.f32 %v4917, %v5117
  %v5548 = vadd.f32 %v4918, %v5122
  %v5549 = vadd.f32 %v4919, %v5122
  %v5550 = vadd.f32 %v4920, %v5127
  %v5551 = vadd.f32 %v4921, %v5127
  %v5552 = vadd.f32 %v4922, %v5132
  %v5553 = vadd.f32 %v4923, %v5132
  %v5554 = vadd.f32 %v4924, %v5137
  %v5555 = vadd.f32 %v4925, %v5137
  %v5556 = vadd.f32 %v4926, %v5142
  %v5557 = vadd.f32 %v4927, %v5142
  %v5558 = vadd.f32 %v4928, %v5147
  %v5559 = vadd.f32 %v4929, %v5147
  %v5560 = vadd.f32 %v4930, %v5152
  %v5561 = vadd.f32 %v4931, %v5152
  %v5562 = vadd.f32 %v4932, %v5157
  %v5563 = vadd.f32 %v4933, %v5157
  %v5564 = vadd.f32 %v4934, %v5162
  %v5565 = vadd.f32 %v4935, %v5162
  %v5566 = vadd.f32 %v4936, %v5167
  %v5567 = vadd.f32 %v4937, %v5167
  %v5568 = vadd.f32 %v4938, %v5172
  %v5569 = vadd.f32 %v4939, %v5172
  %v5570 = vadd.f32 %v4940, %v5177
  %v5571 = vadd.f32 %v4941, %v5177
  %v5572 = vadd.f32 %v4942, %v5182
  %v5573 = vadd.f32 %v4943, %v5182
  %v5574 = vadd.f32 %v4944, %v5187
  %v5575 = vadd.f32 %v4945, %v5187
  %v5576 = vadd.f32 %v4946, %v5192
  %v5577 = vadd.f32 %v4947, %v5192
  %v5578 = vadd.f32 %v4948, %v5197
  %v5579 = vadd.f32 %v4949, %v5197
  %v5580 = vadd.f32 %v4950, %v5202
  %v5581 = vadd.f32 %v4951, %v5202
  %v5582 = vadd.f32 %v4952, %v5207
  %v5583 = vadd.f32 %v4953, %v5207
  %v5584 = vadd.f32 %v4954, %v5212
  %v5585 = vadd.f32 %v4955, %v5212
  %v5586 = vadd.f32 %v4956, %v5217
  %v5587 = vadd.f32 %v4957, %v5217
  %v5588 = vadd.f32 %v4958, %v5222
  %v5589 = vadd.f32 %v4959, %v5222
  %v5590 = vadd.f32 %v4960, %v5227
  %v5591 = vadd.f32 %v4961, %v5227
  %v5592 = vadd.f32 %v4962, %v5232
  %v5593 = vadd.f32 %v4963, %v5232
  %v5594 = vadd.f32 %v4964, %v5237
  %v5595 = vadd.f32 %v4965, %v5237
  %v5596 = vadd.f32 %v4966, %v5242
  %v5597 = vadd.f32 %v4967, %v5242
  %v5598 = vadd.f32 %v4968, %v5247
  %v5599 = vadd.f32 %v4969, %v5247
  %v5600 = vadd.f32 %v4970, %v5252
  %v5601 = vadd.f32 %v4971, %v5252
  %v5602 = vadd.f32 %v4972, %v5257
  %v5603 = vadd.f32 %v4973, %v5257
  %v5604 = vadd.f32 %v4974, %v5262
  %v5605 = vadd.f32 %v4975, %v5262
  %v5606 = vadd.f32 %v4976, %v5267
  %v5607 = vadd.f32 %v4977, %v5267
  %v5608 = vadd.f32 %v4978, %v5272
  %v5609 = vadd.f32 %v4979, %v5272
  %v5610 = vadd.f32 %v4980, %v5277
  %v5611 = vadd.f32 %v4981, %v5277
  %v5612 = vadd.f32 %v4982, %v5282
  %v5613 = vadd.f32 %v4983, %v5282
  %v5614 = vadd.f32 %v4984, %v5287
  %v5615 = vadd.f32 %v4985, %v5287
  %v5616 = vadd.f32 %v4986, %v5292
  %v5617 = vadd.f32 %v4987, %v5292
  %v5618 = vadd.f32 %v4988, %v5297
  %v5619 = vadd.f32 %v4989, %v5297
  %v5620 = vadd.f32 %v4990, %v5302
  %v5621 = vadd.f32 %v4991, %v5302
  %v5622 = vadd.f32 %v4992, %v5307
  %v5623 = vadd.f32 %v4993, %v5307
  %v5624 = vadd.f32 %v4994, %v5312
  %v5625 = vadd.f32 %v4995, %v5312
  %v5626 = vadd.f32 %v4996, %v5317
  %v5627 = vadd.f32 %v4997, %v5317
  %v5628 = vadd.f32 %v4998, %v5322
  %v5629 = vadd.f32 %v4999, %v5322
  %v5630 = vadd.f32 %v5000, %v5327
  %v5631 = vadd.f32 %v5001, %v5327
  %v5632 = vadd.f32 %v5002, %v5332
  %v5633 = vadd.f32 %v5003, %v5332
  %v5634 = vadd.f32 %v5004, %v5337
  %v5635 = vadd.f32 %v5005, %v5337
  %v5636 = vadd.f32 %v5006, %v5342
  %v5637 = vadd.f32 %v5007, %v5342
  %v5638 = vadd.f32 %v5008, %v5347
  %v5639 = vadd.f32 %v5009, %v5347
  %v5640 = vadd.f32 %v5010, %v5352
  %v5641 = vadd.f32 %v5011, %v5352
  %v5642 = vadd.f32 %v5012, %v5357
  %v5643 = vadd.f32 %v5013, %v5357
  %v5644 = vadd.f32 %v5014, %v5362
  %v5645 = vadd.f32 %v5015, %v5362
  %v5646 = vadd.f32 %v5016, %v5367
  %v5647 = vadd.f32 %v5017, %v5367
  %v5648 = vadd.f32 %v5018, %v5372
  %v5649 = vadd.f32 %v5019, %v5372
  %v5650 = vadd.f32 %v5020, %v5377
  %v5651 = vadd.f32 %v5021, %v5377
  %v5652 = vadd.f32 %v5022, %v5382
  %v5653 = vadd.f32 %v5023, %v5382
  %v5654 = vadd.f32 %v5024, %v5387
  %v5655 = vadd.f32 %v5025, %v5387
  %v5656 = vadd.f32 %v5026, %v5392
  %v5657 = vadd.f32 %v5027, %v5392
  %v5658 = vadd.f32 %v5028, %v5397
  %v5659 = vadd.f32 %v5029, %v5397
  %v5660 = vadd.f32 %v5030, %v5402
  %v5661 = vadd.f32 %v5031, %v5402
  %v5662 = vadd.f32 %v5032, %v5407
  %v5663 = vadd.f32 %v5033, %v5407
  %v5664 = vadd.f32 %v5034, %v5412
  %v5665 = vadd.f32 %v5035, %v5412
  %v5666 = vadd.f32 %v5036, %v5417
  %v5667 = vadd.f32 %v5037, %v5417
  %v5668 = vadd.f32 %v5038, %v5422
  %v5669 = vadd.f32 %v5039, %v5422
  %v5670 = vadd.f32 %v5040, %v5427
  %v5671 = vadd.f32 %v5041, %v5427
  %v5672 = vadd.f32 %v5042, %v5432
  %v5673 = vadd.f32 %v5043, %v5432
  %v5674 = vadd.f32 %v5044, %v5437
  %v5675 = vadd.f32 %v5045, %v5437
  %v5676 = vadd.f32 %v5046, %v5442
  %v5677 = vadd.f32 %v5047, %v5442
  %v5678 = vadd.f32 %v5048, %v5447
  %v5679 = vadd.f32 %v5049, %v5447
  %v5680 = vadd.f32 %v5050, %v5452
  %v5681 = vadd.f32 %v5051, %v5452
  %v5682 = vadd.f32 %v5052, %v5457
  %v5683 = vadd.f32 %v5053, %v5457
  %v5684 = vadd.f32 %v5054, %v5462
  %v5685 = vadd.f32 %v5055, %v5462
  %v5686 = vadd.f32 %v5056, %v5467
  %v5687 = vadd.f32 %v5057, %v5467
  %v5688 = vadd.f32 %v5058, %v5472
  %v5689 = vadd.f32 %v5059, %v5472
  %v5690 = vadd.f32 %v5060, %v5477
  %v5691 = vadd.f32 %v5061, %v5477
  %v5692 = vadd.f32 %v5062, %v5482
  %v5693 = vadd.f32 %v5063, %v5482
  %v5694 = vadd.f32 %v5064, %v5487
  %v5695 = vadd.f32 %v5065, %v5487
  %v5696 = vadd.f32 %v5066, %v5492
  %v5697 = vadd.f32 %v5067, %v5492
  %v5698 = vadd.f32 %v5068, %v5497
  %v5699 = vadd.f32 %v5069, %v5497
  %v5700 = vadd.f32 %v5070, %v5502
  %v5701 = vadd.f32 %v5071, %v5502
  %v5702 = vadd.f32 %v5072, %v5507
  %v5703 = vadd.f32 %v5073, %v5507
  %v5704 = vadd.f32 %v5074, %v5512
  %v5705 = vadd.f32 %v5075, %v5512
  %v5706 = vadd.f32 %v5076, %v5517
  %v5707 = vadd.f32 %v5077, %v5517
  %v5708 = vadd.f32 %v5078, %v5522
  %v5709 = vadd.f32 %v5079, %v5522
  %v5710 = vadd.f32 %v5080, %v5527
  %v5711 = vadd.f32 %v5081, %v5527
  %v5712 = vadd.f32 %v5082, %v5532
  %v5713 = vadd.f32 %v5083, %v5532
  %5714 = vst [vmem:[%s6] sm:$0xff] %v5534
  %5715 = vst.msk [vmem:[%s6 + $0x8] sm:$0xff] %vm53, %v5535
  %5716 = vst [vmem:[%s6 + $0x10] sm:$0xff] %v5536
  %5717 = vst.msk [vmem:[%s6 + $0x18] sm:$0xff] %vm53, %v5537
  %5718 = vst [vmem:[%s6 + $0x20] sm:$0xff] %v5538
  %5719 = vst.msk [vmem:[%s6 + $0x28] sm:$0xff] %vm53, %v5539
  %5720 = vst [vmem:[%s6 + $0x30] sm:$0xff] %v5540
  %5721 = vst.msk [vmem:[%s6 + $0x38] sm:$0xff] %vm53, %v5541
  %5722 = vst [vmem:[%s6 + $0x40] sm:$0xff] %v5542
  %5723 = vst.msk [vmem:[%s6 + $0x48] sm:$0xff] %vm53, %v5543
  %5724 = vst [vmem:[%s6 + $0x50] sm:$0xff] %v5544
  %5725 = vst.msk [vmem:[%s6 + $0x58] sm:$0xff] %vm53, %v5545
  %5726 = vst [vmem:[%s6 + $0x60] sm:$0xff] %v5546
  %5727 = vst.msk [vmem:[%s6 + $0x68] sm:$0xff] %vm53, %v5547
  %5728 = vst [vmem:[%s6 + $0x70] sm:$0xff] %v5548
  %5729 = vst.msk [vmem:[%s6 + $0x78] sm:$0xff] %vm53, %v5549
  %5730 = vst [vmem:[%s6 + $0x80] sm:$0xff] %v5550
  %5731 = vst.msk [vmem:[%s6 + $0x88] sm:$0xff] %vm53, %v5551
  %5732 = vst [vmem:[%s6 + $0x90] sm:$0xff] %v5552
  %5733 = vst.msk [vmem:[%s6 + $0x98] sm:$0xff] %vm53, %v5553
  %5734 = vst [vmem:[%s6 + $0xa0] sm:$0xff] %v5554
  %5735 = vst.msk [vmem:[%s6 + $0xa8] sm:$0xff] %vm53, %v5555
  %5736 = vst [vmem:[%s6 + $0xb0] sm:$0xff] %v5556
  %5737 = vst.msk [vmem:[%s6 + $0xb8] sm:$0xff] %vm53, %v5557
  %5738 = vst [vmem:[%s6 + $0xc0] sm:$0xff] %v5558
  %5739 = vst.msk [vmem:[%s6 + $0xc8] sm:$0xff] %vm53, %v5559
  %5740 = vst [vmem:[%s6 + $0xd0] sm:$0xff] %v5560
  %5741 = vst.msk [vmem:[%s6 + $0xd8] sm:$0xff] %vm53, %v5561
  %5742 = vst [vmem:[%s6 + $0xe0] sm:$0xff] %v5562
  %5743 = vst.msk [vmem:[%s6 + $0xe8] sm:$0xff] %vm53, %v5563
  %5744 = vst [vmem:[%s6 + $0xf0] sm:$0xff] %v5564
  %5745 = vst.msk [vmem:[%s6 + $0xf8] sm:$0xff] %vm53, %v5565
  %5746 = vst [vmem:[%s6 + $0x100] sm:$0xff] %v5566
  %5747 = vst.msk [vmem:[%s6 + $0x108] sm:$0xff] %vm53, %v5567
  %5748 = vst [vmem:[%s6 + $0x110] sm:$0xff] %v5568
  %5749 = vst.msk [vmem:[%s6 + $0x118] sm:$0xff] %vm53, %v5569
  %5750 = vst [vmem:[%s6 + $0x120] sm:$0xff] %v5570
  %5751 = vst.msk [vmem:[%s6 + $0x128] sm:$0xff] %vm53, %v5571
  %5752 = vst [vmem:[%s6 + $0x130] sm:$0xff] %v5572
  %5753 = vst.msk [vmem:[%s6 + $0x138] sm:$0xff] %vm53, %v5573
  %5754 = vst [vmem:[%s6 + $0x140] sm:$0xff] %v5574
  %5755 = vst.msk [vmem:[%s6 + $0x148] sm:$0xff] %vm53, %v5575
  %5756 = vst [vmem:[%s6 + $0x150] sm:$0xff] %v5576
  %5757 = vst.msk [vmem:[%s6 + $0x158] sm:$0xff] %vm53, %v5577
  %5758 = vst [vmem:[%s6 + $0x160] sm:$0xff] %v5578
  %5759 = vst.msk [vmem:[%s6 + $0x168] sm:$0xff] %vm53, %v5579
  %5760 = vst [vmem:[%s6 + $0x170] sm:$0xff] %v5580
  %5761 = vst.msk [vmem:[%s6 + $0x178] sm:$0xff] %vm53, %v5581
  %5762 = vst [vmem:[%s6 + $0x180] sm:$0xff] %v5582
  %5763 = vst.msk [vmem:[%s6 + $0x188] sm:$0xff] %vm53, %v5583
  %5764 = vst [vmem:[%s6 + $0x190] sm:$0xff] %v5584
  %5765 = vst.msk [vmem:[%s6 + $0x198] sm:$0xff] %vm53, %v5585
  %5766 = vst [vmem:[%s6 + $0x1a0] sm:$0xff] %v5586
  %5767 = vst.msk [vmem:[%s6 + $0x1a8] sm:$0xff] %vm53, %v5587
  %5768 = vst [vmem:[%s6 + $0x1b0] sm:$0xff] %v5588
  %5769 = vst.msk [vmem:[%s6 + $0x1b8] sm:$0xff] %vm53, %v5589
  %5770 = vst [vmem:[%s6 + $0x1c0] sm:$0xff] %v5590
  %5771 = vst.msk [vmem:[%s6 + $0x1c8] sm:$0xff] %vm53, %v5591
  %5772 = vst [vmem:[%s6 + $0x1d0] sm:$0xff] %v5592
  %5773 = vst.msk [vmem:[%s6 + $0x1d8] sm:$0xff] %vm53, %v5593
  %5774 = vst [vmem:[%s6 + $0x1e0] sm:$0xff] %v5594
  %5775 = vst.msk [vmem:[%s6 + $0x1e8] sm:$0xff] %vm53, %v5595
  %5776 = vst [vmem:[%s6 + $0x1f0] sm:$0xff] %v5596
  %5777 = vst.msk [vmem:[%s6 + $0x1f8] sm:$0xff] %vm53, %v5597
  %5778 = vst [vmem:[%s6 + $0x200] sm:$0xff] %v5598
  %5779 = vst.msk [vmem:[%s6 + $0x208] sm:$0xff] %vm53, %v5599
  %5780 = vst [vmem:[%s6 + $0x210] sm:$0xff] %v5600
  %5781 = vst.msk [vmem:[%s6 + $0x218] sm:$0xff] %vm53, %v5601
  %5782 = vst [vmem:[%s6 + $0x220] sm:$0xff] %v5602
  %5783 = vst.msk [vmem:[%s6 + $0x228] sm:$0xff] %vm53, %v5603
  %5784 = vst [vmem:[%s6 + $0x230] sm:$0xff] %v5604
  %5785 = vst.msk [vmem:[%s6 + $0x238] sm:$0xff] %vm53, %v5605
  %5786 = vst [vmem:[%s6 + $0x240] sm:$0xff] %v5606
  %5787 = vst.msk [vmem:[%s6 + $0x248] sm:$0xff] %vm53, %v5607
  %5788 = vst [vmem:[%s6 + $0x250] sm:$0xff] %v5608
  %5789 = vst.msk [vmem:[%s6 + $0x258] sm:$0xff] %vm53, %v5609
  %5790 = vst [vmem:[%s6 + $0x260] sm:$0xff] %v5610
  %5791 = vst.msk [vmem:[%s6 + $0x268] sm:$0xff] %vm53, %v5611
  %5792 = vst [vmem:[%s6 + $0x270] sm:$0xff] %v5612
  %5793 = vst.msk [vmem:[%s6 + $0x278] sm:$0xff] %vm53, %v5613
  %5794 = vst [vmem:[%s6 + $0x280] sm:$0xff] %v5614
  %5795 = vst.msk [vmem:[%s6 + $0x288] sm:$0xff] %vm53, %v5615
  %5796 = vst [vmem:[%s6 + $0x290] sm:$0xff] %v5616
  %5797 = vst.msk [vmem:[%s6 + $0x298] sm:$0xff] %vm53, %v5617
  %5798 = vst [vmem:[%s6 + $0x2a0] sm:$0xff] %v5618
  %5799 = vst.msk [vmem:[%s6 + $0x2a8] sm:$0xff] %vm53, %v5619
  %5800 = vst [vmem:[%s6 + $0x2b0] sm:$0xff] %v5620
  %5801 = vst.msk [vmem:[%s6 + $0x2b8] sm:$0xff] %vm53, %v5621
  %5802 = vst [vmem:[%s6 + $0x2c0] sm:$0xff] %v5622
  %5803 = vst.msk [vmem:[%s6 + $0x2c8] sm:$0xff] %vm53, %v5623
  %5804 = vst [vmem:[%s6 + $0x2d0] sm:$0xff] %v5624
  %5805 = vst.msk [vmem:[%s6 + $0x2d8] sm:$0xff] %vm53, %v5625
  %5806 = vst [vmem:[%s6 + $0x2e0] sm:$0xff] %v5626
  %5807 = vst.msk [vmem:[%s6 + $0x2e8] sm:$0xff] %vm53, %v5627
  %5808 = vst [vmem:[%s6 + $0x2f0] sm:$0xff] %v5628
  %5809 = vst.msk [vmem:[%s6 + $0x2f8] sm:$0xff] %vm53, %v5629
  %5810 = vst [vmem:[%s6 + $0x300] sm:$0xff] %v5630
  %5811 = vst.msk [vmem:[%s6 + $0x308] sm:$0xff] %vm53, %v5631
  %5812 = vst [vmem:[%s6 + $0x310] sm:$0xff] %v5632
  %5813 = vst.msk [vmem:[%s6 + $0x318] sm:$0xff] %vm53, %v5633
  %5814 = vst [vmem:[%s6 + $0x320] sm:$0xff] %v5634
  %5815 = vst.msk [vmem:[%s6 + $0x328] sm:$0xff] %vm53, %v5635
  %5816 = vst [vmem:[%s6 + $0x330] sm:$0xff] %v5636
  %5817 = vst.msk [vmem:[%s6 + $0x338] sm:$0xff] %vm53, %v5637
  %5818 = vst [vmem:[%s6 + $0x340] sm:$0xff] %v5638
  %5819 = vst.msk [vmem:[%s6 + $0x348] sm:$0xff] %vm53, %v5639
  %5820 = vst [vmem:[%s6 + $0x350] sm:$0xff] %v5640
  %5821 = vst.msk [vmem:[%s6 + $0x358] sm:$0xff] %vm53, %v5641
  %5822 = vst [vmem:[%s6 + $0x360] sm:$0xff] %v5642
  %5823 = vst.msk [vmem:[%s6 + $0x368] sm:$0xff] %vm53, %v5643
  %5824 = vst [vmem:[%s6 + $0x370] sm:$0xff] %v5644
  %5825 = vst.msk [vmem:[%s6 + $0x378] sm:$0xff] %vm53, %v5645
  %5826 = vst [vmem:[%s6 + $0x380] sm:$0xff] %v5646
  %5827 = vst.msk [vmem:[%s6 + $0x388] sm:$0xff] %vm53, %v5647
  %5828 = vst [vmem:[%s6 + $0x390] sm:$0xff] %v5648
  %5829 = vst.msk [vmem:[%s6 + $0x398] sm:$0xff] %vm53, %v5649
  %5830 = vst [vmem:[%s6 + $0x3a0] sm:$0xff] %v5650
  %5831 = vst.msk [vmem:[%s6 + $0x3a8] sm:$0xff] %vm53, %v5651
  %5832 = vst [vmem:[%s6 + $0x3b0] sm:$0xff] %v5652
  %5833 = vst.msk [vmem:[%s6 + $0x3b8] sm:$0xff] %vm53, %v5653
  %5834 = vst [vmem:[%s6 + $0x3c0] sm:$0xff] %v5654
  %5835 = vst.msk [vmem:[%s6 + $0x3c8] sm:$0xff] %vm53, %v5655
  %5836 = vst [vmem:[%s6 + $0x3d0] sm:$0xff] %v5656
  %5837 = vst.msk [vmem:[%s6 + $0x3d8] sm:$0xff] %vm53, %v5657
  %5838 = vst [vmem:[%s6 + $0x3e0] sm:$0xff] %v5658
  %5839 = vst.msk [vmem:[%s6 + $0x3e8] sm:$0xff] %vm53, %v5659
  %5840 = vst [vmem:[%s6 + $0x3f0] sm:$0xff] %v5660
  %5841 = vst.msk [vmem:[%s6 + $0x3f8] sm:$0xff] %vm53, %v5661
  %5842 = vst [vmem:[%s6 + $0x400] sm:$0xff] %v5662
  %5843 = vst.msk [vmem:[%s6 + $0x408] sm:$0xff] %vm53, %v5663
  %5844 = vst [vmem:[%s6 + $0x410] sm:$0xff] %v5664
  %5845 = vst.msk [vmem:[%s6 + $0x418] sm:$0xff] %vm53, %v5665
  %5846 = vst [vmem:[%s6 + $0x420] sm:$0xff] %v5666
  %5847 = vst.msk [vmem:[%s6 + $0x428] sm:$0xff] %vm53, %v5667
  %5848 = vst [vmem:[%s6 + $0x430] sm:$0xff] %v5668
  %5849 = vst.msk [vmem:[%s6 + $0x438] sm:$0xff] %vm53, %v5669
  %5850 = vst [vmem:[%s6 + $0x440] sm:$0xff] %v5670
  %5851 = vst.msk [vmem:[%s6 + $0x448] sm:$0xff] %vm53, %v5671
  %5852 = vst [vmem:[%s6 + $0x450] sm:$0xff] %v5672
  %5853 = vst.msk [vmem:[%s6 + $0x458] sm:$0xff] %vm53, %v5673
  %5854 = vst [vmem:[%s6 + $0x460] sm:$0xff] %v5674
  %5855 = vst.msk [vmem:[%s6 + $0x468] sm:$0xff] %vm53, %v5675
  %5856 = vst [vmem:[%s6 + $0x470] sm:$0xff] %v5676
  %5857 = vst.msk [vmem:[%s6 + $0x478] sm:$0xff] %vm53, %v5677
  %5858 = vst [vmem:[%s6 + $0x480] sm:$0xff] %v5678
  %5859 = vst.msk [vmem:[%s6 + $0x488] sm:$0xff] %vm53, %v5679
  %5860 = vst [vmem:[%s6 + $0x490] sm:$0xff] %v5680
  %5861 = vst.msk [vmem:[%s6 + $0x498] sm:$0xff] %vm53, %v5681
  %5862 = vst [vmem:[%s6 + $0x4a0] sm:$0xff] %v5682
  %5863 = vst.msk [vmem:[%s6 + $0x4a8] sm:$0xff] %vm53, %v5683
  %5864 = vst [vmem:[%s6 + $0x4b0] sm:$0xff] %v5684
  %5865 = vst.msk [vmem:[%s6 + $0x4b8] sm:$0xff] %vm53, %v5685
  %5866 = vst [vmem:[%s6 + $0x4c0] sm:$0xff] %v5686
  %5867 = vst.msk [vmem:[%s6 + $0x4c8] sm:$0xff] %vm53, %v5687
  %5868 = vst [vmem:[%s6 + $0x4d0] sm:$0xff] %v5688
  %5869 = vst.msk [vmem:[%s6 + $0x4d8] sm:$0xff] %vm53, %v5689
  %5870 = vst [vmem:[%s6 + $0x4e0] sm:$0xff] %v5690
  %5871 = vst.msk [vmem:[%s6 + $0x4e8] sm:$0xff] %vm53, %v5691
  %5872 = vst [vmem:[%s6 + $0x4f0] sm:$0xff] %v5692
  %5873 = vst.msk [vmem:[%s6 + $0x4f8] sm:$0xff] %vm53, %v5693
  %5874 = vst [vmem:[%s6 + $0x500] sm:$0xff] %v5694
  %5875 = vst.msk [vmem:[%s6 + $0x508] sm:$0xff] %vm53, %v5695
  %5876 = vst [vmem:[%s6 + $0x510] sm:$0xff] %v5696
  %5877 = vst.msk [vmem:[%s6 + $0x518] sm:$0xff] %vm53, %v5697
  %5878 = vst [vmem:[%s6 + $0x520] sm:$0xff] %v5698
  %5879 = vst.msk [vmem:[%s6 + $0x528] sm:$0xff] %vm53, %v5699
  %5880 = vst [vmem:[%s6 + $0x530] sm:$0xff] %v5700
  %5881 = vst.msk [vmem:[%s6 + $0x538] sm:$0xff] %vm53, %v5701
  %5882 = vst [vmem:[%s6 + $0x540] sm:$0xff] %v5702
  %5883 = vst.msk [vmem:[%s6 + $0x548] sm:$0xff] %vm53, %v5703
  %5884 = vst [vmem:[%s6 + $0x550] sm:$0xff] %v5704
  %5885 = vst.msk [vmem:[%s6 + $0x558] sm:$0xff] %vm53, %v5705
  %5886 = vst [vmem:[%s6 + $0x560] sm:$0xff] %v5706
  %5887 = vst.msk [vmem:[%s6 + $0x568] sm:$0xff] %vm53, %v5707
  %5888 = vst [vmem:[%s6 + $0x570] sm:$0xff] %v5708
  %5889 = vst.msk [vmem:[%s6 + $0x578] sm:$0xff] %vm53, %v5709
  %5890 = vst [vmem:[%s6 + $0x580] sm:$0xff] %v5710
  %5891 = vst.msk [vmem:[%s6 + $0x588] sm:$0xff] %vm53, %v5711
  %5892 = vst [vmem:[%s6 + $0x590] sm:$0xff] %v5712
  %5893 = vst.msk [vmem:[%s6 + $0x598] sm:$0xff] %vm53, %v5713
  // Predicated region
  $region26: #{fused_bn_conv_bn.1} parent=0 // pred_check
    _
  $region27: #{fused_bn_conv_bn.1} parent=0 // pred_check_branch
    %5895 = sbr.rel (0) target = $region29
  $region28: #{fused_bn_conv_bn.1} parent=0 // pred_region
    _
  $region29: #{fused_bn_conv_bn.1} parent=0 // pred_fallthru
    _
  // Predicated region
  $region30: #{fused_bn_conv_bn.1} parent=0 // pred_check
    _
  $region31: #{fused_bn_conv_bn.1} parent=0 // pred_check_branch
    %5897 = sbr.rel (0) target = $region33
  $region32: #{fused_bn_conv_bn.1} parent=0 // pred_region
    _
  $region33: #{fused_bn_conv_bn.1} parent=0 // pred_fallthru
    _

</llo_original>
